<compile_context>
chip_gen: v7x
topology: tpu7x:2x2x1
jax: 0.10.0
libtpu: 0.0.40
codegen_flags: <defaults>
</compile_context>

<pallas_src>
import numpy as np
import jax
import jax.numpy as jnp
from jax.experimental import pallas as pl
from jax.experimental.pallas import tpu as pltpu

VMEM_LIMIT = 32 * 1024 * 1024


# ----------------------------- Pallas kernel --------------------------------

def _make_convblock_kernel(H, W):
    HW = H * W

    def conv3x3(inp, w_ref, s_ref, b_ref):
        """3x3 conv (pad=1) + folded BN scale/bias. inp: (H, W, c) f32."""
        c = inp.shape[-1]
        cout = w_ref.shape[-1]
        # In-VMEM zero halo (no wrapper-side pad, no HBM traffic).
        zrow = jnp.zeros((1, W, c), jnp.float32)
        xp = jnp.concatenate([zrow, inp, zrow], axis=0)          # (H+2, W,   c)
        zcol = jnp.zeros((H + 2, 1, c), jnp.float32)
        xp = jnp.concatenate([zcol, xp, zcol], axis=1)           # (H+2, W+2, c)
        # im2col: 9 shifted views stacked on the channel (lane) axis.
        patches = jnp.concatenate(
            [xp[dy:dy + H, dx:dx + W, :] for dy in range(3) for dx in range(3)],
            axis=-1).reshape(HW, 9 * c)                          # (HW, 9c) f32
        # Single MXU matmul: bf16 operands, f32 accumulation.
        y = jnp.dot(patches.astype(jnp.bfloat16), w_ref[...],
                    preferred_element_type=jnp.float32)          # (HW, cout) f32
        # f32 epilogue: conv bias + BatchNorm (eval) folded into scale/bias.
        return (y * s_ref[0] + b_ref[0]).reshape(H, W, cout)

    def kernel(x_ref,
               w1, s1, b1, w2, s2, b2, w3, s3, b3,      # main path convs
               ws, ss, bs,                              # shortcut conv
               o_ref):
        x = x_ref[0]                                    # (H, W, cin) f32

        # main path: 3x (conv + BN + LeakyReLU(0.2))
        h = conv3x3(x, w1, s1, b1)
        h = jnp.where(h >= 0, h, 0.2 * h)
        h = conv3x3(h, w2, s2, b2)
        h = jnp.where(h >= 0, h, 0.2 * h)
        h = conv3x3(h, w3, s3, b3)
        h = jnp.where(h >= 0, h, 0.2 * h)

        # shortcut: conv + BN (no activation), residual add, final ReLU
        sc = conv3x3(x, ws, ss, bs)
        o_ref[0] = jnp.maximum(h + sc, 0.0)

    return kernel


def convblock_forward(x_nchw, params):
    """convBlock forward. Input/output are NCHW (PyTorch convention)."""
    B, C, H, W = x_nchw.shape
    x = jnp.transpose(x_nchw, (0, 2, 3, 1))             # -> NHWC
    convs = params['main'] + [params['short']]
    f3 = params['short']['w'].shape[-1]

    args = [x]
    in_specs = [pl.BlockSpec((1, H, W, C), lambda b: (b, 0, 0, 0))]
    for p in convs:
        cout = p['w'].shape[-1]
        args += [p['w'], p['scale'].reshape(1, cout), p['bias'].reshape(1, cout)]
        in_specs += [pl.BlockSpec(p['w'].shape, lambda b: (0, 0)),
                     pl.BlockSpec((1, cout), lambda b: (0, 0)),
                     pl.BlockSpec((1, cout), lambda b: (0, 0))]

    out = pl.pallas_call(
        _make_convblock_kernel(H, W),
        out_shape=jax.ShapeDtypeStruct((B, H, W, f3), jnp.float32),
        grid=(B,),
        in_specs=in_specs,
        out_specs=pl.BlockSpec((1, H, W, f3), lambda b: (b, 0, 0, 0)),
        compiler_params=pltpu.CompilerParams(
            dimension_semantics=("parallel",), vmem_limit_bytes=VMEM_LIMIT),
    )(*args)
    return jnp.transpose(out, (0, 3, 1, 2))              # -> NCHW


# ----------------------------- parameters -----------------------------------

def _conv_bn_params(key, cin, cout, eps=1e-5):
    ks = jax.random.split(key, 6)
    w = jax.random.normal(ks[0], (3, 3, cin, cout), jnp.float32) * (0.3 / np.sqrt(9 * cin))
    cb = 0.05 * jax.random.normal(ks[1], (cout,), jnp.float32)
    gamma = 1.0 + 0.1 * jax.random.normal(ks[2], (cout,), jnp.float32)
    beta = 0.05 * jax.random.normal(ks[3], (cout,), jnp.float32)
    rmean = 0.05 * jax.random.normal(ks[4], (cout,), jnp.float32)
    rvar = 1.0 + 0.1 * jnp.abs(jax.random.normal(ks[5], (cout,), jnp.float32))
    scale = gamma / jnp.sqrt(rvar + eps)
    bias = beta - rmean * scale + cb * scale              # conv bias + BN folded
    return {
        'w_hwio': w,                                       # f32, for the reference
        'w': w.reshape(9 * cin, cout).astype(jnp.bfloat16),  # im2col layout, bf16
        'scale': scale,
        'bias': bias,
    }


def init_convblock_params(key, in_filter, filters):
    f1, f2, f3 = filters
    k1, k2, k3, k4 = jax.random.split(key, 4)
    return {
        'main': [_conv_bn_params(k1, in_filter, f1),
                 _conv_bn_params(k2, f1, f2),
                 _conv_bn_params(k3, f2, f3)],
        'short': _conv_bn_params(k4, in_filter, f3),
    }


# ----------------------------- pure-JAX reference ----------------------------

def _conv_bn_ref(x, p):
    y = jax.lax.conv_general_dilated(x, p['w_hwio'], (1, 1), 'SAME',
                                     dimension_numbers=('NHWC', 'HWIO', 'NHWC'))
    return y * p['scale'] + p['bias']


def convblock_ref(x_nchw, params):
    x = jnp.transpose(x_nchw, (0, 2, 3, 1))
    h = x
    for p in params['main']:
        h = _conv_bn_ref(h, p)
        h = jnp.where(h >= 0, h, 0.2 * h)                 # LeakyReLU(0.2)
    sc = _conv_bn_ref(x, params['short'])
    out = jnp.maximum(h + sc, 0.0)                        # residual + ReLU
    return jnp.transpose(out, (0, 3, 1, 2))


# ----------------------------------- main ------------------------------------

if __name__ == "__main__":
    key = jax.random.PRNGKey(0)
    kx, kp = jax.random.split(key)

    B, C, H, W = 2, 4, 16, 16
    filters = (32, 32, 64)

    x = jax.random.normal(kx, (B, C, H, W), jnp.float32)
    params = init_convblock_params(kp, C, filters)

    out = jax.block_until_ready(convblock_forward(x, params))
    assert out.shape == (B, filters[2], H, W), out.shape

    ref = jax.block_until_ready(convblock_ref(x, params))
    # bf16 MXU operands with f32 accumulation -> compare at 2e-2.
    np.testing.assert_allclose(np.asarray(out), np.asarray(ref), rtol=2e-2, atol=2e-2)
    print("KERNEL_OK")
</pallas_src>

<mosaic_0001>
module attributes {stable_mosaic.version = 11 : i64} {
  func.func @kernel(%arg0: i32, %arg1: memref<1x16x16x4xf32, #tpu.memory_space<vmem>>, %arg2: memref<36x32xbf16, #tpu.memory_space<vmem>>, %arg3: memref<1x32xf32, #tpu.memory_space<vmem>>, %arg4: memref<1x32xf32, #tpu.memory_space<vmem>>, %arg5: memref<288x32xbf16, #tpu.memory_space<vmem>>, %arg6: memref<1x32xf32, #tpu.memory_space<vmem>>, %arg7: memref<1x32xf32, #tpu.memory_space<vmem>>, %arg8: memref<288x64xbf16, #tpu.memory_space<vmem>>, %arg9: memref<1x64xf32, #tpu.memory_space<vmem>>, %arg10: memref<1x64xf32, #tpu.memory_space<vmem>>, %arg11: memref<36x64xbf16, #tpu.memory_space<vmem>>, %arg12: memref<1x64xf32, #tpu.memory_space<vmem>>, %arg13: memref<1x64xf32, #tpu.memory_space<vmem>>, %arg14: memref<1x16x16x64xf32, #tpu.memory_space<vmem>>) attributes {dimension_semantics = [#tpu.dimension_semantics<parallel>], iteration_bounds = array<i64: 2>, scalar_prefetch = 0 : i64, scratch_operands = 0 : i64, tpu.core_type = #tpu.core_type<tc>, window_params = [{transform_indices = @transform_0, window_bounds = array<i64: 1, 16, 16, 4>}, {pipeline_mode = #tpu.pipeline_mode<synchronous>, transform_indices = @transform_1, window_bounds = array<i64: 36, 32>}, {pipeline_mode = #tpu.pipeline_mode<synchronous>, transform_indices = @transform_2, window_bounds = array<i64: 1, 32>}, {pipeline_mode = #tpu.pipeline_mode<synchronous>, transform_indices = @transform_3, window_bounds = array<i64: 1, 32>}, {pipeline_mode = #tpu.pipeline_mode<synchronous>, transform_indices = @transform_4, window_bounds = array<i64: 288, 32>}, {pipeline_mode = #tpu.pipeline_mode<synchronous>, transform_indices = @transform_5, window_bounds = array<i64: 1, 32>}, {pipeline_mode = #tpu.pipeline_mode<synchronous>, transform_indices = @transform_6, window_bounds = array<i64: 1, 32>}, {pipeline_mode = #tpu.pipeline_mode<synchronous>, transform_indices = @transform_7, window_bounds = array<i64: 288, 64>}, {pipeline_mode = #tpu.pipeline_mode<synchronous>, transform_indices = @transform_8, window_bounds = array<i64: 1, 64>}, {pipeline_mode = #tpu.pipeline_mode<synchronous>, transform_indices = @transform_9, window_bounds = array<i64: 1, 64>}, {pipeline_mode = #tpu.pipeline_mode<synchronous>, transform_indices = @transform_10, window_bounds = array<i64: 36, 64>}, {pipeline_mode = #tpu.pipeline_mode<synchronous>, transform_indices = @transform_11, window_bounds = array<i64: 1, 64>}, {pipeline_mode = #tpu.pipeline_mode<synchronous>, transform_indices = @transform_12, window_bounds = array<i64: 1, 64>}, {transform_indices = @transform_13, window_bounds = array<i64: 1, 16, 16, 64>}]} {
    %c0 = arith.constant 0 : index
    %c0_0 = arith.constant 0 : index
    %c0_1 = arith.constant 0 : index
    %c0_2 = arith.constant 0 : index
    %0 = vector.load %arg1[%c0, %c0_0, %c0_1, %c0_2] : memref<1x16x16x4xf32, #tpu.memory_space<vmem>>, vector<1x16x16x4xf32>
    %1 = vector.shape_cast %0 : vector<1x16x16x4xf32> to vector<16x16x4xf32>
    %cst = arith.constant 0.000000e+00 : f32
    %2 = vector.broadcast %cst : f32 to vector<1x16x4xf32>
    %3 = tpu.concatenate %2, %1, %2 in 0 : vector<1x16x4xf32>, vector<16x16x4xf32>, vector<1x16x4xf32> -> vector<18x16x4xf32>
    %cst_3 = arith.constant 0.000000e+00 : f32
    %4 = vector.broadcast %cst_3 : f32 to vector<18x1x4xf32>
    %5 = tpu.concatenate %4, %3, %4 in 1 : vector<18x1x4xf32>, vector<18x16x4xf32>, vector<18x1x4xf32> -> vector<18x18x4xf32>
    %6 = vector.extract_strided_slice %5 {offsets = [0, 0, 0], sizes = [16, 16, 4], strides = [1, 1, 1]} : vector<18x18x4xf32> to vector<16x16x4xf32>
    %7 = vector.extract_strided_slice %5 {offsets = [0, 1, 0], sizes = [16, 16, 4], strides = [1, 1, 1]} : vector<18x18x4xf32> to vector<16x16x4xf32>
    %8 = vector.extract_strided_slice %5 {offsets = [0, 2, 0], sizes = [16, 16, 4], strides = [1, 1, 1]} : vector<18x18x4xf32> to vector<16x16x4xf32>
    %9 = vector.extract_strided_slice %5 {offsets = [1, 0, 0], sizes = [16, 16, 4], strides = [1, 1, 1]} : vector<18x18x4xf32> to vector<16x16x4xf32>
    %10 = vector.extract_strided_slice %5 {offsets = [1, 1, 0], sizes = [16, 16, 4], strides = [1, 1, 1]} : vector<18x18x4xf32> to vector<16x16x4xf32>
    %11 = vector.extract_strided_slice %5 {offsets = [1, 2, 0], sizes = [16, 16, 4], strides = [1, 1, 1]} : vector<18x18x4xf32> to vector<16x16x4xf32>
    %12 = vector.extract_strided_slice %5 {offsets = [2, 0, 0], sizes = [16, 16, 4], strides = [1, 1, 1]} : vector<18x18x4xf32> to vector<16x16x4xf32>
    %13 = vector.extract_strided_slice %5 {offsets = [2, 1, 0], sizes = [16, 16, 4], strides = [1, 1, 1]} : vector<18x18x4xf32> to vector<16x16x4xf32>
    %14 = vector.extract_strided_slice %5 {offsets = [2, 2, 0], sizes = [16, 16, 4], strides = [1, 1, 1]} : vector<18x18x4xf32> to vector<16x16x4xf32>
    %15 = tpu.concatenate %6, %7, %8, %9, %10, %11, %12, %13, %14 in 2 : vector<16x16x4xf32>, vector<16x16x4xf32>, vector<16x16x4xf32>, vector<16x16x4xf32>, vector<16x16x4xf32>, vector<16x16x4xf32>, vector<16x16x4xf32>, vector<16x16x4xf32>, vector<16x16x4xf32> -> vector<16x16x36xf32>
    %16 = vector.shape_cast %15 : vector<16x16x36xf32> to vector<256x36xf32>
    %17 = arith.truncf %16 : vector<256x36xf32> to vector<256x36xbf16>
    %c0_4 = arith.constant 0 : index
    %c0_5 = arith.constant 0 : index
    %18 = vector.load %arg2[%c0_4, %c0_5] : memref<36x32xbf16, #tpu.memory_space<vmem>>, vector<36x32xbf16>
    %cst_6 = arith.constant dense<0.000000e+00> : vector<256x32xf32>
    %19 = tpu.matmul %17, %18, %cst_6 {dimension_numbers = #tpu.dot_dimension_numbers<[1], [0], [0], [1], [0, 0, 1, 1], [], []>} : vector<256x36xbf16>, vector<36x32xbf16>, vector<256x32xf32> -> vector<256x32xf32>
    %c0_7 = arith.constant 0 : index
    %c0_8 = arith.constant 0 : index
    %20 = vector.load %arg3[%c0_7, %c0_8] : memref<1x32xf32, #tpu.memory_space<vmem>>, vector<1x32xf32>
    %21 = vector.shape_cast %20 : vector<1x32xf32> to vector<32xf32>
    %22 = vector.shape_cast %21 : vector<32xf32> to vector<1x32xf32>
    %23 = vector.broadcast %22 : vector<1x32xf32> to vector<256x32xf32>
    %24 = arith.mulf %19, %23 : vector<256x32xf32>
    %c0_9 = arith.constant 0 : index
    %c0_10 = arith.constant 0 : index
    %25 = vector.load %arg4[%c0_9, %c0_10] : memref<1x32xf32, #tpu.memory_space<vmem>>, vector<1x32xf32>
    %26 = vector.shape_cast %25 : vector<1x32xf32> to vector<32xf32>
    %27 = vector.shape_cast %26 : vector<32xf32> to vector<1x32xf32>
    %28 = vector.broadcast %27 : vector<1x32xf32> to vector<256x32xf32>
    %29 = arith.addf %24, %28 : vector<256x32xf32>
    %30 = vector.shape_cast %29 : vector<256x32xf32> to vector<16x16x32xf32>
    %cst_11 = arith.constant 0.000000e+00 : f32
    %31 = vector.broadcast %cst_11 : f32 to vector<16x16x32xf32>
    %32 = arith.cmpf oge, %30, %31 : vector<16x16x32xf32>
    %cst_12 = arith.constant 2.000000e-01 : f32
    %33 = vector.broadcast %cst_12 : f32 to vector<16x16x32xf32>
    %34 = arith.mulf %33, %30 : vector<16x16x32xf32>
    %35 = arith.select %32, %30, %34 : vector<16x16x32xi1>, vector<16x16x32xf32>
    %cst_13 = arith.constant 0.000000e+00 : f32
    %36 = vector.broadcast %cst_13 : f32 to vector<1x16x32xf32>
    %37 = tpu.concatenate %36, %35, %36 in 0 : vector<1x16x32xf32>, vector<16x16x32xf32>, vector<1x16x32xf32> -> vector<18x16x32xf32>
    %cst_14 = arith.constant 0.000000e+00 : f32
    %38 = vector.broadcast %cst_14 : f32 to vector<18x1x32xf32>
    %39 = tpu.concatenate %38, %37, %38 in 1 : vector<18x1x32xf32>, vector<18x16x32xf32>, vector<18x1x32xf32> -> vector<18x18x32xf32>
    %40 = vector.extract_strided_slice %39 {offsets = [0, 0, 0], sizes = [16, 16, 32], strides = [1, 1, 1]} : vector<18x18x32xf32> to vector<16x16x32xf32>
    %41 = vector.extract_strided_slice %39 {offsets = [0, 1, 0], sizes = [16, 16, 32], strides = [1, 1, 1]} : vector<18x18x32xf32> to vector<16x16x32xf32>
    %42 = vector.extract_strided_slice %39 {offsets = [0, 2, 0], sizes = [16, 16, 32], strides = [1, 1, 1]} : vector<18x18x32xf32> to vector<16x16x32xf32>
    %43 = vector.extract_strided_slice %39 {offsets = [1, 0, 0], sizes = [16, 16, 32], strides = [1, 1, 1]} : vector<18x18x32xf32> to vector<16x16x32xf32>
    %44 = vector.extract_strided_slice %39 {offsets = [1, 1, 0], sizes = [16, 16, 32], strides = [1, 1, 1]} : vector<18x18x32xf32> to vector<16x16x32xf32>
    %45 = vector.extract_strided_slice %39 {offsets = [1, 2, 0], sizes = [16, 16, 32], strides = [1, 1, 1]} : vector<18x18x32xf32> to vector<16x16x32xf32>
    %46 = vector.extract_strided_slice %39 {offsets = [2, 0, 0], sizes = [16, 16, 32], strides = [1, 1, 1]} : vector<18x18x32xf32> to vector<16x16x32xf32>
    %47 = vector.extract_strided_slice %39 {offsets = [2, 1, 0], sizes = [16, 16, 32], strides = [1, 1, 1]} : vector<18x18x32xf32> to vector<16x16x32xf32>
    %48 = vector.extract_strided_slice %39 {offsets = [2, 2, 0], sizes = [16, 16, 32], strides = [1, 1, 1]} : vector<18x18x32xf32> to vector<16x16x32xf32>
    %49 = tpu.concatenate %40, %41, %42, %43, %44, %45, %46, %47, %48 in 2 : vector<16x16x32xf32>, vector<16x16x32xf32>, vector<16x16x32xf32>, vector<16x16x32xf32>, vector<16x16x32xf32>, vector<16x16x32xf32>, vector<16x16x32xf32>, vector<16x16x32xf32>, vector<16x16x32xf32> -> vector<16x16x288xf32>
    %50 = vector.shape_cast %49 : vector<16x16x288xf32> to vector<256x288xf32>
    %51 = arith.truncf %50 : vector<256x288xf32> to vector<256x288xbf16>
    %c0_15 = arith.constant 0 : index
    %c0_16 = arith.constant 0 : index
    %52 = vector.load %arg5[%c0_15, %c0_16] : memref<288x32xbf16, #tpu.memory_space<vmem>>, vector<288x32xbf16>
    %cst_17 = arith.constant dense<0.000000e+00> : vector<256x32xf32>
    %53 = tpu.matmul %51, %52, %cst_17 {dimension_numbers = #tpu.dot_dimension_numbers<[1], [0], [0], [1], [0, 0, 1, 1], [], []>} : vector<256x288xbf16>, vector<288x32xbf16>, vector<256x32xf32> -> vector<256x32xf32>
    %c0_18 = arith.constant 0 : index
    %c0_19 = arith.constant 0 : index
    %54 = vector.load %arg6[%c0_18, %c0_19] : memref<1x32xf32, #tpu.memory_space<vmem>>, vector<1x32xf32>
    %55 = vector.shape_cast %54 : vector<1x32xf32> to vector<32xf32>
    %56 = vector.shape_cast %55 : vector<32xf32> to vector<1x32xf32>
    %57 = vector.broadcast %56 : vector<1x32xf32> to vector<256x32xf32>
    %58 = arith.mulf %53, %57 : vector<256x32xf32>
    %c0_20 = arith.constant 0 : index
    %c0_21 = arith.constant 0 : index
    %59 = vector.load %arg7[%c0_20, %c0_21] : memref<1x32xf32, #tpu.memory_space<vmem>>, vector<1x32xf32>
    %60 = vector.shape_cast %59 : vector<1x32xf32> to vector<32xf32>
    %61 = vector.shape_cast %60 : vector<32xf32> to vector<1x32xf32>
    %62 = vector.broadcast %61 : vector<1x32xf32> to vector<256x32xf32>
    %63 = arith.addf %58, %62 : vector<256x32xf32>
    %64 = vector.shape_cast %63 : vector<256x32xf32> to vector<16x16x32xf32>
    %cst_22 = arith.constant 0.000000e+00 : f32
    %65 = vector.broadcast %cst_22 : f32 to vector<16x16x32xf32>
    %66 = arith.cmpf oge, %64, %65 : vector<16x16x32xf32>
    %cst_23 = arith.constant 2.000000e-01 : f32
    %67 = vector.broadcast %cst_23 : f32 to vector<16x16x32xf32>
    %68 = arith.mulf %67, %64 : vector<16x16x32xf32>
    %69 = arith.select %66, %64, %68 : vector<16x16x32xi1>, vector<16x16x32xf32>
    %cst_24 = arith.constant 0.000000e+00 : f32
    %70 = vector.broadcast %cst_24 : f32 to vector<1x16x32xf32>
    %71 = tpu.concatenate %70, %69, %70 in 0 : vector<1x16x32xf32>, vector<16x16x32xf32>, vector<1x16x32xf32> -> vector<18x16x32xf32>
    %cst_25 = arith.constant 0.000000e+00 : f32
    %72 = vector.broadcast %cst_25 : f32 to vector<18x1x32xf32>
    %73 = tpu.concatenate %72, %71, %72 in 1 : vector<18x1x32xf32>, vector<18x16x32xf32>, vector<18x1x32xf32> -> vector<18x18x32xf32>
    %74 = vector.extract_strided_slice %73 {offsets = [0, 0, 0], sizes = [16, 16, 32], strides = [1, 1, 1]} : vector<18x18x32xf32> to vector<16x16x32xf32>
    %75 = vector.extract_strided_slice %73 {offsets = [0, 1, 0], sizes = [16, 16, 32], strides = [1, 1, 1]} : vector<18x18x32xf32> to vector<16x16x32xf32>
    %76 = vector.extract_strided_slice %73 {offsets = [0, 2, 0], sizes = [16, 16, 32], strides = [1, 1, 1]} : vector<18x18x32xf32> to vector<16x16x32xf32>
    %77 = vector.extract_strided_slice %73 {offsets = [1, 0, 0], sizes = [16, 16, 32], strides = [1, 1, 1]} : vector<18x18x32xf32> to vector<16x16x32xf32>
    %78 = vector.extract_strided_slice %73 {offsets = [1, 1, 0], sizes = [16, 16, 32], strides = [1, 1, 1]} : vector<18x18x32xf32> to vector<16x16x32xf32>
    %79 = vector.extract_strided_slice %73 {offsets = [1, 2, 0], sizes = [16, 16, 32], strides = [1, 1, 1]} : vector<18x18x32xf32> to vector<16x16x32xf32>
    %80 = vector.extract_strided_slice %73 {offsets = [2, 0, 0], sizes = [16, 16, 32], strides = [1, 1, 1]} : vector<18x18x32xf32> to vector<16x16x32xf32>
    %81 = vector.extract_strided_slice %73 {offsets = [2, 1, 0], sizes = [16, 16, 32], strides = [1, 1, 1]} : vector<18x18x32xf32> to vector<16x16x32xf32>
    %82 = vector.extract_strided_slice %73 {offsets = [2, 2, 0], sizes = [16, 16, 32], strides = [1, 1, 1]} : vector<18x18x32xf32> to vector<16x16x32xf32>
    %83 = tpu.concatenate %74, %75, %76, %77, %78, %79, %80, %81, %82 in 2 : vector<16x16x32xf32>, vector<16x16x32xf32>, vector<16x16x32xf32>, vector<16x16x32xf32>, vector<16x16x32xf32>, vector<16x16x32xf32>, vector<16x16x32xf32>, vector<16x16x32xf32>, vector<16x16x32xf32> -> vector<16x16x288xf32>
    %84 = vector.shape_cast %83 : vector<16x16x288xf32> to vector<256x288xf32>
    %85 = arith.truncf %84 : vector<256x288xf32> to vector<256x288xbf16>
    %c0_26 = arith.constant 0 : index
    %c0_27 = arith.constant 0 : index
    %86 = vector.load %arg8[%c0_26, %c0_27] : memref<288x64xbf16, #tpu.memory_space<vmem>>, vector<288x64xbf16>
    %cst_28 = arith.constant dense<0.000000e+00> : vector<256x64xf32>
    %87 = tpu.matmul %85, %86, %cst_28 {dimension_numbers = #tpu.dot_dimension_numbers<[1], [0], [0], [1], [0, 0, 1, 1], [], []>} : vector<256x288xbf16>, vector<288x64xbf16>, vector<256x64xf32> -> vector<256x64xf32>
    %c0_29 = arith.constant 0 : index
    %c0_30 = arith.constant 0 : index
    %88 = vector.load %arg9[%c0_29, %c0_30] : memref<1x64xf32, #tpu.memory_space<vmem>>, vector<1x64xf32>
    %89 = vector.shape_cast %88 : vector<1x64xf32> to vector<64xf32>
    %90 = vector.shape_cast %89 : vector<64xf32> to vector<1x64xf32>
    %91 = vector.broadcast %90 : vector<1x64xf32> to vector<256x64xf32>
    %92 = arith.mulf %87, %91 : vector<256x64xf32>
    %c0_31 = arith.constant 0 : index
    %c0_32 = arith.constant 0 : index
    %93 = vector.load %arg10[%c0_31, %c0_32] : memref<1x64xf32, #tpu.memory_space<vmem>>, vector<1x64xf32>
    %94 = vector.shape_cast %93 : vector<1x64xf32> to vector<64xf32>
    %95 = vector.shape_cast %94 : vector<64xf32> to vector<1x64xf32>
    %96 = vector.broadcast %95 : vector<1x64xf32> to vector<256x64xf32>
    %97 = arith.addf %92, %96 : vector<256x64xf32>
    %98 = vector.shape_cast %97 : vector<256x64xf32> to vector<16x16x64xf32>
    %cst_33 = arith.constant 0.000000e+00 : f32
    %99 = vector.broadcast %cst_33 : f32 to vector<16x16x64xf32>
    %100 = arith.cmpf oge, %98, %99 : vector<16x16x64xf32>
    %cst_34 = arith.constant 2.000000e-01 : f32
    %101 = vector.broadcast %cst_34 : f32 to vector<16x16x64xf32>
    %102 = arith.mulf %101, %98 : vector<16x16x64xf32>
    %103 = arith.select %100, %98, %102 : vector<16x16x64xi1>, vector<16x16x64xf32>
    %cst_35 = arith.constant 0.000000e+00 : f32
    %104 = vector.broadcast %cst_35 : f32 to vector<1x16x4xf32>
    %105 = tpu.concatenate %104, %1, %104 in 0 : vector<1x16x4xf32>, vector<16x16x4xf32>, vector<1x16x4xf32> -> vector<18x16x4xf32>
    %cst_36 = arith.constant 0.000000e+00 : f32
    %106 = vector.broadcast %cst_36 : f32 to vector<18x1x4xf32>
    %107 = tpu.concatenate %106, %105, %106 in 1 : vector<18x1x4xf32>, vector<18x16x4xf32>, vector<18x1x4xf32> -> vector<18x18x4xf32>
    %108 = vector.extract_strided_slice %107 {offsets = [0, 0, 0], sizes = [16, 16, 4], strides = [1, 1, 1]} : vector<18x18x4xf32> to vector<16x16x4xf32>
    %109 = vector.extract_strided_slice %107 {offsets = [0, 1, 0], sizes = [16, 16, 4], strides = [1, 1, 1]} : vector<18x18x4xf32> to vector<16x16x4xf32>
    %110 = vector.extract_strided_slice %107 {offsets = [0, 2, 0], sizes = [16, 16, 4], strides = [1, 1, 1]} : vector<18x18x4xf32> to vector<16x16x4xf32>
    %111 = vector.extract_strided_slice %107 {offsets = [1, 0, 0], sizes = [16, 16, 4], strides = [1, 1, 1]} : vector<18x18x4xf32> to vector<16x16x4xf32>
    %112 = vector.extract_strided_slice %107 {offsets = [1, 1, 0], sizes = [16, 16, 4], strides = [1, 1, 1]} : vector<18x18x4xf32> to vector<16x16x4xf32>
    %113 = vector.extract_strided_slice %107 {offsets = [1, 2, 0], sizes = [16, 16, 4], strides = [1, 1, 1]} : vector<18x18x4xf32> to vector<16x16x4xf32>
    %114 = vector.extract_strided_slice %107 {offsets = [2, 0, 0], sizes = [16, 16, 4], strides = [1, 1, 1]} : vector<18x18x4xf32> to vector<16x16x4xf32>
    %115 = vector.extract_strided_slice %107 {offsets = [2, 1, 0], sizes = [16, 16, 4], strides = [1, 1, 1]} : vector<18x18x4xf32> to vector<16x16x4xf32>
    %116 = vector.extract_strided_slice %107 {offsets = [2, 2, 0], sizes = [16, 16, 4], strides = [1, 1, 1]} : vector<18x18x4xf32> to vector<16x16x4xf32>
    %117 = tpu.concatenate %108, %109, %110, %111, %112, %113, %114, %115, %116 in 2 : vector<16x16x4xf32>, vector<16x16x4xf32>, vector<16x16x4xf32>, vector<16x16x4xf32>, vector<16x16x4xf32>, vector<16x16x4xf32>, vector<16x16x4xf32>, vector<16x16x4xf32>, vector<16x16x4xf32> -> vector<16x16x36xf32>
    %118 = vector.shape_cast %117 : vector<16x16x36xf32> to vector<256x36xf32>
    %119 = arith.truncf %118 : vector<256x36xf32> to vector<256x36xbf16>
    %c0_37 = arith.constant 0 : index
    %c0_38 = arith.constant 0 : index
    %120 = vector.load %arg11[%c0_37, %c0_38] : memref<36x64xbf16, #tpu.memory_space<vmem>>, vector<36x64xbf16>
    %cst_39 = arith.constant dense<0.000000e+00> : vector<256x64xf32>
    %121 = tpu.matmul %119, %120, %cst_39 {dimension_numbers = #tpu.dot_dimension_numbers<[1], [0], [0], [1], [0, 0, 1, 1], [], []>} : vector<256x36xbf16>, vector<36x64xbf16>, vector<256x64xf32> -> vector<256x64xf32>
    %c0_40 = arith.constant 0 : index
    %c0_41 = arith.constant 0 : index
    %122 = vector.load %arg12[%c0_40, %c0_41] : memref<1x64xf32, #tpu.memory_space<vmem>>, vector<1x64xf32>
    %123 = vector.shape_cast %122 : vector<1x64xf32> to vector<64xf32>
    %124 = vector.shape_cast %123 : vector<64xf32> to vector<1x64xf32>
    %125 = vector.broadcast %124 : vector<1x64xf32> to vector<256x64xf32>
    %126 = arith.mulf %121, %125 : vector<256x64xf32>
    %c0_42 = arith.constant 0 : index
    %c0_43 = arith.constant 0 : index
    %127 = vector.load %arg13[%c0_42, %c0_43] : memref<1x64xf32, #tpu.memory_space<vmem>>, vector<1x64xf32>
    %128 = vector.shape_cast %127 : vector<1x64xf32> to vector<64xf32>
    %129 = vector.shape_cast %128 : vector<64xf32> to vector<1x64xf32>
    %130 = vector.broadcast %129 : vector<1x64xf32> to vector<256x64xf32>
    %131 = arith.addf %126, %130 : vector<256x64xf32>
    %132 = vector.shape_cast %131 : vector<256x64xf32> to vector<16x16x64xf32>
    %133 = arith.addf %103, %132 : vector<16x16x64xf32>
    %cst_44 = arith.constant 0.000000e+00 : f32
    %134 = vector.broadcast %cst_44 : f32 to vector<16x16x64xf32>
    %135 = arith.maximumf %133, %134 : vector<16x16x64xf32>
    %c0_45 = arith.constant 0 : index
    %c0_46 = arith.constant 0 : index
    %c0_47 = arith.constant 0 : index
    %c0_48 = arith.constant 0 : index
    %136 = vector.load %arg14[%c0_45, %c0_46, %c0_47, %c0_48] : memref<1x16x16x64xf32, #tpu.memory_space<vmem>>, vector<1x16x16x64xf32>
    %137 = vector.shape_cast %136 : vector<1x16x16x64xf32> to vector<16x16x64xf32>
    %138 = vector.shape_cast %135 : vector<16x16x64xf32> to vector<1x16x16x64xf32>
    tpu.vector_store %arg14[%c0_45, %c0_46, %c0_47, %c0_48], %138 {strides = array<i32>} : memref<1x16x16x64xf32, #tpu.memory_space<vmem>>, vector<1x16x16x64xf32>,
    return
  }
  func.func @transform_0(%arg0: i32) -> (i32, i32, i32, i32) {
    %c0_i32 = arith.constant 0 : i32
    %c0_i32_0 = arith.constant 0 : i32
    %c0_i32_1 = arith.constant 0 : i32
    %c0_i32_2 = arith.constant 0 : i32
    return %arg0, %c0_i32, %c0_i32_0, %c0_i32_1 : i32, i32, i32, i32
  }
  func.func @transform_1(%arg0: i32) -> (i32, i32) {
    %c0_i32 = arith.constant 0 : i32
    %c0_i32_0 = arith.constant 0 : i32
    %c0_i32_1 = arith.constant 0 : i32
    return %c0_i32, %c0_i32_0 : i32, i32
  }
  func.func @transform_2(%arg0: i32) -> (i32, i32) {
    %c0_i32 = arith.constant 0 : i32
    %c0_i32_0 = arith.constant 0 : i32
    %c0_i32_1 = arith.constant 0 : i32
    return %c0_i32, %c0_i32_0 : i32, i32
  }
  func.func @transform_3(%arg0: i32) -> (i32, i32) {
    %c0_i32 = arith.constant 0 : i32
    %c0_i32_0 = arith.constant 0 : i32
    %c0_i32_1 = arith.constant 0 : i32
    return %c0_i32, %c0_i32_0 : i32, i32
  }
  func.func @transform_4(%arg0: i32) -> (i32, i32) {
    %c0_i32 = arith.constant 0 : i32
    %c0_i32_0 = arith.constant 0 : i32
    %c0_i32_1 = arith.constant 0 : i32
    return %c0_i32, %c0_i32_0 : i32, i32
  }
  func.func @transform_5(%arg0: i32) -> (i32, i32) {
    %c0_i32 = arith.constant 0 : i32
    %c0_i32_0 = arith.constant 0 : i32
    %c0_i32_1 = arith.constant 0 : i32
    return %c0_i32, %c0_i32_0 : i32, i32
  }
  func.func @transform_6(%arg0: i32) -> (i32, i32) {
    %c0_i32 = arith.constant 0 : i32
    %c0_i32_0 = arith.constant 0 : i32
    %c0_i32_1 = arith.constant 0 : i32
    return %c0_i32, %c0_i32_0 : i32, i32
  }
  func.func @transform_7(%arg0: i32) -> (i32, i32) {
    %c0_i32 = arith.constant 0 : i32
    %c0_i32_0 = arith.constant 0 : i32
    %c0_i32_1 = arith.constant 0 : i32
    return %c0_i32, %c0_i32_0 : i32, i32
  }
  func.func @transform_8(%arg0: i32) -> (i32, i32) {
    %c0_i32 = arith.constant 0 : i32
    %c0_i32_0 = arith.constant 0 : i32
    %c0_i32_1 = arith.constant 0 : i32
    return %c0_i32, %c0_i32_0 : i32, i32
  }
  func.func @transform_9(%arg0: i32) -> (i32, i32) {
    %c0_i32 = arith.constant 0 : i32
    %c0_i32_0 = arith.constant 0 : i32
    %c0_i32_1 = arith.constant 0 : i32
    return %c0_i32, %c0_i32_0 : i32, i32
  }
  func.func @transform_10(%arg0: i32) -> (i32, i32) {
    %c0_i32 = arith.constant 0 : i32
    %c0_i32_0 = arith.constant 0 : i32
    %c0_i32_1 = arith.constant 0 : i32
    return %c0_i32, %c0_i32_0 : i32, i32
  }
  func.func @transform_11(%arg0: i32) -> (i32, i32) {
    %c0_i32 = arith.constant 0 : i32
    %c0_i32_0 = arith.constant 0 : i32
    %c0_i32_1 = arith.constant 0 : i32
    return %c0_i32, %c0_i32_0 : i32, i32
  }
  func.func @transform_12(%arg0: i32) -> (i32, i32) {
    %c0_i32 = arith.constant 0 : i32
    %c0_i32_0 = arith.constant 0 : i32
    %c0_i32_1 = arith.constant 0 : i32
    return %c0_i32, %c0_i32_0 : i32, i32
  }
  func.func @transform_13(%arg0: i32) -> (i32, i32, i32, i32) {
    %c0_i32 = arith.constant 0 : i32
    %c0_i32_0 = arith.constant 0 : i32
    %c0_i32_1 = arith.constant 0 : i32
    %c0_i32_2 = arith.constant 0 : i32
    return %arg0, %c0_i32, %c0_i32_0, %c0_i32_1 : i32, i32, i32, i32
  }
}

</mosaic_0001>

<llo_original>
// kernel: tpu_custom_call.1
$region0: #{tpu_custom_call.1}
  #allocation0 [shape = 'u32[]', space=smem, size = 0x4, offset = 0x4, fixed_abs, tag = 'smem constant byte address 0x4 - core index']
  #allocation1 [shape = 'u32[144,128]{1,0:T(1,128)}', space=vmem, size = 0x12000, scoped, tag = 'internal scratch']
  %s0 = inlined_call_operand.vmem [shape: f32[2,16,16,4], index: 0, kind: input, shape index: {}]
  %s1 = inlined_call_operand.vmem [shape: bf16[36,32], index: 1, kind: input, shape index: {}]
  %s2 = inlined_call_operand.vmem [shape: f32[1,32], index: 2, kind: input, shape index: {}]
  %s3 = inlined_call_operand.vmem [shape: f32[1,32], index: 3, kind: input, shape index: {}]
  %s4 = inlined_call_operand.vmem [shape: bf16[288,32], index: 4, kind: input, shape index: {}]
  %s5 = inlined_call_operand.vmem [shape: f32[1,32], index: 5, kind: input, shape index: {}]
  %s6 = inlined_call_operand.vmem [shape: f32[1,32], index: 6, kind: input, shape index: {}]
  %s7 = inlined_call_operand.vmem [shape: bf16[288,64], index: 7, kind: input, shape index: {}]
  %s8 = inlined_call_operand.vmem [shape: f32[1,64], index: 8, kind: input, shape index: {}]
  %s9 = inlined_call_operand.vmem [shape: f32[1,64], index: 9, kind: input, shape index: {}]
  %s10 = inlined_call_operand.vmem [shape: bf16[36,64], index: 10, kind: input, shape index: {}]
  %s11 = inlined_call_operand.vmem [shape: f32[1,64], index: 11, kind: input, shape index: {}]
  %s12 = inlined_call_operand.vmem [shape: f32[1,64], index: 12, kind: input, shape index: {}]
  %s13 = inlined_call_operand.hbm [shape: f32[2,16,16,64], index: 13, kind: output, shape index: {}]
  %s14 = sld [smem:[#allocation0]]
  $region85: #{tpu_custom_call.1} parent=0
    _
  %s16 = ssub.s32 1, %s14
  %s17 = scalar_select 0, %s16, %s14
  $region1: #{tpu_custom_call.1} parent=0
    #allocation2 [shape = 'u8[262144]{0}', space=vmem, size = 0x40000, scoped, tag = 'output window, operand 0']
    #allocation3 [shape = 's32[2]{0}', space=sflag, size = 0x8, scoped, tag = 'scoped memory for tpu_custom_call.1']
    %18 = vsyncpa [#allocation3], 0
    %s19 = scalar_lea.sflag [#allocation3], 1
    %20 = vsyncpa %s19, 0
    loop: start=0, step=1, limit=4
    $region2: #{tpu_custom_call.1} parent=1 // loop_pre_header
      _
    $region3: #{tpu_custom_call.1} parent=1 // loop_header
      %s22 = sphi 0, %s26
      %p23 = scmp.ge.s32.totalorder %s22, 4
      %s32 = sphi 0, %s34
      %s35 = sphi 0, %s32
      %s36 = sphi 0, %s35
      %s52 = sphi 0, %s36
      %s56 = sphi 0, %s56
      %s58 = sphi 0, %s56
      %s59 = sphi 0, %s58
      %s73 = sphi 0, %s59
      %s77 = sphi 0, %s77
      %s79 = sphi 0, %s77
      %s80 = sphi 0, %s79
      %s94 = sphi 0, %s80
      %s98 = sphi 0, %s98
      %s100 = sphi 0, %s98
      %s101 = sphi 0, %s100
      %s115 = sphi 0, %s101
      %s119 = sphi 0, %s119
      %s121 = sphi 0, %s119
      %s122 = sphi 0, %s121
      %s136 = sphi 0, %s122
      %s140 = sphi 0, %s140
      %s142 = sphi 0, %s140
      %s143 = sphi 0, %s142
      %s157 = sphi 0, %s143
      %s161 = sphi 0, %s161
      %s163 = sphi 0, %s161
      %s164 = sphi 0, %s163
      %s178 = sphi 0, %s164
      %s182 = sphi 0, %s182
      %s184 = sphi 0, %s182
      %s185 = sphi 0, %s184
      %s199 = sphi 0, %s185
      %s203 = sphi 0, %s203
      %s205 = sphi 0, %s203
      %s206 = sphi 0, %s205
      %s220 = sphi 0, %s206
      %s224 = sphi 0, %s224
      %s226 = sphi 0, %s224
      %s227 = sphi 0, %s226
      %s241 = sphi 0, %s227
      %s245 = sphi 0, %s245
      %s247 = sphi 0, %s245
      %s248 = sphi 0, %s247
      %s262 = sphi 0, %s248
      %s266 = sphi 0, %s266
      %s268 = sphi 0, %s266
      %s269 = sphi 0, %s268
      %s283 = sphi 0, %s269
      %s287 = sphi 0, %s287
      %s289 = sphi 0, %s287
      %s290 = sphi 0, %s289
      %s304 = sphi 0, %s290
      %s310 = sphi 0, %s312
      %s313 = sphi 0, %s310
      %s314 = sphi 0, %s313
      %s330 = sphi 0, %s314
    $region4: #{tpu_custom_call.1} parent=1 // loop_header_branch
      %25 = sbr.rel (%p23) target = $region8
    $region5: #{tpu_custom_call.1} parent=1 // loop_body
      %s27 = ssub.s32 %s22, 1
      %s28 = ssub.s32 %s22, 2
      %s29 = sadd.s32 %s22, 1
      %s30 = ssub.s32 %s22, %s29
      %p31 = scmp.eq.s32.totalorder %s30, 0
      %s33 = sadd.s32 %s32, 1
      %s34 = scalar_select %p31, %s32, %s33
      %p37 = pneg %p31
      %p38 = scmp.eq.s32.totalorder %s22, 1
      %p39 = por %p37, %p38
      %p40 = scmp.ne.s32.totalorder %s32, %s35
      %p41 = scmp.eq.s32.totalorder %s22, 0
      %p42 = por %p40, %p41
      %p43 = scmp.ne.s32.totalorder %s32, %s35
      %p44 = scmp.eq.s32.totalorder %s27, 1
      %p45 = por %p43, %p44
      %p46 = scmp.ne.s32.totalorder %s35, %s36
      %p47 = scmp.eq.s32.totalorder %s27, 0
      %p48 = por %p46, %p47
      %p49 = scmp.ne.s32.totalorder %s35, %s36
      %p50 = scmp.eq.s32.totalorder %s28, 1
      %p51 = por %p49, %p50
      %p53 = scmp.ne.s32.totalorder %s36, %s52
      %p54 = scmp.eq.s32.totalorder %s28, 0
      %p55 = por %p53, %p54
      %s57 = sadd.s32 %s56, 1
      %p60 = scmp.eq.s32.totalorder %s22, 1
      %p61 = scmp.ne.s32.totalorder %s56, %s58
      %p62 = scmp.eq.s32.totalorder %s22, 0
      %p63 = por %p61, %p62
      %p64 = scmp.ne.s32.totalorder %s56, %s58
      %p65 = scmp.eq.s32.totalorder %s27, 1
      %p66 = por %p64, %p65
      %p67 = scmp.ne.s32.totalorder %s58, %s59
      %p68 = scmp.eq.s32.totalorder %s27, 0
      %p69 = por %p67, %p68
      %p70 = scmp.ne.s32.totalorder %s58, %s59
      %p71 = scmp.eq.s32.totalorder %s28, 1
      %p72 = por %p70, %p71
      %p74 = scmp.ne.s32.totalorder %s59, %s73
      %p75 = scmp.eq.s32.totalorder %s28, 0
      %p76 = por %p74, %p75
      %s78 = sadd.s32 %s77, 1
      %p81 = scmp.eq.s32.totalorder %s22, 1
      %p82 = scmp.ne.s32.totalorder %s77, %s79
      %p83 = scmp.eq.s32.totalorder %s22, 0
      %p84 = por %p82, %p83
      %p85 = scmp.ne.s32.totalorder %s77, %s79
      %p86 = scmp.eq.s32.totalorder %s27, 1
      %p87 = por %p85, %p86
      %p88 = scmp.ne.s32.totalorder %s79, %s80
      %p89 = scmp.eq.s32.totalorder %s27, 0
      %p90 = por %p88, %p89
      %p91 = scmp.ne.s32.totalorder %s79, %s80
      %p92 = scmp.eq.s32.totalorder %s28, 1
      %p93 = por %p91, %p92
      %p95 = scmp.ne.s32.totalorder %s80, %s94
      %p96 = scmp.eq.s32.totalorder %s28, 0
      %p97 = por %p95, %p96
      %s99 = sadd.s32 %s98, 1
      %p102 = scmp.eq.s32.totalorder %s22, 1
      %p103 = scmp.ne.s32.totalorder %s98, %s100
      %p104 = scmp.eq.s32.totalorder %s22, 0
      %p105 = por %p103, %p104
      %p106 = scmp.ne.s32.totalorder %s98, %s100
      %p107 = scmp.eq.s32.totalorder %s27, 1
      %p108 = por %p106, %p107
      %p109 = scmp.ne.s32.totalorder %s100, %s101
      %p110 = scmp.eq.s32.totalorder %s27, 0
      %p111 = por %p109, %p110
      %p112 = scmp.ne.s32.totalorder %s100, %s101
      %p113 = scmp.eq.s32.totalorder %s28, 1
      %p114 = por %p112, %p113
      %p116 = scmp.ne.s32.totalorder %s101, %s115
      %p117 = scmp.eq.s32.totalorder %s28, 0
      %p118 = por %p116, %p117
      %s120 = sadd.s32 %s119, 1
      %p123 = scmp.eq.s32.totalorder %s22, 1
      %p124 = scmp.ne.s32.totalorder %s119, %s121
      %p125 = scmp.eq.s32.totalorder %s22, 0
      %p126 = por %p124, %p125
      %p127 = scmp.ne.s32.totalorder %s119, %s121
      %p128 = scmp.eq.s32.totalorder %s27, 1
      %p129 = por %p127, %p128
      %p130 = scmp.ne.s32.totalorder %s121, %s122
      %p131 = scmp.eq.s32.totalorder %s27, 0
      %p132 = por %p130, %p131
      %p133 = scmp.ne.s32.totalorder %s121, %s122
      %p134 = scmp.eq.s32.totalorder %s28, 1
      %p135 = por %p133, %p134
      %p137 = scmp.ne.s32.totalorder %s122, %s136
      %p138 = scmp.eq.s32.totalorder %s28, 0
      %p139 = por %p137, %p138
      %s141 = sadd.s32 %s140, 1
      %p144 = scmp.eq.s32.totalorder %s22, 1
      %p145 = scmp.ne.s32.totalorder %s140, %s142
      %p146 = scmp.eq.s32.totalorder %s22, 0
      %p147 = por %p145, %p146
      %p148 = scmp.ne.s32.totalorder %s140, %s142
      %p149 = scmp.eq.s32.totalorder %s27, 1
      %p150 = por %p148, %p149
      %p151 = scmp.ne.s32.totalorder %s142, %s143
      %p152 = scmp.eq.s32.totalorder %s27, 0
      %p153 = por %p151, %p152
      %p154 = scmp.ne.s32.totalorder %s142, %s143
      %p155 = scmp.eq.s32.totalorder %s28, 1
      %p156 = por %p154, %p155
      %p158 = scmp.ne.s32.totalorder %s143, %s157
      %p159 = scmp.eq.s32.totalorder %s28, 0
      %p160 = por %p158, %p159
      %s162 = sadd.s32 %s161, 1
      %p165 = scmp.eq.s32.totalorder %s22, 1
      %p166 = scmp.ne.s32.totalorder %s161, %s163
      %p167 = scmp.eq.s32.totalorder %s22, 0
      %p168 = por %p166, %p167
      %p169 = scmp.ne.s32.totalorder %s161, %s163
      %p170 = scmp.eq.s32.totalorder %s27, 1
      %p171 = por %p169, %p170
      %p172 = scmp.ne.s32.totalorder %s163, %s164
      %p173 = scmp.eq.s32.totalorder %s27, 0
      %p174 = por %p172, %p173
      %p175 = scmp.ne.s32.totalorder %s163, %s164
      %p176 = scmp.eq.s32.totalorder %s28, 1
      %p177 = por %p175, %p176
      %p179 = scmp.ne.s32.totalorder %s164, %s178
      %p180 = scmp.eq.s32.totalorder %s28, 0
      %p181 = por %p179, %p180
      %s183 = sadd.s32 %s182, 1
      %p186 = scmp.eq.s32.totalorder %s22, 1
      %p187 = scmp.ne.s32.totalorder %s182, %s184
      %p188 = scmp.eq.s32.totalorder %s22, 0
      %p189 = por %p187, %p188
      %p190 = scmp.ne.s32.totalorder %s182, %s184
      %p191 = scmp.eq.s32.totalorder %s27, 1
      %p192 = por %p190, %p191
      %p193 = scmp.ne.s32.totalorder %s184, %s185
      %p194 = scmp.eq.s32.totalorder %s27, 0
      %p195 = por %p193, %p194
      %p196 = scmp.ne.s32.totalorder %s184, %s185
      %p197 = scmp.eq.s32.totalorder %s28, 1
      %p198 = por %p196, %p197
      %p200 = scmp.ne.s32.totalorder %s185, %s199
      %p201 = scmp.eq.s32.totalorder %s28, 0
      %p202 = por %p200, %p201
      %s204 = sadd.s32 %s203, 1
      %p207 = scmp.eq.s32.totalorder %s22, 1
      %p208 = scmp.ne.s32.totalorder %s203, %s205
      %p209 = scmp.eq.s32.totalorder %s22, 0
      %p210 = por %p208, %p209
      %p211 = scmp.ne.s32.totalorder %s203, %s205
      %p212 = scmp.eq.s32.totalorder %s27, 1
      %p213 = por %p211, %p212
      %p214 = scmp.ne.s32.totalorder %s205, %s206
      %p215 = scmp.eq.s32.totalorder %s27, 0
      %p216 = por %p214, %p215
      %p217 = scmp.ne.s32.totalorder %s205, %s206
      %p218 = scmp.eq.s32.totalorder %s28, 1
      %p219 = por %p217, %p218
      %p221 = scmp.ne.s32.totalorder %s206, %s220
      %p222 = scmp.eq.s32.totalorder %s28, 0
      %p223 = por %p221, %p222
      %s225 = sadd.s32 %s224, 1
      %p228 = scmp.eq.s32.totalorder %s22, 1
      %p229 = scmp.ne.s32.totalorder %s224, %s226
      %p230 = scmp.eq.s32.totalorder %s22, 0
      %p231 = por %p229, %p230
      %p232 = scmp.ne.s32.totalorder %s224, %s226
      %p233 = scmp.eq.s32.totalorder %s27, 1
      %p234 = por %p232, %p233
      %p235 = scmp.ne.s32.totalorder %s226, %s227
      %p236 = scmp.eq.s32.totalorder %s27, 0
      %p237 = por %p235, %p236
      %p238 = scmp.ne.s32.totalorder %s226, %s227
      %p239 = scmp.eq.s32.totalorder %s28, 1
      %p240 = por %p238, %p239
      %p242 = scmp.ne.s32.totalorder %s227, %s241
      %p243 = scmp.eq.s32.totalorder %s28, 0
      %p244 = por %p242, %p243
      %s246 = sadd.s32 %s245, 1
      %p249 = scmp.eq.s32.totalorder %s22, 1
      %p250 = scmp.ne.s32.totalorder %s245, %s247
      %p251 = scmp.eq.s32.totalorder %s22, 0
      %p252 = por %p250, %p251
      %p253 = scmp.ne.s32.totalorder %s245, %s247
      %p254 = scmp.eq.s32.totalorder %s27, 1
      %p255 = por %p253, %p254
      %p256 = scmp.ne.s32.totalorder %s247, %s248
      %p257 = scmp.eq.s32.totalorder %s27, 0
      %p258 = por %p256, %p257
      %p259 = scmp.ne.s32.totalorder %s247, %s248
      %p260 = scmp.eq.s32.totalorder %s28, 1
      %p261 = por %p259, %p260
      %p263 = scmp.ne.s32.totalorder %s248, %s262
      %p264 = scmp.eq.s32.totalorder %s28, 0
      %p265 = por %p263, %p264
      %s267 = sadd.s32 %s266, 1
      %p270 = scmp.eq.s32.totalorder %s22, 1
      %p271 = scmp.ne.s32.totalorder %s266, %s268
      %p272 = scmp.eq.s32.totalorder %s22, 0
      %p273 = por %p271, %p272
      %p274 = scmp.ne.s32.totalorder %s266, %s268
      %p275 = scmp.eq.s32.totalorder %s27, 1
      %p276 = por %p274, %p275
      %p277 = scmp.ne.s32.totalorder %s268, %s269
      %p278 = scmp.eq.s32.totalorder %s27, 0
      %p279 = por %p277, %p278
      %p280 = scmp.ne.s32.totalorder %s268, %s269
      %p281 = scmp.eq.s32.totalorder %s28, 1
      %p282 = por %p280, %p281
      %p284 = scmp.ne.s32.totalorder %s269, %s283
      %p285 = scmp.eq.s32.totalorder %s28, 0
      %p286 = por %p284, %p285
      %s288 = sadd.s32 %s287, 1
      %p291 = scmp.eq.s32.totalorder %s22, 1
      %p292 = scmp.ne.s32.totalorder %s287, %s289
      %p293 = scmp.eq.s32.totalorder %s22, 0
      %p294 = por %p292, %p293
      %p295 = scmp.ne.s32.totalorder %s287, %s289
      %p296 = scmp.eq.s32.totalorder %s27, 1
      %p297 = por %p295, %p296
      %p298 = scmp.ne.s32.totalorder %s289, %s290
      %p299 = scmp.eq.s32.totalorder %s27, 0
      %p300 = por %p298, %p299
      %p301 = scmp.ne.s32.totalorder %s289, %s290
      %p302 = scmp.eq.s32.totalorder %s28, 1
      %p303 = por %p301, %p302
      %p305 = scmp.ne.s32.totalorder %s290, %s304
      %p306 = scmp.eq.s32.totalorder %s28, 0
      %p307 = por %p305, %p306
      %s308 = ssub.s32 %s22, %s29
      %p309 = scmp.eq.s32.totalorder %s308, 0
      %s311 = sadd.s32 %s310, 1
      %s312 = scalar_select %p309, %s310, %s311
      %p315 = pneg %p309
      %p316 = scmp.eq.s32.totalorder %s22, 1
      %p317 = por %p315, %p316
      %p318 = scmp.ne.s32.totalorder %s310, %s313
      %p319 = scmp.eq.s32.totalorder %s22, 0
      %p320 = por %p318, %p319
      %p321 = scmp.ne.s32.totalorder %s310, %s313
      %p322 = scmp.eq.s32.totalorder %s27, 1
      %p323 = por %p321, %p322
      %p324 = scmp.ne.s32.totalorder %s313, %s314
      %p325 = scmp.eq.s32.totalorder %s27, 0
      %p326 = por %p324, %p325
      %p327 = scmp.ne.s32.totalorder %s313, %s314
      %p328 = scmp.eq.s32.totalorder %s28, 1
      %p329 = por %p327, %p328
      %p331 = scmp.ne.s32.totalorder %s314, %s330
      %p332 = scmp.eq.s32.totalorder %s28, 0
      %p333 = por %p331, %p332
      %p334 = scmp.le.s32.totalorder 1, %s22
      %p335 = scmp.lt.s32.totalorder %s22, 3
      %p336 = pnand %p334, %p335
      %p337 = pneg %p336
      // Predicated region
      $region9: #{tpu_custom_call.1} parent=5 // pred_check
        _
      $region10: #{tpu_custom_call.1} parent=5 // pred_check_branch
        %339 = sbr.rel (%p336) target = $region12
      $region11: #{tpu_custom_call.1} parent=5 // pred_region
        %s340 = ssub.s32 %s22, 1
        // Predicated region
        $region13: #{tpu_custom_call.1} parent=11 // pred_check
          %p341 = pneg %p69
        $region14: #{tpu_custom_call.1} parent=11 // pred_check_branch
          %343 = sbr.rel (%p341) target = $region16
        $region15: #{tpu_custom_call.1} parent=11 // pred_region
          _
        $region16: #{tpu_custom_call.1} parent=11 // pred_fallthru
          _
        // Predicated region
        $region17: #{tpu_custom_call.1} parent=11 // pred_check
          %p344 = pneg %p90
        $region18: #{tpu_custom_call.1} parent=11 // pred_check_branch
          %346 = sbr.rel (%p344) target = $region20
        $region19: #{tpu_custom_call.1} parent=11 // pred_region
          _
        $region20: #{tpu_custom_call.1} parent=11 // pred_fallthru
          _
        // Predicated region
        $region21: #{tpu_custom_call.1} parent=11 // pred_check
          %p347 = pneg %p111
        $region22: #{tpu_custom_call.1} parent=11 // pred_check_branch
          %349 = sbr.rel (%p347) target = $region24
        $region23: #{tpu_custom_call.1} parent=11 // pred_region
          _
        $region24: #{tpu_custom_call.1} parent=11 // pred_fallthru
          _
        // Predicated region
        $region25: #{tpu_custom_call.1} parent=11 // pred_check
          %p350 = pneg %p132
        $region26: #{tpu_custom_call.1} parent=11 // pred_check_branch
          %352 = sbr.rel (%p350) target = $region28
        $region27: #{tpu_custom_call.1} parent=11 // pred_region
          _
        $region28: #{tpu_custom_call.1} parent=11 // pred_fallthru
          _
        // Predicated region
        $region29: #{tpu_custom_call.1} parent=11 // pred_check
          %p353 = pneg %p153
        $region30: #{tpu_custom_call.1} parent=11 // pred_check_branch
          %355 = sbr.rel (%p353) target = $region32
        $region31: #{tpu_custom_call.1} parent=11 // pred_region
          _
        $region32: #{tpu_custom_call.1} parent=11 // pred_fallthru
          _
        // Predicated region
        $region33: #{tpu_custom_call.1} parent=11 // pred_check
          %p356 = pneg %p174
        $region34: #{tpu_custom_call.1} parent=11 // pred_check_branch
          %358 = sbr.rel (%p356) target = $region36
        $region35: #{tpu_custom_call.1} parent=11 // pred_region
          _
        $region36: #{tpu_custom_call.1} parent=11 // pred_fallthru
          _
        // Predicated region
        $region37: #{tpu_custom_call.1} parent=11 // pred_check
          %p359 = pneg %p195
        $region38: #{tpu_custom_call.1} parent=11 // pred_check_branch
          %361 = sbr.rel (%p359) target = $region40
        $region39: #{tpu_custom_call.1} parent=11 // pred_region
          _
        $region40: #{tpu_custom_call.1} parent=11 // pred_fallthru
          _
        // Predicated region
        $region41: #{tpu_custom_call.1} parent=11 // pred_check
          %p362 = pneg %p216
        $region42: #{tpu_custom_call.1} parent=11 // pred_check_branch
          %364 = sbr.rel (%p362) target = $region44
        $region43: #{tpu_custom_call.1} parent=11 // pred_region
          _
        $region44: #{tpu_custom_call.1} parent=11 // pred_fallthru
          _
        // Predicated region
        $region45: #{tpu_custom_call.1} parent=11 // pred_check
          %p365 = pneg %p237
        $region46: #{tpu_custom_call.1} parent=11 // pred_check_branch
          %367 = sbr.rel (%p365) target = $region48
        $region47: #{tpu_custom_call.1} parent=11 // pred_region
          _
        $region48: #{tpu_custom_call.1} parent=11 // pred_fallthru
          _
        // Predicated region
        $region49: #{tpu_custom_call.1} parent=11 // pred_check
          %p368 = pneg %p258
        $region50: #{tpu_custom_call.1} parent=11 // pred_check_branch
          %370 = sbr.rel (%p368) target = $region52
        $region51: #{tpu_custom_call.1} parent=11 // pred_region
          _
        $region52: #{tpu_custom_call.1} parent=11 // pred_fallthru
          _
        // Predicated region
        $region53: #{tpu_custom_call.1} parent=11 // pred_check
          %p371 = pneg %p279
        $region54: #{tpu_custom_call.1} parent=11 // pred_check_branch
          %373 = sbr.rel (%p371) target = $region56
        $region55: #{tpu_custom_call.1} parent=11 // pred_region
          _
        $region56: #{tpu_custom_call.1} parent=11 // pred_fallthru
          _
        // Predicated region
        $region57: #{tpu_custom_call.1} parent=11 // pred_check
          %p374 = pneg %p300
        $region58: #{tpu_custom_call.1} parent=11 // pred_check_branch
          %376 = sbr.rel (%p374) target = $region60
        $region59: #{tpu_custom_call.1} parent=11 // pred_region
          _
        $region60: #{tpu_custom_call.1} parent=11 // pred_fallthru
          _
      $region12: #{tpu_custom_call.1} parent=5 // pred_fallthru
        _
      %p377 = scmp.lt.s32.totalorder %s22, 2
      // Predicated region
      $region61: #{tpu_custom_call.1} parent=5 // pred_check
        %p378 = pneg %p377
      $region62: #{tpu_custom_call.1} parent=5 // pred_check_branch
        %380 = sbr.rel (%p378) target = $region64
      $region63: #{tpu_custom_call.1} parent=5 // pred_region
        // Predicated region
        $region65: #{tpu_custom_call.1} parent=63 // pred_check
          %p381 = pneg %p42
        $region66: #{tpu_custom_call.1} parent=63 // pred_check_branch
          %383 = sbr.rel (%p381) target = $region68
        $region67: #{tpu_custom_call.1} parent=63 // pred_region
          %p384 = scmp.lt.s32.totalorder %s22, 1
          %s385 = scalar_select %p384, %s22, 1
          %s386 = smul.addr %s385, 32
          %s387 = smul.addr %s386, 8
          %s388 = scalar_lea.vmem %s0, %s387
        $region68: #{tpu_custom_call.1} parent=63 // pred_fallthru
          _
      $region64: #{tpu_custom_call.1} parent=5 // pred_fallthru
        _
      %p389 = scmp.le.s32.totalorder 1, %s22
      %p390 = scmp.lt.s32.totalorder %s22, 3
      %p391 = pnand %p389, %p390
      %p392 = pneg %p391
      // Predicated region
      $region69: #{tpu_custom_call.1} parent=5 // pred_check
        _
      $region70: #{tpu_custom_call.1} parent=5 // pred_check_branch
        %394 = sbr.rel (%p391) target = $region72
      $region71: #{tpu_custom_call.1} parent=5 // pred_region
        %s395 = ssub.s32 %s22, 1
        %p396 = scmp.lt.s32.totalorder %s27, 1
        %s397 = scalar_select %p396, %s27, 1
        %s398 = smul.addr %s397, 32
        %s399 = smul.addr %s398, 8
        %s400 = scalar_lea.vmem %s0, %s399
        %p401 = pneg %p48
        %p402 = pneg %p45
        %p403 = pneg %p69
        %p404 = pneg %p66
        %p405 = pneg %p90
        %p406 = pneg %p87
        %p407 = pneg %p111
        %p408 = pneg %p108
        %p409 = pneg %p132
        %p410 = pneg %p129
        %p411 = pneg %p153
        %p412 = pneg %p150
        %p413 = pneg %p174
        %p414 = pneg %p171
        %p415 = pneg %p195
        %p416 = pneg %p192
        %p417 = pneg %p216
        %p418 = pneg %p213
        %p419 = pneg %p237
        %p420 = pneg %p234
        %p421 = pneg %p258
        %p422 = pneg %p255
        %p423 = pneg %p279
        %p424 = pneg %p276
        %p425 = pneg %p300
        %p426 = pneg %p297
        %p427 = pneg %p326
        %p428 = pneg %p323
        %s429 = sand.u32 %s313, 1
        %s430 = scalar_lea.sflag [#allocation3], %s429
        %s431 = sand.u32 %s313, 1
        %s432 = smul.addr %s431, 256
        %s433 = scalar_lea.vmem [#allocation2], %s432
        %p434 = scmp.lt.s32.totalorder %s27, 1
        %s435 = scalar_select %p434, %s27, 1
        %s436 = smul.addr %s435, 32
        %s437 = smul.addr %s436, 8
        %s438 = scalar_lea.vmem %s0, %s437
        %v440 = vld [vmem:[%s438] sm:$0xff]
        %v441 = vld [vmem:[%s438 + $0x8] sm:$0xff]
        %v442 = vld [vmem:[%s438 + $0x10] sm:$0xff]
        %v443 = vld [vmem:[%s438 + $0x18] sm:$0xff]
        %v444 = vld [vmem:[%s438 + $0x20] sm:$0xff]
        %v445 = vld [vmem:[%s438 + $0x28] sm:$0xff]
        %v446 = vld [vmem:[%s438 + $0x30] sm:$0xff]
        %v447 = vld [vmem:[%s438 + $0x38] sm:$0xff]
        %v448 = vld [vmem:[%s438 + $0x40] sm:$0xff]
        %v449 = vld [vmem:[%s438 + $0x48] sm:$0xff]
        %v450 = vld [vmem:[%s438 + $0x50] sm:$0xff]
        %v451 = vld [vmem:[%s438 + $0x58] sm:$0xff]
        %v452 = vld [vmem:[%s438 + $0x60] sm:$0xff]
        %v453 = vld [vmem:[%s438 + $0x68] sm:$0xff]
        %v454 = vld [vmem:[%s438 + $0x70] sm:$0xff]
        %v455 = vld [vmem:[%s438 + $0x78] sm:$0xff]
        %v456 = vld [vmem:[%s438 + $0x80] sm:$0xff]
        %v457 = vld [vmem:[%s438 + $0x88] sm:$0xff]
        %v458 = vld [vmem:[%s438 + $0x90] sm:$0xff]
        %v459 = vld [vmem:[%s438 + $0x98] sm:$0xff]
        %v460 = vld [vmem:[%s438 + $0xa0] sm:$0xff]
        %v461 = vld [vmem:[%s438 + $0xa8] sm:$0xff]
        %v462 = vld [vmem:[%s438 + $0xb0] sm:$0xff]
        %v463 = vld [vmem:[%s438 + $0xb8] sm:$0xff]
        %v464 = vld [vmem:[%s438 + $0xc0] sm:$0xff]
        %v465 = vld [vmem:[%s438 + $0xc8] sm:$0xff]
        %v466 = vld [vmem:[%s438 + $0xd0] sm:$0xff]
        %v467 = vld [vmem:[%s438 + $0xd8] sm:$0xff]
        %v468 = vld [vmem:[%s438 + $0xe0] sm:$0xff]
        %v469 = vld [vmem:[%s438 + $0xe8] sm:$0xff]
        %v470 = vld [vmem:[%s438 + $0xf0] sm:$0xff]
        %v471 = vld [vmem:[%s438 + $0xf8] sm:$0xff]
        %vm505 = vcmask 1040384
        %v506 = vrot.slane 0.0, 7
        %v507 = vsel %vm505, %v506, %v506
        %v508 = vrot.slane %v440, 7
        %v509 = vrot.slane %v441, 7
        %v510 = vsel %vm505, %v508, %v509
        %v511 = vrot.slane %v442, 7
        %v512 = vrot.slane %v443, 7
        %v513 = vsel %vm505, %v511, %v512
        %v514 = vrot.slane %v444, 7
        %v515 = vrot.slane %v445, 7
        %v516 = vsel %vm505, %v514, %v515
        %v517 = vrot.slane %v446, 7
        %v518 = vrot.slane %v447, 7
        %v519 = vsel %vm505, %v517, %v518
        %v520 = vrot.slane %v448, 7
        %v521 = vrot.slane %v449, 7
        %v522 = vsel %vm505, %v520, %v521
        %v523 = vrot.slane %v450, 7
        %v524 = vrot.slane %v451, 7
        %v525 = vsel %vm505, %v523, %v524
        %v526 = vrot.slane %v452, 7
        %v527 = vrot.slane %v453, 7
        %v528 = vsel %vm505, %v526, %v527
        %v529 = vrot.slane %v454, 7
        %v530 = vrot.slane %v455, 7
        %v531 = vsel %vm505, %v529, %v530
        %v532 = vrot.slane %v456, 7
        %v533 = vrot.slane %v457, 7
        %v534 = vsel %vm505, %v532, %v533
        %v535 = vrot.slane %v458, 7
        %v536 = vrot.slane %v459, 7
        %v537 = vsel %vm505, %v535, %v536
        %v538 = vrot.slane %v460, 7
        %v539 = vrot.slane %v461, 7
        %v540 = vsel %vm505, %v538, %v539
        %v541 = vrot.slane %v462, 7
        %v542 = vrot.slane %v463, 7
        %v543 = vsel %vm505, %v541, %v542
        %v544 = vrot.slane %v464, 7
        %v545 = vrot.slane %v465, 7
        %v546 = vsel %vm505, %v544, %v545
        %v547 = vrot.slane %v466, 7
        %v548 = vrot.slane %v467, 7
        %v549 = vsel %vm505, %v547, %v548
        %v550 = vrot.slane %v468, 7
        %v551 = vrot.slane %v469, 7
        %v552 = vsel %vm505, %v550, %v551
        %v553 = vrot.slane %v470, 7
        %v554 = vrot.slane %v471, 7
        %v555 = vsel %vm505, %v553, %v554
        %v605 = vsel %vm505, 0.0, %v506
        %v606 = vsel %vm505, 0.0, %v508
        %v607 = vsel %vm505, 0.0, %v511
        %v608 = vsel %vm505, 0.0, %v514
        %v609 = vsel %vm505, 0.0, %v517
        %v610 = vsel %vm505, 0.0, %v520
        %v611 = vsel %vm505, 0.0, %v523
        %v612 = vsel %vm505, 0.0, %v526
        %v613 = vsel %vm505, 0.0, %v529
        %v614 = vsel %vm505, 0.0, %v532
        %v615 = vsel %vm505, 0.0, %v535
        %v616 = vsel %vm505, 0.0, %v538
        %v617 = vsel %vm505, 0.0, %v541
        %v618 = vsel %vm505, 0.0, %v544
        %v619 = vsel %vm505, 0.0, %v547
        %v620 = vsel %vm505, 0.0, %v550
        %v621 = vsel %vm505, 0.0, %v553
        %v622 = vsel %vm505, %v506, 0.0
        %v623 = vsel %vm505, %v509, 0.0
        %v624 = vsel %vm505, %v512, 0.0
        %v625 = vsel %vm505, %v515, 0.0
        %v626 = vsel %vm505, %v518, 0.0
        %v627 = vsel %vm505, %v521, 0.0
        %v628 = vsel %vm505, %v524, 0.0
        %v629 = vsel %vm505, %v527, 0.0
        %v630 = vsel %vm505, %v530, 0.0
        %v631 = vsel %vm505, %v533, 0.0
        %v632 = vsel %vm505, %v536, 0.0
        %v633 = vsel %vm505, %v539, 0.0
        %v634 = vsel %vm505, %v542, 0.0
        %v635 = vsel %vm505, %v545, 0.0
        %v636 = vsel %vm505, %v548, 0.0
        %v637 = vsel %vm505, %v551, 0.0
        %v638 = vsel %vm505, %v554, 0.0
        %vm671 = vcmask 1046528
        %v672 = vrot.slane %v605, 1
        %v673 = vrot.slane %v507, 1
        %v674 = vsel %vm671, %v672, %v673
        %v675 = vrot.slane %v622, 1
        %v676 = vsel %vm671, %v673, %v675
        %v677 = vrot.slane %v606, 1
        %v678 = vrot.slane %v510, 1
        %v679 = vsel %vm671, %v677, %v678
        %v680 = vrot.slane %v623, 1
        %v681 = vsel %vm671, %v678, %v680
        %v682 = vrot.slane %v607, 1
        %v683 = vrot.slane %v513, 1
        %v684 = vsel %vm671, %v682, %v683
        %v685 = vrot.slane %v624, 1
        %v686 = vsel %vm671, %v683, %v685
        %v687 = vrot.slane %v608, 1
        %v688 = vrot.slane %v516, 1
        %v689 = vsel %vm671, %v687, %v688
        %v690 = vrot.slane %v625, 1
        %v691 = vsel %vm671, %v688, %v690
        %v692 = vrot.slane %v609, 1
        %v693 = vrot.slane %v519, 1
        %v694 = vsel %vm671, %v692, %v693
        %v695 = vrot.slane %v626, 1
        %v696 = vsel %vm671, %v693, %v695
        %v697 = vrot.slane %v610, 1
        %v698 = vrot.slane %v522, 1
        %v699 = vsel %vm671, %v697, %v698
        %v700 = vrot.slane %v627, 1
        %v701 = vsel %vm671, %v698, %v700
        %v702 = vrot.slane %v611, 1
        %v703 = vrot.slane %v525, 1
        %v704 = vsel %vm671, %v702, %v703
        %v705 = vrot.slane %v628, 1
        %v706 = vsel %vm671, %v703, %v705
        %v707 = vrot.slane %v612, 1
        %v708 = vrot.slane %v528, 1
        %v709 = vsel %vm671, %v707, %v708
        %v710 = vrot.slane %v629, 1
        %v711 = vsel %vm671, %v708, %v710
        %v712 = vrot.slane %v613, 1
        %v713 = vrot.slane %v531, 1
        %v714 = vsel %vm671, %v712, %v713
        %v715 = vrot.slane %v630, 1
        %v716 = vsel %vm671, %v713, %v715
        %v717 = vrot.slane %v614, 1
        %v718 = vrot.slane %v534, 1
        %v719 = vsel %vm671, %v717, %v718
        %v720 = vrot.slane %v631, 1
        %v721 = vsel %vm671, %v718, %v720
        %v722 = vrot.slane %v615, 1
        %v723 = vrot.slane %v537, 1
        %v724 = vsel %vm671, %v722, %v723
        %v725 = vrot.slane %v632, 1
        %v726 = vsel %vm671, %v723, %v725
        %v727 = vrot.slane %v616, 1
        %v728 = vrot.slane %v540, 1
        %v729 = vsel %vm671, %v727, %v728
        %v730 = vrot.slane %v633, 1
        %v731 = vsel %vm671, %v728, %v730
        %v732 = vrot.slane %v617, 1
        %v733 = vrot.slane %v543, 1
        %v734 = vsel %vm671, %v732, %v733
        %v735 = vrot.slane %v634, 1
        %v736 = vsel %vm671, %v733, %v735
        %v737 = vrot.slane %v618, 1
        %v738 = vrot.slane %v546, 1
        %v739 = vsel %vm671, %v737, %v738
        %v740 = vrot.slane %v635, 1
        %v741 = vsel %vm671, %v738, %v740
        %v742 = vrot.slane %v619, 1
        %v743 = vrot.slane %v549, 1
        %v744 = vsel %vm671, %v742, %v743
        %v745 = vrot.slane %v636, 1
        %v746 = vsel %vm671, %v743, %v745
        %v747 = vrot.slane %v620, 1
        %v748 = vrot.slane %v552, 1
        %v749 = vsel %vm671, %v747, %v748
        %v750 = vrot.slane %v637, 1
        %v751 = vsel %vm671, %v748, %v750
        %752 = vrot.lane.b32.xlu0 %v674, 4
        %v753 = vpop.permute.xlu0 %752
        %754 = vrot.lane.b32.xlu0 %v676, 4
        %v755 = vpop.permute.xlu0 %754
        %756 = vrot.lane.b32.xlu0 %v679, 4
        %v757 = vpop.permute.xlu0 %756
        %758 = vrot.lane.b32.xlu0 %v681, 4
        %v759 = vpop.permute.xlu0 %758
        %760 = vrot.lane.b32.xlu0 %v684, 4
        %v761 = vpop.permute.xlu0 %760
        %762 = vrot.lane.b32.xlu0 %v686, 4
        %v763 = vpop.permute.xlu0 %762
        %764 = vrot.lane.b32.xlu0 %v689, 4
        %v765 = vpop.permute.xlu0 %764
        %766 = vrot.lane.b32.xlu0 %v691, 4
        %v767 = vpop.permute.xlu0 %766
        %768 = vrot.lane.b32.xlu0 %v694, 4
        %v769 = vpop.permute.xlu0 %768
        %770 = vrot.lane.b32.xlu0 %v696, 4
        %v771 = vpop.permute.xlu0 %770
        %772 = vrot.lane.b32.xlu0 %v699, 4
        %v773 = vpop.permute.xlu0 %772
        %774 = vrot.lane.b32.xlu0 %v701, 4
        %v775 = vpop.permute.xlu0 %774
        %776 = vrot.lane.b32.xlu0 %v704, 4
        %v777 = vpop.permute.xlu0 %776
        %778 = vrot.lane.b32.xlu0 %v706, 4
        %v779 = vpop.permute.xlu0 %778
        %780 = vrot.lane.b32.xlu0 %v709, 4
        %v781 = vpop.permute.xlu0 %780
        %782 = vrot.lane.b32.xlu0 %v711, 4
        %v783 = vpop.permute.xlu0 %782
        %784 = vrot.lane.b32.xlu0 %v714, 4
        %v785 = vpop.permute.xlu0 %784
        %786 = vrot.lane.b32.xlu0 %v716, 4
        %v787 = vpop.permute.xlu0 %786
        %788 = vrot.lane.b32.xlu0 %v719, 4
        %v789 = vpop.permute.xlu0 %788
        %790 = vrot.lane.b32.xlu0 %v721, 4
        %v791 = vpop.permute.xlu0 %790
        %792 = vrot.lane.b32.xlu0 %v724, 4
        %v793 = vpop.permute.xlu0 %792
        %794 = vrot.lane.b32.xlu0 %v726, 4
        %v795 = vpop.permute.xlu0 %794
        %796 = vrot.lane.b32.xlu0 %v729, 4
        %v797 = vpop.permute.xlu0 %796
        %798 = vrot.lane.b32.xlu0 %v731, 4
        %v799 = vpop.permute.xlu0 %798
        %800 = vrot.lane.b32.xlu0 %v734, 4
        %v801 = vpop.permute.xlu0 %800
        %802 = vrot.lane.b32.xlu0 %v736, 4
        %v803 = vpop.permute.xlu0 %802
        %804 = vrot.lane.b32.xlu0 %v739, 4
        %v805 = vpop.permute.xlu0 %804
        %806 = vrot.lane.b32.xlu0 %v741, 4
        %v807 = vpop.permute.xlu0 %806
        %808 = vrot.lane.b32.xlu0 %v744, 4
        %v809 = vpop.permute.xlu0 %808
        %810 = vrot.lane.b32.xlu0 %v746, 4
        %v811 = vpop.permute.xlu0 %810
        %812 = vrot.lane.b32.xlu0 %v749, 4
        %v813 = vpop.permute.xlu0 %812
        %814 = vrot.lane.b32.xlu0 %v751, 4
        %v815 = vpop.permute.xlu0 %814
        %vm848 = vcmask 1045504
        %v849 = vrot.slane %v605, 2
        %v850 = vrot.slane %v507, 2
        %v851 = vsel %vm848, %v849, %v850
        %v852 = vrot.slane %v622, 2
        %v853 = vsel %vm848, %v850, %v852
        %v854 = vrot.slane %v606, 2
        %v855 = vrot.slane %v510, 2
        %v856 = vsel %vm848, %v854, %v855
        %v857 = vrot.slane %v623, 2
        %v858 = vsel %vm848, %v855, %v857
        %v859 = vrot.slane %v607, 2
        %v860 = vrot.slane %v513, 2
        %v861 = vsel %vm848, %v859, %v860
        %v862 = vrot.slane %v624, 2
        %v863 = vsel %vm848, %v860, %v862
        %v864 = vrot.slane %v608, 2
        %v865 = vrot.slane %v516, 2
        %v866 = vsel %vm848, %v864, %v865
        %v867 = vrot.slane %v625, 2
        %v868 = vsel %vm848, %v865, %v867
        %v869 = vrot.slane %v609, 2
        %v870 = vrot.slane %v519, 2
        %v871 = vsel %vm848, %v869, %v870
        %v872 = vrot.slane %v626, 2
        %v873 = vsel %vm848, %v870, %v872
        %v874 = vrot.slane %v610, 2
        %v875 = vrot.slane %v522, 2
        %v876 = vsel %vm848, %v874, %v875
        %v877 = vrot.slane %v627, 2
        %v878 = vsel %vm848, %v875, %v877
        %v879 = vrot.slane %v611, 2
        %v880 = vrot.slane %v525, 2
        %v881 = vsel %vm848, %v879, %v880
        %v882 = vrot.slane %v628, 2
        %v883 = vsel %vm848, %v880, %v882
        %v884 = vrot.slane %v612, 2
        %v885 = vrot.slane %v528, 2
        %v886 = vsel %vm848, %v884, %v885
        %v887 = vrot.slane %v629, 2
        %v888 = vsel %vm848, %v885, %v887
        %v889 = vrot.slane %v613, 2
        %v890 = vrot.slane %v531, 2
        %v891 = vsel %vm848, %v889, %v890
        %v892 = vrot.slane %v630, 2
        %v893 = vsel %vm848, %v890, %v892
        %v894 = vrot.slane %v614, 2
        %v895 = vrot.slane %v534, 2
        %v896 = vsel %vm848, %v894, %v895
        %v897 = vrot.slane %v631, 2
        %v898 = vsel %vm848, %v895, %v897
        %v899 = vrot.slane %v615, 2
        %v900 = vrot.slane %v537, 2
        %v901 = vsel %vm848, %v899, %v900
        %v902 = vrot.slane %v632, 2
        %v903 = vsel %vm848, %v900, %v902
        %v904 = vrot.slane %v616, 2
        %v905 = vrot.slane %v540, 2
        %v906 = vsel %vm848, %v904, %v905
        %v907 = vrot.slane %v633, 2
        %v908 = vsel %vm848, %v905, %v907
        %v909 = vrot.slane %v617, 2
        %v910 = vrot.slane %v543, 2
        %v911 = vsel %vm848, %v909, %v910
        %v912 = vrot.slane %v634, 2
        %v913 = vsel %vm848, %v910, %v912
        %v914 = vrot.slane %v618, 2
        %v915 = vrot.slane %v546, 2
        %v916 = vsel %vm848, %v914, %v915
        %v917 = vrot.slane %v635, 2
        %v918 = vsel %vm848, %v915, %v917
        %v919 = vrot.slane %v619, 2
        %v920 = vrot.slane %v549, 2
        %v921 = vsel %vm848, %v919, %v920
        %v922 = vrot.slane %v636, 2
        %v923 = vsel %vm848, %v920, %v922
        %v924 = vrot.slane %v620, 2
        %v925 = vrot.slane %v552, 2
        %v926 = vsel %vm848, %v924, %v925
        %v927 = vrot.slane %v637, 2
        %v928 = vsel %vm848, %v925, %v927
        %929 = vrot.lane.b32.xlu0 %v851, 8
        %v930 = vpop.permute.xlu0 %929
        %931 = vrot.lane.b32.xlu0 %v853, 8
        %v932 = vpop.permute.xlu0 %931
        %933 = vrot.lane.b32.xlu0 %v856, 8
        %v934 = vpop.permute.xlu0 %933
        %935 = vrot.lane.b32.xlu0 %v858, 8
        %v936 = vpop.permute.xlu0 %935
        %937 = vrot.lane.b32.xlu0 %v861, 8
        %v938 = vpop.permute.xlu0 %937
        %939 = vrot.lane.b32.xlu0 %v863, 8
        %v940 = vpop.permute.xlu0 %939
        %941 = vrot.lane.b32.xlu0 %v866, 8
        %v942 = vpop.permute.xlu0 %941
        %943 = vrot.lane.b32.xlu0 %v868, 8
        %v944 = vpop.permute.xlu0 %943
        %945 = vrot.lane.b32.xlu0 %v871, 8
        %v946 = vpop.permute.xlu0 %945
        %947 = vrot.lane.b32.xlu0 %v873, 8
        %v948 = vpop.permute.xlu0 %947
        %949 = vrot.lane.b32.xlu0 %v876, 8
        %v950 = vpop.permute.xlu0 %949
        %951 = vrot.lane.b32.xlu0 %v878, 8
        %v952 = vpop.permute.xlu0 %951
        %953 = vrot.lane.b32.xlu0 %v881, 8
        %v954 = vpop.permute.xlu0 %953
        %955 = vrot.lane.b32.xlu0 %v883, 8
        %v956 = vpop.permute.xlu0 %955
        %957 = vrot.lane.b32.xlu0 %v886, 8
        %v958 = vpop.permute.xlu0 %957
        %959 = vrot.lane.b32.xlu0 %v888, 8
        %v960 = vpop.permute.xlu0 %959
        %961 = vrot.lane.b32.xlu0 %v891, 8
        %v962 = vpop.permute.xlu0 %961
        %963 = vrot.lane.b32.xlu0 %v893, 8
        %v964 = vpop.permute.xlu0 %963
        %965 = vrot.lane.b32.xlu0 %v896, 8
        %v966 = vpop.permute.xlu0 %965
        %967 = vrot.lane.b32.xlu0 %v898, 8
        %v968 = vpop.permute.xlu0 %967
        %969 = vrot.lane.b32.xlu0 %v901, 8
        %v970 = vpop.permute.xlu0 %969
        %971 = vrot.lane.b32.xlu0 %v903, 8
        %v972 = vpop.permute.xlu0 %971
        %973 = vrot.lane.b32.xlu0 %v906, 8
        %v974 = vpop.permute.xlu0 %973
        %975 = vrot.lane.b32.xlu0 %v908, 8
        %v976 = vpop.permute.xlu0 %975
        %977 = vrot.lane.b32.xlu0 %v911, 8
        %v978 = vpop.permute.xlu0 %977
        %979 = vrot.lane.b32.xlu0 %v913, 8
        %v980 = vpop.permute.xlu0 %979
        %981 = vrot.lane.b32.xlu0 %v916, 8
        %v982 = vpop.permute.xlu0 %981
        %983 = vrot.lane.b32.xlu0 %v918, 8
        %v984 = vpop.permute.xlu0 %983
        %985 = vrot.lane.b32.xlu0 %v921, 8
        %v986 = vpop.permute.xlu0 %985
        %987 = vrot.lane.b32.xlu0 %v923, 8
        %v988 = vpop.permute.xlu0 %987
        %989 = vrot.lane.b32.xlu0 %v926, 8
        %v990 = vpop.permute.xlu0 %989
        %991 = vrot.lane.b32.xlu0 %v928, 8
        %v992 = vpop.permute.xlu0 %991
        %1026 = vrot.lane.b32.xlu0 %v606, 12
        %v1027 = vpop.permute.xlu0 %1026
        %1028 = vrot.lane.b32.xlu0 %v510, 12
        %v1029 = vpop.permute.xlu0 %1028
        %1030 = vrot.lane.b32.xlu0 %v607, 12
        %v1031 = vpop.permute.xlu0 %1030
        %1032 = vrot.lane.b32.xlu0 %v513, 12
        %v1033 = vpop.permute.xlu0 %1032
        %1034 = vrot.lane.b32.xlu0 %v608, 12
        %v1035 = vpop.permute.xlu0 %1034
        %1036 = vrot.lane.b32.xlu0 %v516, 12
        %v1037 = vpop.permute.xlu0 %1036
        %1038 = vrot.lane.b32.xlu0 %v609, 12
        %v1039 = vpop.permute.xlu0 %1038
        %1040 = vrot.lane.b32.xlu0 %v519, 12
        %v1041 = vpop.permute.xlu0 %1040
        %1042 = vrot.lane.b32.xlu0 %v610, 12
        %v1043 = vpop.permute.xlu0 %1042
        %1044 = vrot.lane.b32.xlu0 %v522, 12
        %v1045 = vpop.permute.xlu0 %1044
        %1046 = vrot.lane.b32.xlu0 %v611, 12
        %v1047 = vpop.permute.xlu0 %1046
        %1048 = vrot.lane.b32.xlu0 %v525, 12
        %v1049 = vpop.permute.xlu0 %1048
        %1050 = vrot.lane.b32.xlu0 %v612, 12
        %v1051 = vpop.permute.xlu0 %1050
        %1052 = vrot.lane.b32.xlu0 %v528, 12
        %v1053 = vpop.permute.xlu0 %1052
        %1054 = vrot.lane.b32.xlu0 %v613, 12
        %v1055 = vpop.permute.xlu0 %1054
        %1056 = vrot.lane.b32.xlu0 %v531, 12
        %v1057 = vpop.permute.xlu0 %1056
        %1058 = vrot.lane.b32.xlu0 %v614, 12
        %v1059 = vpop.permute.xlu0 %1058
        %1060 = vrot.lane.b32.xlu0 %v534, 12
        %v1061 = vpop.permute.xlu0 %1060
        %1062 = vrot.lane.b32.xlu0 %v615, 12
        %v1063 = vpop.permute.xlu0 %1062
        %1064 = vrot.lane.b32.xlu0 %v537, 12
        %v1065 = vpop.permute.xlu0 %1064
        %1066 = vrot.lane.b32.xlu0 %v616, 12
        %v1067 = vpop.permute.xlu0 %1066
        %1068 = vrot.lane.b32.xlu0 %v540, 12
        %v1069 = vpop.permute.xlu0 %1068
        %1070 = vrot.lane.b32.xlu0 %v617, 12
        %v1071 = vpop.permute.xlu0 %1070
        %1072 = vrot.lane.b32.xlu0 %v543, 12
        %v1073 = vpop.permute.xlu0 %1072
        %1074 = vrot.lane.b32.xlu0 %v618, 12
        %v1075 = vpop.permute.xlu0 %1074
        %1076 = vrot.lane.b32.xlu0 %v546, 12
        %v1077 = vpop.permute.xlu0 %1076
        %1078 = vrot.lane.b32.xlu0 %v619, 12
        %v1079 = vpop.permute.xlu0 %1078
        %1080 = vrot.lane.b32.xlu0 %v549, 12
        %v1081 = vpop.permute.xlu0 %1080
        %1082 = vrot.lane.b32.xlu0 %v620, 12
        %v1083 = vpop.permute.xlu0 %1082
        %1084 = vrot.lane.b32.xlu0 %v552, 12
        %v1085 = vpop.permute.xlu0 %1084
        %1086 = vrot.lane.b32.xlu0 %v621, 12
        %v1087 = vpop.permute.xlu0 %1086
        %1088 = vrot.lane.b32.xlu0 %v555, 12
        %v1089 = vpop.permute.xlu0 %1088
        %v1123 = vrot.slane %v621, 1
        %v1124 = vrot.slane %v555, 1
        %v1125 = vsel %vm671, %v1123, %v1124
        %v1126 = vrot.slane %v638, 1
        %v1127 = vsel %vm671, %v1124, %v1126
        %1128 = vrot.lane.b32.xlu0 %v679, 16
        %v1129 = vpop.permute.xlu0 %1128
        %1130 = vrot.lane.b32.xlu0 %v681, 16
        %v1131 = vpop.permute.xlu0 %1130
        %1132 = vrot.lane.b32.xlu0 %v684, 16
        %v1133 = vpop.permute.xlu0 %1132
        %1134 = vrot.lane.b32.xlu0 %v686, 16
        %v1135 = vpop.permute.xlu0 %1134
        %1136 = vrot.lane.b32.xlu0 %v689, 16
        %v1137 = vpop.permute.xlu0 %1136
        %1138 = vrot.lane.b32.xlu0 %v691, 16
        %v1139 = vpop.permute.xlu0 %1138
        %1140 = vrot.lane.b32.xlu0 %v694, 16
        %v1141 = vpop.permute.xlu0 %1140
        %1142 = vrot.lane.b32.xlu0 %v696, 16
        %v1143 = vpop.permute.xlu0 %1142
        %1144 = vrot.lane.b32.xlu0 %v699, 16
        %v1145 = vpop.permute.xlu0 %1144
        %1146 = vrot.lane.b32.xlu0 %v701, 16
        %v1147 = vpop.permute.xlu0 %1146
        %1148 = vrot.lane.b32.xlu0 %v704, 16
        %v1149 = vpop.permute.xlu0 %1148
        %1150 = vrot.lane.b32.xlu0 %v706, 16
        %v1151 = vpop.permute.xlu0 %1150
        %1152 = vrot.lane.b32.xlu0 %v709, 16
        %v1153 = vpop.permute.xlu0 %1152
        %1154 = vrot.lane.b32.xlu0 %v711, 16
        %v1155 = vpop.permute.xlu0 %1154
        %1156 = vrot.lane.b32.xlu0 %v714, 16
        %v1157 = vpop.permute.xlu0 %1156
        %1158 = vrot.lane.b32.xlu0 %v716, 16
        %v1159 = vpop.permute.xlu0 %1158
        %1160 = vrot.lane.b32.xlu0 %v719, 16
        %v1161 = vpop.permute.xlu0 %1160
        %1162 = vrot.lane.b32.xlu0 %v721, 16
        %v1163 = vpop.permute.xlu0 %1162
        %1164 = vrot.lane.b32.xlu0 %v724, 16
        %v1165 = vpop.permute.xlu0 %1164
        %1166 = vrot.lane.b32.xlu0 %v726, 16
        %v1167 = vpop.permute.xlu0 %1166
        %1168 = vrot.lane.b32.xlu0 %v729, 16
        %v1169 = vpop.permute.xlu0 %1168
        %1170 = vrot.lane.b32.xlu0 %v731, 16
        %v1171 = vpop.permute.xlu0 %1170
        %1172 = vrot.lane.b32.xlu0 %v734, 16
        %v1173 = vpop.permute.xlu0 %1172
        %1174 = vrot.lane.b32.xlu0 %v736, 16
        %v1175 = vpop.permute.xlu0 %1174
        %1176 = vrot.lane.b32.xlu0 %v739, 16
        %v1177 = vpop.permute.xlu0 %1176
        %1178 = vrot.lane.b32.xlu0 %v741, 16
        %v1179 = vpop.permute.xlu0 %1178
        %1180 = vrot.lane.b32.xlu0 %v744, 16
        %v1181 = vpop.permute.xlu0 %1180
        %1182 = vrot.lane.b32.xlu0 %v746, 16
        %v1183 = vpop.permute.xlu0 %1182
        %1184 = vrot.lane.b32.xlu0 %v749, 16
        %v1185 = vpop.permute.xlu0 %1184
        %1186 = vrot.lane.b32.xlu0 %v751, 16
        %v1187 = vpop.permute.xlu0 %1186
        %1188 = vrot.lane.b32.xlu0 %v1125, 16
        %v1189 = vpop.permute.xlu0 %1188
        %1190 = vrot.lane.b32.xlu0 %v1127, 16
        %v1191 = vpop.permute.xlu0 %1190
        %v1224 = vrot.slane %v621, 2
        %v1225 = vrot.slane %v555, 2
        %v1226 = vsel %vm848, %v1224, %v1225
        %v1227 = vrot.slane %v638, 2
        %v1228 = vsel %vm848, %v1225, %v1227
        %1229 = vrot.lane.b32.xlu0 %v856, 20
        %v1230 = vpop.permute.xlu0 %1229
        %1231 = vrot.lane.b32.xlu0 %v858, 20
        %v1232 = vpop.permute.xlu0 %1231
        %1233 = vrot.lane.b32.xlu0 %v861, 20
        %v1234 = vpop.permute.xlu0 %1233
        %1235 = vrot.lane.b32.xlu0 %v863, 20
        %v1236 = vpop.permute.xlu0 %1235
        %1237 = vrot.lane.b32.xlu0 %v866, 20
        %v1238 = vpop.permute.xlu0 %1237
        %1239 = vrot.lane.b32.xlu0 %v868, 20
        %v1240 = vpop.permute.xlu0 %1239
        %1241 = vrot.lane.b32.xlu0 %v871, 20
        %v1242 = vpop.permute.xlu0 %1241
        %1243 = vrot.lane.b32.xlu0 %v873, 20
        %v1244 = vpop.permute.xlu0 %1243
        %1245 = vrot.lane.b32.xlu0 %v876, 20
        %v1246 = vpop.permute.xlu0 %1245
        %1247 = vrot.lane.b32.xlu0 %v878, 20
        %v1248 = vpop.permute.xlu0 %1247
        %1249 = vrot.lane.b32.xlu0 %v881, 20
        %v1250 = vpop.permute.xlu0 %1249
        %1251 = vrot.lane.b32.xlu0 %v883, 20
        %v1252 = vpop.permute.xlu0 %1251
        %1253 = vrot.lane.b32.xlu0 %v886, 20
        %v1254 = vpop.permute.xlu0 %1253
        %1255 = vrot.lane.b32.xlu0 %v888, 20
        %v1256 = vpop.permute.xlu0 %1255
        %1257 = vrot.lane.b32.xlu0 %v891, 20
        %v1258 = vpop.permute.xlu0 %1257
        %1259 = vrot.lane.b32.xlu0 %v893, 20
        %v1260 = vpop.permute.xlu0 %1259
        %1261 = vrot.lane.b32.xlu0 %v896, 20
        %v1262 = vpop.permute.xlu0 %1261
        %1263 = vrot.lane.b32.xlu0 %v898, 20
        %v1264 = vpop.permute.xlu0 %1263
        %1265 = vrot.lane.b32.xlu0 %v901, 20
        %v1266 = vpop.permute.xlu0 %1265
        %1267 = vrot.lane.b32.xlu0 %v903, 20
        %v1268 = vpop.permute.xlu0 %1267
        %1269 = vrot.lane.b32.xlu0 %v906, 20
        %v1270 = vpop.permute.xlu0 %1269
        %1271 = vrot.lane.b32.xlu0 %v908, 20
        %v1272 = vpop.permute.xlu0 %1271
        %1273 = vrot.lane.b32.xlu0 %v911, 20
        %v1274 = vpop.permute.xlu0 %1273
        %1275 = vrot.lane.b32.xlu0 %v913, 20
        %v1276 = vpop.permute.xlu0 %1275
        %1277 = vrot.lane.b32.xlu0 %v916, 20
        %v1278 = vpop.permute.xlu0 %1277
        %1279 = vrot.lane.b32.xlu0 %v918, 20
        %v1280 = vpop.permute.xlu0 %1279
        %1281 = vrot.lane.b32.xlu0 %v921, 20
        %v1282 = vpop.permute.xlu0 %1281
        %1283 = vrot.lane.b32.xlu0 %v923, 20
        %v1284 = vpop.permute.xlu0 %1283
        %1285 = vrot.lane.b32.xlu0 %v926, 20
        %v1286 = vpop.permute.xlu0 %1285
        %1287 = vrot.lane.b32.xlu0 %v928, 20
        %v1288 = vpop.permute.xlu0 %1287
        %1289 = vrot.lane.b32.xlu0 %v1226, 20
        %v1290 = vpop.permute.xlu0 %1289
        %1291 = vrot.lane.b32.xlu0 %v1228, 20
        %v1292 = vpop.permute.xlu0 %1291
        %1325 = vrot.lane.b32.xlu0 %v607, 24
        %v1326 = vpop.permute.xlu0 %1325
        %1327 = vrot.lane.b32.xlu0 %v513, 24
        %v1328 = vpop.permute.xlu0 %1327
        %1329 = vrot.lane.b32.xlu0 %v608, 24
        %v1330 = vpop.permute.xlu0 %1329
        %1331 = vrot.lane.b32.xlu0 %v516, 24
        %v1332 = vpop.permute.xlu0 %1331
        %1333 = vrot.lane.b32.xlu0 %v609, 24
        %v1334 = vpop.permute.xlu0 %1333
        %1335 = vrot.lane.b32.xlu0 %v519, 24
        %v1336 = vpop.permute.xlu0 %1335
        %1337 = vrot.lane.b32.xlu0 %v610, 24
        %v1338 = vpop.permute.xlu0 %1337
        %1339 = vrot.lane.b32.xlu0 %v522, 24
        %v1340 = vpop.permute.xlu0 %1339
        %1341 = vrot.lane.b32.xlu0 %v611, 24
        %v1342 = vpop.permute.xlu0 %1341
        %1343 = vrot.lane.b32.xlu0 %v525, 24
        %v1344 = vpop.permute.xlu0 %1343
        %1345 = vrot.lane.b32.xlu0 %v612, 24
        %v1346 = vpop.permute.xlu0 %1345
        %1347 = vrot.lane.b32.xlu0 %v528, 24
        %v1348 = vpop.permute.xlu0 %1347
        %1349 = vrot.lane.b32.xlu0 %v613, 24
        %v1350 = vpop.permute.xlu0 %1349
        %1351 = vrot.lane.b32.xlu0 %v531, 24
        %v1352 = vpop.permute.xlu0 %1351
        %1353 = vrot.lane.b32.xlu0 %v614, 24
        %v1354 = vpop.permute.xlu0 %1353
        %1355 = vrot.lane.b32.xlu0 %v534, 24
        %v1356 = vpop.permute.xlu0 %1355
        %1357 = vrot.lane.b32.xlu0 %v615, 24
        %v1358 = vpop.permute.xlu0 %1357
        %1359 = vrot.lane.b32.xlu0 %v537, 24
        %v1360 = vpop.permute.xlu0 %1359
        %1361 = vrot.lane.b32.xlu0 %v616, 24
        %v1362 = vpop.permute.xlu0 %1361
        %1363 = vrot.lane.b32.xlu0 %v540, 24
        %v1364 = vpop.permute.xlu0 %1363
        %1365 = vrot.lane.b32.xlu0 %v617, 24
        %v1366 = vpop.permute.xlu0 %1365
        %1367 = vrot.lane.b32.xlu0 %v543, 24
        %v1368 = vpop.permute.xlu0 %1367
        %1369 = vrot.lane.b32.xlu0 %v618, 24
        %v1370 = vpop.permute.xlu0 %1369
        %1371 = vrot.lane.b32.xlu0 %v546, 24
        %v1372 = vpop.permute.xlu0 %1371
        %1373 = vrot.lane.b32.xlu0 %v619, 24
        %v1374 = vpop.permute.xlu0 %1373
        %1375 = vrot.lane.b32.xlu0 %v549, 24
        %v1376 = vpop.permute.xlu0 %1375
        %1377 = vrot.lane.b32.xlu0 %v620, 24
        %v1378 = vpop.permute.xlu0 %1377
        %1379 = vrot.lane.b32.xlu0 %v552, 24
        %v1380 = vpop.permute.xlu0 %1379
        %1381 = vrot.lane.b32.xlu0 %v621, 24
        %v1382 = vpop.permute.xlu0 %1381
        %1383 = vrot.lane.b32.xlu0 %v555, 24
        %v1384 = vpop.permute.xlu0 %1383
        %1385 = vrot.lane.b32.xlu0 %v605, 24
        %v1386 = vpop.permute.xlu0 %1385
        %1387 = vrot.lane.b32.xlu0 %v507, 24
        %v1388 = vpop.permute.xlu0 %1387
        %1421 = vrot.lane.b32.xlu0 %v684, 28
        %v1422 = vpop.permute.xlu0 %1421
        %1423 = vrot.lane.b32.xlu0 %v686, 28
        %v1424 = vpop.permute.xlu0 %1423
        %1425 = vrot.lane.b32.xlu0 %v689, 28
        %v1426 = vpop.permute.xlu0 %1425
        %1427 = vrot.lane.b32.xlu0 %v691, 28
        %v1428 = vpop.permute.xlu0 %1427
        %1429 = vrot.lane.b32.xlu0 %v694, 28
        %v1430 = vpop.permute.xlu0 %1429
        %1431 = vrot.lane.b32.xlu0 %v696, 28
        %v1432 = vpop.permute.xlu0 %1431
        %1433 = vrot.lane.b32.xlu0 %v699, 28
        %v1434 = vpop.permute.xlu0 %1433
        %1435 = vrot.lane.b32.xlu0 %v701, 28
        %v1436 = vpop.permute.xlu0 %1435
        %1437 = vrot.lane.b32.xlu0 %v704, 28
        %v1438 = vpop.permute.xlu0 %1437
        %1439 = vrot.lane.b32.xlu0 %v706, 28
        %v1440 = vpop.permute.xlu0 %1439
        %1441 = vrot.lane.b32.xlu0 %v709, 28
        %v1442 = vpop.permute.xlu0 %1441
        %1443 = vrot.lane.b32.xlu0 %v711, 28
        %v1444 = vpop.permute.xlu0 %1443
        %1445 = vrot.lane.b32.xlu0 %v714, 28
        %v1446 = vpop.permute.xlu0 %1445
        %1447 = vrot.lane.b32.xlu0 %v716, 28
        %v1448 = vpop.permute.xlu0 %1447
        %1449 = vrot.lane.b32.xlu0 %v719, 28
        %v1450 = vpop.permute.xlu0 %1449
        %1451 = vrot.lane.b32.xlu0 %v721, 28
        %v1452 = vpop.permute.xlu0 %1451
        %1453 = vrot.lane.b32.xlu0 %v724, 28
        %v1454 = vpop.permute.xlu0 %1453
        %1455 = vrot.lane.b32.xlu0 %v726, 28
        %v1456 = vpop.permute.xlu0 %1455
        %1457 = vrot.lane.b32.xlu0 %v729, 28
        %v1458 = vpop.permute.xlu0 %1457
        %1459 = vrot.lane.b32.xlu0 %v731, 28
        %v1460 = vpop.permute.xlu0 %1459
        %1461 = vrot.lane.b32.xlu0 %v734, 28
        %v1462 = vpop.permute.xlu0 %1461
        %1463 = vrot.lane.b32.xlu0 %v736, 28
        %v1464 = vpop.permute.xlu0 %1463
        %1465 = vrot.lane.b32.xlu0 %v739, 28
        %v1466 = vpop.permute.xlu0 %1465
        %1467 = vrot.lane.b32.xlu0 %v741, 28
        %v1468 = vpop.permute.xlu0 %1467
        %1469 = vrot.lane.b32.xlu0 %v744, 28
        %v1470 = vpop.permute.xlu0 %1469
        %1471 = vrot.lane.b32.xlu0 %v746, 28
        %v1472 = vpop.permute.xlu0 %1471
        %1473 = vrot.lane.b32.xlu0 %v749, 28
        %v1474 = vpop.permute.xlu0 %1473
        %1475 = vrot.lane.b32.xlu0 %v751, 28
        %v1476 = vpop.permute.xlu0 %1475
        %1477 = vrot.lane.b32.xlu0 %v1125, 28
        %v1478 = vpop.permute.xlu0 %1477
        %1479 = vrot.lane.b32.xlu0 %v1127, 28
        %v1480 = vpop.permute.xlu0 %1479
        %1481 = vrot.lane.b32.xlu0 %v674, 28
        %v1482 = vpop.permute.xlu0 %1481
        %1483 = vrot.lane.b32.xlu0 %v676, 28
        %v1484 = vpop.permute.xlu0 %1483
        %1517 = vrot.lane.b32.xlu0 %v861, 32
        %v1518 = vpop.permute.xlu0 %1517
        %1519 = vrot.lane.b32.xlu0 %v863, 32
        %v1520 = vpop.permute.xlu0 %1519
        %1521 = vrot.lane.b32.xlu0 %v866, 32
        %v1522 = vpop.permute.xlu0 %1521
        %1523 = vrot.lane.b32.xlu0 %v868, 32
        %v1524 = vpop.permute.xlu0 %1523
        %1525 = vrot.lane.b32.xlu0 %v871, 32
        %v1526 = vpop.permute.xlu0 %1525
        %1527 = vrot.lane.b32.xlu0 %v873, 32
        %v1528 = vpop.permute.xlu0 %1527
        %1529 = vrot.lane.b32.xlu0 %v876, 32
        %v1530 = vpop.permute.xlu0 %1529
        %1531 = vrot.lane.b32.xlu0 %v878, 32
        %v1532 = vpop.permute.xlu0 %1531
        %1533 = vrot.lane.b32.xlu0 %v881, 32
        %v1534 = vpop.permute.xlu0 %1533
        %1535 = vrot.lane.b32.xlu0 %v883, 32
        %v1536 = vpop.permute.xlu0 %1535
        %1537 = vrot.lane.b32.xlu0 %v886, 32
        %v1538 = vpop.permute.xlu0 %1537
        %1539 = vrot.lane.b32.xlu0 %v888, 32
        %v1540 = vpop.permute.xlu0 %1539
        %1541 = vrot.lane.b32.xlu0 %v891, 32
        %v1542 = vpop.permute.xlu0 %1541
        %1543 = vrot.lane.b32.xlu0 %v893, 32
        %v1544 = vpop.permute.xlu0 %1543
        %1545 = vrot.lane.b32.xlu0 %v896, 32
        %v1546 = vpop.permute.xlu0 %1545
        %1547 = vrot.lane.b32.xlu0 %v898, 32
        %v1548 = vpop.permute.xlu0 %1547
        %1549 = vrot.lane.b32.xlu0 %v901, 32
        %v1550 = vpop.permute.xlu0 %1549
        %1551 = vrot.lane.b32.xlu0 %v903, 32
        %v1552 = vpop.permute.xlu0 %1551
        %1553 = vrot.lane.b32.xlu0 %v906, 32
        %v1554 = vpop.permute.xlu0 %1553
        %1555 = vrot.lane.b32.xlu0 %v908, 32
        %v1556 = vpop.permute.xlu0 %1555
        %1557 = vrot.lane.b32.xlu0 %v911, 32
        %v1558 = vpop.permute.xlu0 %1557
        %1559 = vrot.lane.b32.xlu0 %v913, 32
        %v1560 = vpop.permute.xlu0 %1559
        %1561 = vrot.lane.b32.xlu0 %v916, 32
        %v1562 = vpop.permute.xlu0 %1561
        %1563 = vrot.lane.b32.xlu0 %v918, 32
        %v1564 = vpop.permute.xlu0 %1563
        %1565 = vrot.lane.b32.xlu0 %v921, 32
        %v1566 = vpop.permute.xlu0 %1565
        %1567 = vrot.lane.b32.xlu0 %v923, 32
        %v1568 = vpop.permute.xlu0 %1567
        %1569 = vrot.lane.b32.xlu0 %v926, 32
        %v1570 = vpop.permute.xlu0 %1569
        %1571 = vrot.lane.b32.xlu0 %v928, 32
        %v1572 = vpop.permute.xlu0 %1571
        %1573 = vrot.lane.b32.xlu0 %v1226, 32
        %v1574 = vpop.permute.xlu0 %1573
        %1575 = vrot.lane.b32.xlu0 %v1228, 32
        %v1576 = vpop.permute.xlu0 %1575
        %1577 = vrot.lane.b32.xlu0 %v851, 32
        %v1578 = vpop.permute.xlu0 %1577
        %1579 = vrot.lane.b32.xlu0 %v853, 32
        %v1580 = vpop.permute.xlu0 %1579
        %vm1613 = vcmask 31744
        %v1614 = vsel %vm1613, %v605, %v753
        %v1615 = vsel %vm1613, %v507, %v755
        %v1616 = vsel %vm1613, %v606, %v757
        %v1617 = vsel %vm1613, %v510, %v759
        %v1618 = vsel %vm1613, %v607, %v761
        %v1619 = vsel %vm1613, %v513, %v763
        %v1620 = vsel %vm1613, %v608, %v765
        %v1621 = vsel %vm1613, %v516, %v767
        %v1622 = vsel %vm1613, %v609, %v769
        %v1623 = vsel %vm1613, %v519, %v771
        %v1624 = vsel %vm1613, %v610, %v773
        %v1625 = vsel %vm1613, %v522, %v775
        %v1626 = vsel %vm1613, %v611, %v777
        %v1627 = vsel %vm1613, %v525, %v779
        %v1628 = vsel %vm1613, %v612, %v781
        %v1629 = vsel %vm1613, %v528, %v783
        %v1630 = vsel %vm1613, %v613, %v785
        %v1631 = vsel %vm1613, %v531, %v787
        %v1632 = vsel %vm1613, %v614, %v789
        %v1633 = vsel %vm1613, %v534, %v791
        %v1634 = vsel %vm1613, %v615, %v793
        %v1635 = vsel %vm1613, %v537, %v795
        %v1636 = vsel %vm1613, %v616, %v797
        %v1637 = vsel %vm1613, %v540, %v799
        %v1638 = vsel %vm1613, %v617, %v801
        %v1639 = vsel %vm1613, %v543, %v803
        %v1640 = vsel %vm1613, %v618, %v805
        %v1641 = vsel %vm1613, %v546, %v807
        %v1642 = vsel %vm1613, %v619, %v809
        %v1643 = vsel %vm1613, %v549, %v811
        %v1644 = vsel %vm1613, %v620, %v813
        %v1645 = vsel %vm1613, %v552, %v815
        %vm1646 = vcmask 64512
        %v1647 = vsel %vm1646, %v1614, %v930
        %v1648 = vsel %vm1646, %v1615, %v932
        %v1649 = vsel %vm1646, %v1616, %v934
        %v1650 = vsel %vm1646, %v1617, %v936
        %v1651 = vsel %vm1646, %v1618, %v938
        %v1652 = vsel %vm1646, %v1619, %v940
        %v1653 = vsel %vm1646, %v1620, %v942
        %v1654 = vsel %vm1646, %v1621, %v944
        %v1655 = vsel %vm1646, %v1622, %v946
        %v1656 = vsel %vm1646, %v1623, %v948
        %v1657 = vsel %vm1646, %v1624, %v950
        %v1658 = vsel %vm1646, %v1625, %v952
        %v1659 = vsel %vm1646, %v1626, %v954
        %v1660 = vsel %vm1646, %v1627, %v956
        %v1661 = vsel %vm1646, %v1628, %v958
        %v1662 = vsel %vm1646, %v1629, %v960
        %v1663 = vsel %vm1646, %v1630, %v962
        %v1664 = vsel %vm1646, %v1631, %v964
        %v1665 = vsel %vm1646, %v1632, %v966
        %v1666 = vsel %vm1646, %v1633, %v968
        %v1667 = vsel %vm1646, %v1634, %v970
        %v1668 = vsel %vm1646, %v1635, %v972
        %v1669 = vsel %vm1646, %v1636, %v974
        %v1670 = vsel %vm1646, %v1637, %v976
        %v1671 = vsel %vm1646, %v1638, %v978
        %v1672 = vsel %vm1646, %v1639, %v980
        %v1673 = vsel %vm1646, %v1640, %v982
        %v1674 = vsel %vm1646, %v1641, %v984
        %v1675 = vsel %vm1646, %v1642, %v986
        %v1676 = vsel %vm1646, %v1643, %v988
        %v1677 = vsel %vm1646, %v1644, %v990
        %v1678 = vsel %vm1646, %v1645, %v992
        %vm1679 = vcmask 97280
        %v1680 = vsel %vm1679, %v1647, %v1027
        %v1681 = vsel %vm1679, %v1648, %v1029
        %v1682 = vsel %vm1679, %v1649, %v1031
        %v1683 = vsel %vm1679, %v1650, %v1033
        %v1684 = vsel %vm1679, %v1651, %v1035
        %v1685 = vsel %vm1679, %v1652, %v1037
        %v1686 = vsel %vm1679, %v1653, %v1039
        %v1687 = vsel %vm1679, %v1654, %v1041
        %v1688 = vsel %vm1679, %v1655, %v1043
        %v1689 = vsel %vm1679, %v1656, %v1045
        %v1690 = vsel %vm1679, %v1657, %v1047
        %v1691 = vsel %vm1679, %v1658, %v1049
        %v1692 = vsel %vm1679, %v1659, %v1051
        %v1693 = vsel %vm1679, %v1660, %v1053
        %v1694 = vsel %vm1679, %v1661, %v1055
        %v1695 = vsel %vm1679, %v1662, %v1057
        %v1696 = vsel %vm1679, %v1663, %v1059
        %v1697 = vsel %vm1679, %v1664, %v1061
        %v1698 = vsel %vm1679, %v1665, %v1063
        %v1699 = vsel %vm1679, %v1666, %v1065
        %v1700 = vsel %vm1679, %v1667, %v1067
        %v1701 = vsel %vm1679, %v1668, %v1069
        %v1702 = vsel %vm1679, %v1669, %v1071
        %v1703 = vsel %vm1679, %v1670, %v1073
        %v1704 = vsel %vm1679, %v1671, %v1075
        %v1705 = vsel %vm1679, %v1672, %v1077
        %v1706 = vsel %vm1679, %v1673, %v1079
        %v1707 = vsel %vm1679, %v1674, %v1081
        %v1708 = vsel %vm1679, %v1675, %v1083
        %v1709 = vsel %vm1679, %v1676, %v1085
        %v1710 = vsel %vm1679, %v1677, %v1087
        %v1711 = vsel %vm1679, %v1678, %v1089
        %vm1712 = vcmask 130048
        %v1713 = vsel %vm1712, %v1680, %v1129
        %v1714 = vsel %vm1712, %v1681, %v1131
        %v1715 = vsel %vm1712, %v1682, %v1133
        %v1716 = vsel %vm1712, %v1683, %v1135
        %v1717 = vsel %vm1712, %v1684, %v1137
        %v1718 = vsel %vm1712, %v1685, %v1139
        %v1719 = vsel %vm1712, %v1686, %v1141
        %v1720 = vsel %vm1712, %v1687, %v1143
        %v1721 = vsel %vm1712, %v1688, %v1145
        %v1722 = vsel %vm1712, %v1689, %v1147
        %v1723 = vsel %vm1712, %v1690, %v1149
        %v1724 = vsel %vm1712, %v1691, %v1151
        %v1725 = vsel %vm1712, %v1692, %v1153
        %v1726 = vsel %vm1712, %v1693, %v1155
        %v1727 = vsel %vm1712, %v1694, %v1157
        %v1728 = vsel %vm1712, %v1695, %v1159
        %v1729 = vsel %vm1712, %v1696, %v1161
        %v1730 = vsel %vm1712, %v1697, %v1163
        %v1731 = vsel %vm1712, %v1698, %v1165
        %v1732 = vsel %vm1712, %v1699, %v1167
        %v1733 = vsel %vm1712, %v1700, %v1169
        %v1734 = vsel %vm1712, %v1701, %v1171
        %v1735 = vsel %vm1712, %v1702, %v1173
        %v1736 = vsel %vm1712, %v1703, %v1175
        %v1737 = vsel %vm1712, %v1704, %v1177
        %v1738 = vsel %vm1712, %v1705, %v1179
        %v1739 = vsel %vm1712, %v1706, %v1181
        %v1740 = vsel %vm1712, %v1707, %v1183
        %v1741 = vsel %vm1712, %v1708, %v1185
        %v1742 = vsel %vm1712, %v1709, %v1187
        %v1743 = vsel %vm1712, %v1710, %v1189
        %v1744 = vsel %vm1712, %v1711, %v1191
        %vm1745 = vcmask 162816
        %v1746 = vsel %vm1745, %v1713, %v1230
        %v1747 = vsel %vm1745, %v1714, %v1232
        %v1748 = vsel %vm1745, %v1715, %v1234
        %v1749 = vsel %vm1745, %v1716, %v1236
        %v1750 = vsel %vm1745, %v1717, %v1238
        %v1751 = vsel %vm1745, %v1718, %v1240
        %v1752 = vsel %vm1745, %v1719, %v1242
        %v1753 = vsel %vm1745, %v1720, %v1244
        %v1754 = vsel %vm1745, %v1721, %v1246
        %v1755 = vsel %vm1745, %v1722, %v1248
        %v1756 = vsel %vm1745, %v1723, %v1250
        %v1757 = vsel %vm1745, %v1724, %v1252
        %v1758 = vsel %vm1745, %v1725, %v1254
        %v1759 = vsel %vm1745, %v1726, %v1256
        %v1760 = vsel %vm1745, %v1727, %v1258
        %v1761 = vsel %vm1745, %v1728, %v1260
        %v1762 = vsel %vm1745, %v1729, %v1262
        %v1763 = vsel %vm1745, %v1730, %v1264
        %v1764 = vsel %vm1745, %v1731, %v1266
        %v1765 = vsel %vm1745, %v1732, %v1268
        %v1766 = vsel %vm1745, %v1733, %v1270
        %v1767 = vsel %vm1745, %v1734, %v1272
        %v1768 = vsel %vm1745, %v1735, %v1274
        %v1769 = vsel %vm1745, %v1736, %v1276
        %v1770 = vsel %vm1745, %v1737, %v1278
        %v1771 = vsel %vm1745, %v1738, %v1280
        %v1772 = vsel %vm1745, %v1739, %v1282
        %v1773 = vsel %vm1745, %v1740, %v1284
        %v1774 = vsel %vm1745, %v1741, %v1286
        %v1775 = vsel %vm1745, %v1742, %v1288
        %v1776 = vsel %vm1745, %v1743, %v1290
        %v1777 = vsel %vm1745, %v1744, %v1292
        %vm1778 = vcmask 195584
        %v1779 = vsel %vm1778, %v1746, %v1326
        %v1780 = vsel %vm1778, %v1747, %v1328
        %v1781 = vsel %vm1778, %v1748, %v1330
        %v1782 = vsel %vm1778, %v1749, %v1332
        %v1783 = vsel %vm1778, %v1750, %v1334
        %v1784 = vsel %vm1778, %v1751, %v1336
        %v1785 = vsel %vm1778, %v1752, %v1338
        %v1786 = vsel %vm1778, %v1753, %v1340
        %v1787 = vsel %vm1778, %v1754, %v1342
        %v1788 = vsel %vm1778, %v1755, %v1344
        %v1789 = vsel %vm1778, %v1756, %v1346
        %v1790 = vsel %vm1778, %v1757, %v1348
        %v1791 = vsel %vm1778, %v1758, %v1350
        %v1792 = vsel %vm1778, %v1759, %v1352
        %v1793 = vsel %vm1778, %v1760, %v1354
        %v1794 = vsel %vm1778, %v1761, %v1356
        %v1795 = vsel %vm1778, %v1762, %v1358
        %v1796 = vsel %vm1778, %v1763, %v1360
        %v1797 = vsel %vm1778, %v1764, %v1362
        %v1798 = vsel %vm1778, %v1765, %v1364
        %v1799 = vsel %vm1778, %v1766, %v1366
        %v1800 = vsel %vm1778, %v1767, %v1368
        %v1801 = vsel %vm1778, %v1768, %v1370
        %v1802 = vsel %vm1778, %v1769, %v1372
        %v1803 = vsel %vm1778, %v1770, %v1374
        %v1804 = vsel %vm1778, %v1771, %v1376
        %v1805 = vsel %vm1778, %v1772, %v1378
        %v1806 = vsel %vm1778, %v1773, %v1380
        %v1807 = vsel %vm1778, %v1774, %v1382
        %v1808 = vsel %vm1778, %v1775, %v1384
        %v1809 = vsel %vm1778, %v1776, %v1386
        %v1810 = vsel %vm1778, %v1777, %v1388
        %vm1811 = vcmask 228352
        %v1812 = vsel %vm1811, %v1779, %v1422
        %v1813 = vsel %vm1811, %v1780, %v1424
        %v1814 = vsel %vm1811, %v1781, %v1426
        %v1815 = vsel %vm1811, %v1782, %v1428
        %v1816 = vsel %vm1811, %v1783, %v1430
        %v1817 = vsel %vm1811, %v1784, %v1432
        %v1818 = vsel %vm1811, %v1785, %v1434
        %v1819 = vsel %vm1811, %v1786, %v1436
        %v1820 = vsel %vm1811, %v1787, %v1438
        %v1821 = vsel %vm1811, %v1788, %v1440
        %v1822 = vsel %vm1811, %v1789, %v1442
        %v1823 = vsel %vm1811, %v1790, %v1444
        %v1824 = vsel %vm1811, %v1791, %v1446
        %v1825 = vsel %vm1811, %v1792, %v1448
        %v1826 = vsel %vm1811, %v1793, %v1450
        %v1827 = vsel %vm1811, %v1794, %v1452
        %v1828 = vsel %vm1811, %v1795, %v1454
        %v1829 = vsel %vm1811, %v1796, %v1456
        %v1830 = vsel %vm1811, %v1797, %v1458
        %v1831 = vsel %vm1811, %v1798, %v1460
        %v1832 = vsel %vm1811, %v1799, %v1462
        %v1833 = vsel %vm1811, %v1800, %v1464
        %v1834 = vsel %vm1811, %v1801, %v1466
        %v1835 = vsel %vm1811, %v1802, %v1468
        %v1836 = vsel %vm1811, %v1803, %v1470
        %v1837 = vsel %vm1811, %v1804, %v1472
        %v1838 = vsel %vm1811, %v1805, %v1474
        %v1839 = vsel %vm1811, %v1806, %v1476
        %v1840 = vsel %vm1811, %v1807, %v1478
        %v1841 = vsel %vm1811, %v1808, %v1480
        %v1842 = vsel %vm1811, %v1809, %v1482
        %v1843 = vsel %vm1811, %v1810, %v1484
        %vm1844 = vcmask 261120
        %v1845 = vsel %vm1844, %v1812, %v1518
        %v1846 = vsel %vm1844, %v1813, %v1520
        %v1847 = vsel %vm1844, %v1814, %v1522
        %v1848 = vsel %vm1844, %v1815, %v1524
        %v1849 = vsel %vm1844, %v1816, %v1526
        %v1850 = vsel %vm1844, %v1817, %v1528
        %v1851 = vsel %vm1844, %v1818, %v1530
        %v1852 = vsel %vm1844, %v1819, %v1532
        %v1853 = vsel %vm1844, %v1820, %v1534
        %v1854 = vsel %vm1844, %v1821, %v1536
        %v1855 = vsel %vm1844, %v1822, %v1538
        %v1856 = vsel %vm1844, %v1823, %v1540
        %v1857 = vsel %vm1844, %v1824, %v1542
        %v1858 = vsel %vm1844, %v1825, %v1544
        %v1859 = vsel %vm1844, %v1826, %v1546
        %v1860 = vsel %vm1844, %v1827, %v1548
        %v1861 = vsel %vm1844, %v1828, %v1550
        %v1862 = vsel %vm1844, %v1829, %v1552
        %v1863 = vsel %vm1844, %v1830, %v1554
        %v1864 = vsel %vm1844, %v1831, %v1556
        %v1865 = vsel %vm1844, %v1832, %v1558
        %v1866 = vsel %vm1844, %v1833, %v1560
        %v1867 = vsel %vm1844, %v1834, %v1562
        %v1868 = vsel %vm1844, %v1835, %v1564
        %v1869 = vsel %vm1844, %v1836, %v1566
        %v1870 = vsel %vm1844, %v1837, %v1568
        %v1871 = vsel %vm1844, %v1838, %v1570
        %v1872 = vsel %vm1844, %v1839, %v1572
        %v1873 = vsel %vm1844, %v1840, %v1574
        %v1874 = vsel %vm1844, %v1841, %v1576
        %v1875 = vsel %vm1844, %v1842, %v1578
        %v1876 = vsel %vm1844, %v1843, %v1580
        %v1877 = vpack.c.bf16 %v1846, %v1845
        %v1878 = vpack.c.bf16 %v1848, %v1847
        %v1879 = vpack.c.bf16 %v1850, %v1849
        %v1880 = vpack.c.bf16 %v1852, %v1851
        %v1881 = vpack.c.bf16 %v1854, %v1853
        %v1882 = vpack.c.bf16 %v1856, %v1855
        %v1883 = vpack.c.bf16 %v1858, %v1857
        %v1884 = vpack.c.bf16 %v1860, %v1859
        %v1885 = vpack.c.bf16 %v1862, %v1861
        %v1886 = vpack.c.bf16 %v1864, %v1863
        %v1887 = vpack.c.bf16 %v1866, %v1865
        %v1888 = vpack.c.bf16 %v1868, %v1867
        %v1889 = vpack.c.bf16 %v1870, %v1869
        %v1890 = vpack.c.bf16 %v1872, %v1871
        %v1891 = vpack.c.bf16 %v1874, %v1873
        %v1892 = vpack.c.bf16 %v1876, %v1875
        %v1893 = vld [vmem:[%s1] sm:$0xf]
        %v1894 = vld [vmem:[%s1 + $0x4] sm:$0xf]
        %v1895 = vld [vmem:[%s1 + $0x8] sm:$0xf]
        %v1896 = vld [vmem:[%s1 + $0xc] sm:$0xf]
        %v1897 = vld [vmem:[%s1 + $0x10] sm:$0x3]
        %v1903 = vunpack.c.l.b16 %v1893
        %v1904 = vunpack.c.l.b16 %v1894
        %v1905 = vunpack.c.l.b16 %v1895
        %v1906 = vunpack.c.l.b16 %v1896
        %v1907 = vunpack.c.l.b16 %v1897
        %v1908 = vpack.c.b16 %v1904, %v1903
        %v1909 = vpack.c.b16 %v1906, %v1905
        %v1910 = vpack.c.b16 %v1907, %v1907
        %vm1913 = vcmask 293888
        %v1915 = vsel %vm1913, %v1877, 0
        %v1918 = vsel %vm1913, %v1878, 0
        %v1921 = vsel %vm1913, %v1879, 0
        %v1924 = vsel %vm1913, %v1880, 0
        %v1927 = vsel %vm1913, %v1881, 0
        %v1930 = vsel %vm1913, %v1882, 0
        %v1933 = vsel %vm1913, %v1883, 0
        %v1936 = vsel %vm1913, %v1884, 0
        %v1939 = vsel %vm1913, %v1885, 0
        %v1942 = vsel %vm1913, %v1886, 0
        %v1945 = vsel %vm1913, %v1887, 0
        %v1948 = vsel %vm1913, %v1888, 0
        %v1951 = vsel %vm1913, %v1889, 0
        %v1954 = vsel %vm1913, %v1890, 0
        %v1957 = vsel %vm1913, %v1891, 0
        %v1960 = vsel %vm1913, %v1892, 0
        %vm1962 = vcmask 1041408
        %v1964 = vsel %vm1962, %v1910, 0
        %1966 = vmatprep.subr.bf16.mxu0 0
        %1967 = vmatpush1.bf16.msra.mxu0 %v1908
        %1968 = vmatprep.subr.bf16.mxu0 0
        %1969 = vmatpush1.bf16.msra.mxu0 %v1909
        %1970 = vmatprep.subr.bf16.mxu0 0
        %1971 = vmatpush1.bf16.msra.mxu0 %v1964
        %1972 = vmatprep.subr.bf16.mxu0 0
        %1973 = vmatpush1.bf16.msra.mxu0 0
        %1974 = vmatprep.subr.bf16.mxu0 0
        %1975 = vmatpush1.bf16.msra.mxu0 0
        %1976 = vmatprep.subr.bf16.mxu0 0
        %1977 = vmatpush1.bf16.msra.mxu0 0
        %1978 = vmatprep.subr.bf16.mxu0 0
        %1979 = vmatpush1.bf16.msra.mxu0 0
        %1980 = vmatprep.subr.bf16.mxu0 0
        %1981 = vmatpush1.bf16.msra.mxu0 0
        %1982 = vmatprep.subr.bf16.mxu0 0
        %1983 = vmatpush1.bf16.msra.mxu0 0
        %1984 = vmatprep.subr.bf16.mxu0 0
        %1985 = vmatpush1.bf16.msra.mxu0 0
        %1986 = vmatprep.subr.bf16.mxu0 0
        %1987 = vmatpush1.bf16.msra.mxu0 0
        %1988 = vmatprep.subr.bf16.mxu0 0
        %1989 = vmatpush1.bf16.msra.mxu0 0
        %1990 = vmatprep.subr.bf16.mxu0 0
        %1991 = vmatpush1.bf16.msra.mxu0 0
        %1992 = vmatprep.subr.bf16.mxu0 0
        %1993 = vmatpush1.bf16.msra.mxu0 0
        %1994 = vmatprep.subr.bf16.mxu0 0
        %1995 = vmatpush1.bf16.msra.mxu0 0
        %1996 = vmatprep.subr.bf16.mxu0 0
        %1997 = vmatpush1.bf16.msra.mxu0 0
        %1998 = vmatprep.mubr.bf16.mxu0 0
        %1999 = vmatmul.mubr.bf16.gmra.mrb[0].mxu0 %v1915
        %v2000 = vpop.f32.mrb[0].mxu0
        %v2001 = vadd.f32 0.0, %v2000
        %v2002 = vpop.f32.mrb[0].mxu0
        %v2003 = vpop.f32.mrb[0].mxu0
        %v2004 = vadd.f32 0.0, %v2003
        %v2005 = vpop.f32.mrb[0].mxu0
        %2006 = vmatprep.mubr.bf16.mxu0 0
        %2007 = vmatmul.mubr.bf16.gmra.mrb[0].mxu0 %v1918
        %v2008 = vpop.f32.mrb[0].mxu0
        %v2009 = vadd.f32 0.0, %v2008
        %v2010 = vpop.f32.mrb[0].mxu0
        %v2011 = vpop.f32.mrb[0].mxu0
        %v2012 = vadd.f32 0.0, %v2011
        %v2013 = vpop.f32.mrb[0].mxu0
        %2014 = vmatprep.mubr.bf16.mxu0 0
        %2015 = vmatmul.mubr.bf16.gmra.mrb[0].mxu0 %v1921
        %v2016 = vpop.f32.mrb[0].mxu0
        %v2017 = vadd.f32 0.0, %v2016
        %v2018 = vpop.f32.mrb[0].mxu0
        %v2019 = vpop.f32.mrb[0].mxu0
        %v2020 = vadd.f32 0.0, %v2019
        %v2021 = vpop.f32.mrb[0].mxu0
        %2022 = vmatprep.mubr.bf16.mxu0 0
        %2023 = vmatmul.mubr.bf16.gmra.mrb[0].mxu0 %v1924
        %v2024 = vpop.f32.mrb[0].mxu0
        %v2025 = vadd.f32 0.0, %v2024
        %v2026 = vpop.f32.mrb[0].mxu0
        %v2027 = vpop.f32.mrb[0].mxu0
        %v2028 = vadd.f32 0.0, %v2027
        %v2029 = vpop.f32.mrb[0].mxu0
        %2030 = vmatprep.mubr.bf16.mxu0 0
        %2031 = vmatmul.mubr.bf16.gmra.mrb[0].mxu0 %v1927
        %v2032 = vpop.f32.mrb[0].mxu0
        %v2033 = vadd.f32 0.0, %v2032
        %v2034 = vpop.f32.mrb[0].mxu0
        %v2035 = vpop.f32.mrb[0].mxu0
        %v2036 = vadd.f32 0.0, %v2035
        %v2037 = vpop.f32.mrb[0].mxu0
        %2038 = vmatprep.mubr.bf16.mxu0 0
        %2039 = vmatmul.mubr.bf16.gmra.mrb[0].mxu0 %v1930
        %v2040 = vpop.f32.mrb[0].mxu0
        %v2041 = vadd.f32 0.0, %v2040
        %v2042 = vpop.f32.mrb[0].mxu0
        %v2043 = vpop.f32.mrb[0].mxu0
        %v2044 = vadd.f32 0.0, %v2043
        %v2045 = vpop.f32.mrb[0].mxu0
        %2046 = vmatprep.mubr.bf16.mxu0 0
        %2047 = vmatmul.mubr.bf16.gmra.mrb[0].mxu0 %v1933
        %v2048 = vpop.f32.mrb[0].mxu0
        %v2049 = vadd.f32 0.0, %v2048
        %v2050 = vpop.f32.mrb[0].mxu0
        %v2051 = vpop.f32.mrb[0].mxu0
        %v2052 = vadd.f32 0.0, %v2051
        %v2053 = vpop.f32.mrb[0].mxu0
        %2054 = vmatprep.mubr.bf16.mxu0 0
        %2055 = vmatmul.mubr.bf16.gmra.mrb[0].mxu0 %v1936
        %v2056 = vpop.f32.mrb[0].mxu0
        %v2057 = vadd.f32 0.0, %v2056
        %v2058 = vpop.f32.mrb[0].mxu0
        %v2059 = vpop.f32.mrb[0].mxu0
        %v2060 = vadd.f32 0.0, %v2059
        %v2061 = vpop.f32.mrb[0].mxu0
        %2062 = vmatprep.mubr.bf16.mxu0 0
        %2063 = vmatmul.mubr.bf16.gmra.mrb[0].mxu0 %v1939
        %v2064 = vpop.f32.mrb[0].mxu0
        %v2065 = vadd.f32 0.0, %v2064
        %v2066 = vpop.f32.mrb[0].mxu0
        %v2067 = vpop.f32.mrb[0].mxu0
        %v2068 = vadd.f32 0.0, %v2067
        %v2069 = vpop.f32.mrb[0].mxu0
        %2070 = vmatprep.mubr.bf16.mxu0 0
        %2071 = vmatmul.mubr.bf16.gmra.mrb[0].mxu0 %v1942
        %v2072 = vpop.f32.mrb[0].mxu0
        %v2073 = vadd.f32 0.0, %v2072
        %v2074 = vpop.f32.mrb[0].mxu0
        %v2075 = vpop.f32.mrb[0].mxu0
        %v2076 = vadd.f32 0.0, %v2075
        %v2077 = vpop.f32.mrb[0].mxu0
        %2078 = vmatprep.mubr.bf16.mxu0 0
        %2079 = vmatmul.mubr.bf16.gmra.mrb[0].mxu0 %v1945
        %v2080 = vpop.f32.mrb[0].mxu0
        %v2081 = vadd.f32 0.0, %v2080
        %v2082 = vpop.f32.mrb[0].mxu0
        %v2083 = vpop.f32.mrb[0].mxu0
        %v2084 = vadd.f32 0.0, %v2083
        %v2085 = vpop.f32.mrb[0].mxu0
        %2086 = vmatprep.mubr.bf16.mxu0 0
        %2087 = vmatmul.mubr.bf16.gmra.mrb[0].mxu0 %v1948
        %v2088 = vpop.f32.mrb[0].mxu0
        %v2089 = vadd.f32 0.0, %v2088
        %v2090 = vpop.f32.mrb[0].mxu0
        %v2091 = vpop.f32.mrb[0].mxu0
        %v2092 = vadd.f32 0.0, %v2091
        %v2093 = vpop.f32.mrb[0].mxu0
        %2094 = vmatprep.mubr.bf16.mxu0 0
        %2095 = vmatmul.mubr.bf16.gmra.mrb[0].mxu0 %v1951
        %v2096 = vpop.f32.mrb[0].mxu0
        %v2097 = vadd.f32 0.0, %v2096
        %v2098 = vpop.f32.mrb[0].mxu0
        %v2099 = vpop.f32.mrb[0].mxu0
        %v2100 = vadd.f32 0.0, %v2099
        %v2101 = vpop.f32.mrb[0].mxu0
        %2102 = vmatprep.mubr.bf16.mxu0 0
        %2103 = vmatmul.mubr.bf16.gmra.mrb[0].mxu0 %v1954
        %v2104 = vpop.f32.mrb[0].mxu0
        %v2105 = vadd.f32 0.0, %v2104
        %v2106 = vpop.f32.mrb[0].mxu0
        %v2107 = vpop.f32.mrb[0].mxu0
        %v2108 = vadd.f32 0.0, %v2107
        %v2109 = vpop.f32.mrb[0].mxu0
        %2110 = vmatprep.mubr.bf16.mxu0 0
        %2111 = vmatmul.mubr.bf16.gmra.mrb[0].mxu0 %v1957
        %v2112 = vpop.f32.mrb[0].mxu0
        %v2113 = vadd.f32 0.0, %v2112
        %v2114 = vpop.f32.mrb[0].mxu0
        %v2115 = vpop.f32.mrb[0].mxu0
        %v2116 = vadd.f32 0.0, %v2115
        %v2117 = vpop.f32.mrb[0].mxu0
        %2118 = vmatprep.mubr.bf16.mxu0 0
        %2119 = vmatmul.mubr.bf16.gmra.mrb[0].mxu0 %v1960
        %v2120 = vpop.f32.mrb[0].mxu0
        %v2121 = vadd.f32 0.0, %v2120
        %v2122 = vpop.f32.mrb[0].mxu0
        %v2123 = vpop.f32.mrb[0].mxu0
        %v2124 = vadd.f32 0.0, %v2123
        %v2125 = vpop.f32.mrb[0].mxu0
        %2126 = vdwg.mxu0
        %v2127 = vld [vmem:[%s2] sm:$0x1]
        %v2129 = vlaneseq
        %v2130 = vshrl.u32 %v2129, 7
        %v2131 = vsub.s32 0, %v2130
        %v2132 = vrot.slane %v2127, %v2131
        %v2134 = vmul.f32 %v2001, %v2132
        %v2135 = vmul.f32 %v2004, %v2132
        %v2136 = vmul.f32 %v2009, %v2132
        %v2137 = vmul.f32 %v2012, %v2132
        %v2138 = vmul.f32 %v2017, %v2132
        %v2139 = vmul.f32 %v2020, %v2132
        %v2140 = vmul.f32 %v2025, %v2132
        %v2141 = vmul.f32 %v2028, %v2132
        %v2142 = vmul.f32 %v2033, %v2132
        %v2143 = vmul.f32 %v2036, %v2132
        %v2144 = vmul.f32 %v2041, %v2132
        %v2145 = vmul.f32 %v2044, %v2132
        %v2146 = vmul.f32 %v2049, %v2132
        %v2147 = vmul.f32 %v2052, %v2132
        %v2148 = vmul.f32 %v2057, %v2132
        %v2149 = vmul.f32 %v2060, %v2132
        %v2150 = vmul.f32 %v2065, %v2132
        %v2151 = vmul.f32 %v2068, %v2132
        %v2152 = vmul.f32 %v2073, %v2132
        %v2153 = vmul.f32 %v2076, %v2132
        %v2154 = vmul.f32 %v2081, %v2132
        %v2155 = vmul.f32 %v2084, %v2132
        %v2156 = vmul.f32 %v2089, %v2132
        %v2157 = vmul.f32 %v2092, %v2132
        %v2158 = vmul.f32 %v2097, %v2132
        %v2159 = vmul.f32 %v2100, %v2132
        %v2160 = vmul.f32 %v2105, %v2132
        %v2161 = vmul.f32 %v2108, %v2132
        %v2162 = vmul.f32 %v2113, %v2132
        %v2163 = vmul.f32 %v2116, %v2132
        %v2164 = vmul.f32 %v2121, %v2132
        %v2165 = vmul.f32 %v2124, %v2132
        %v2166 = vld [vmem:[%s3] sm:$0x1]
        %v2168 = vlaneseq
        %v2169 = vshrl.u32 %v2168, 7
        %v2170 = vsub.s32 0, %v2169
        %v2171 = vrot.slane %v2166, %v2170
        %v2173 = vadd.f32 %v2134, %v2171
        %v2174 = vadd.f32 %v2135, %v2171
        %v2175 = vadd.f32 %v2136, %v2171
        %v2176 = vadd.f32 %v2137, %v2171
        %v2177 = vadd.f32 %v2138, %v2171
        %v2178 = vadd.f32 %v2139, %v2171
        %v2179 = vadd.f32 %v2140, %v2171
        %v2180 = vadd.f32 %v2141, %v2171
        %v2181 = vadd.f32 %v2142, %v2171
        %v2182 = vadd.f32 %v2143, %v2171
        %v2183 = vadd.f32 %v2144, %v2171
        %v2184 = vadd.f32 %v2145, %v2171
        %v2185 = vadd.f32 %v2146, %v2171
        %v2186 = vadd.f32 %v2147, %v2171
        %v2187 = vadd.f32 %v2148, %v2171
        %v2188 = vadd.f32 %v2149, %v2171
        %v2189 = vadd.f32 %v2150, %v2171
        %v2190 = vadd.f32 %v2151, %v2171
        %v2191 = vadd.f32 %v2152, %v2171
        %v2192 = vadd.f32 %v2153, %v2171
        %v2193 = vadd.f32 %v2154, %v2171
        %v2194 = vadd.f32 %v2155, %v2171
        %v2195 = vadd.f32 %v2156, %v2171
        %v2196 = vadd.f32 %v2157, %v2171
        %v2197 = vadd.f32 %v2158, %v2171
        %v2198 = vadd.f32 %v2159, %v2171
        %v2199 = vadd.f32 %v2160, %v2171
        %v2200 = vadd.f32 %v2161, %v2171
        %v2201 = vadd.f32 %v2162, %v2171
        %v2202 = vadd.f32 %v2163, %v2171
        %v2203 = vadd.f32 %v2164, %v2171
        %v2204 = vadd.f32 %v2165, %v2171
        %vm2205 = vcmp.ge.f32.partialorder %v2173, 0.0
        %vm2206 = vcmp.ge.f32.partialorder %v2174, 0.0
        %vm2207 = vcmp.ge.f32.partialorder %v2175, 0.0
        %vm2208 = vcmp.ge.f32.partialorder %v2176, 0.0
        %vm2209 = vcmp.ge.f32.partialorder %v2177, 0.0
        %vm2210 = vcmp.ge.f32.partialorder %v2178, 0.0
        %vm2211 = vcmp.ge.f32.partialorder %v2179, 0.0
        %vm2212 = vcmp.ge.f32.partialorder %v2180, 0.0
        %vm2213 = vcmp.ge.f32.partialorder %v2181, 0.0
        %vm2214 = vcmp.ge.f32.partialorder %v2182, 0.0
        %vm2215 = vcmp.ge.f32.partialorder %v2183, 0.0
        %vm2216 = vcmp.ge.f32.partialorder %v2184, 0.0
        %vm2217 = vcmp.ge.f32.partialorder %v2185, 0.0
        %vm2218 = vcmp.ge.f32.partialorder %v2186, 0.0
        %vm2219 = vcmp.ge.f32.partialorder %v2187, 0.0
        %vm2220 = vcmp.ge.f32.partialorder %v2188, 0.0
        %vm2221 = vcmp.ge.f32.partialorder %v2189, 0.0
        %vm2222 = vcmp.ge.f32.partialorder %v2190, 0.0
        %vm2223 = vcmp.ge.f32.partialorder %v2191, 0.0
        %vm2224 = vcmp.ge.f32.partialorder %v2192, 0.0
        %vm2225 = vcmp.ge.f32.partialorder %v2193, 0.0
        %vm2226 = vcmp.ge.f32.partialorder %v2194, 0.0
        %vm2227 = vcmp.ge.f32.partialorder %v2195, 0.0
        %vm2228 = vcmp.ge.f32.partialorder %v2196, 0.0
        %vm2229 = vcmp.ge.f32.partialorder %v2197, 0.0
        %vm2230 = vcmp.ge.f32.partialorder %v2198, 0.0
        %vm2231 = vcmp.ge.f32.partialorder %v2199, 0.0
        %vm2232 = vcmp.ge.f32.partialorder %v2200, 0.0
        %vm2233 = vcmp.ge.f32.partialorder %v2201, 0.0
        %vm2234 = vcmp.ge.f32.partialorder %v2202, 0.0
        %vm2235 = vcmp.ge.f32.partialorder %v2203, 0.0
        %vm2236 = vcmp.ge.f32.partialorder %v2204, 0.0
        %v2237 = vmul.f32 %v2173, 0.2
        %v2238 = vmul.f32 %v2174, 0.2
        %v2239 = vmul.f32 %v2175, 0.2
        %v2240 = vmul.f32 %v2176, 0.2
        %v2241 = vmul.f32 %v2177, 0.2
        %v2242 = vmul.f32 %v2178, 0.2
        %v2243 = vmul.f32 %v2179, 0.2
        %v2244 = vmul.f32 %v2180, 0.2
        %v2245 = vmul.f32 %v2181, 0.2
        %v2246 = vmul.f32 %v2182, 0.2
        %v2247 = vmul.f32 %v2183, 0.2
        %v2248 = vmul.f32 %v2184, 0.2
        %v2249 = vmul.f32 %v2185, 0.2
        %v2250 = vmul.f32 %v2186, 0.2
        %v2251 = vmul.f32 %v2187, 0.2
        %v2252 = vmul.f32 %v2188, 0.2
        %v2253 = vmul.f32 %v2189, 0.2
        %v2254 = vmul.f32 %v2190, 0.2
        %v2255 = vmul.f32 %v2191, 0.2
        %v2256 = vmul.f32 %v2192, 0.2
        %v2257 = vmul.f32 %v2193, 0.2
        %v2258 = vmul.f32 %v2194, 0.2
        %v2259 = vmul.f32 %v2195, 0.2
        %v2260 = vmul.f32 %v2196, 0.2
        %v2261 = vmul.f32 %v2197, 0.2
        %v2262 = vmul.f32 %v2198, 0.2
        %v2263 = vmul.f32 %v2199, 0.2
        %v2264 = vmul.f32 %v2200, 0.2
        %v2265 = vmul.f32 %v2201, 0.2
        %v2266 = vmul.f32 %v2202, 0.2
        %v2267 = vmul.f32 %v2203, 0.2
        %v2268 = vmul.f32 %v2204, 0.2
        %v2269 = vsel %vm2205, %v2173, %v2237
        %v2270 = vsel %vm2206, %v2174, %v2238
        %v2271 = vsel %vm2207, %v2175, %v2239
        %v2272 = vsel %vm2208, %v2176, %v2240
        %v2273 = vsel %vm2209, %v2177, %v2241
        %v2274 = vsel %vm2210, %v2178, %v2242
        %v2275 = vsel %vm2211, %v2179, %v2243
        %v2276 = vsel %vm2212, %v2180, %v2244
        %v2277 = vsel %vm2213, %v2181, %v2245
        %v2278 = vsel %vm2214, %v2182, %v2246
        %v2279 = vsel %vm2215, %v2183, %v2247
        %v2280 = vsel %vm2216, %v2184, %v2248
        %v2281 = vsel %vm2217, %v2185, %v2249
        %v2282 = vsel %vm2218, %v2186, %v2250
        %v2283 = vsel %vm2219, %v2187, %v2251
        %v2284 = vsel %vm2220, %v2188, %v2252
        %v2285 = vsel %vm2221, %v2189, %v2253
        %v2286 = vsel %vm2222, %v2190, %v2254
        %v2287 = vsel %vm2223, %v2191, %v2255
        %v2288 = vsel %vm2224, %v2192, %v2256
        %v2289 = vsel %vm2225, %v2193, %v2257
        %v2290 = vsel %vm2226, %v2194, %v2258
        %v2291 = vsel %vm2227, %v2195, %v2259
        %v2292 = vsel %vm2228, %v2196, %v2260
        %v2293 = vsel %vm2229, %v2197, %v2261
        %v2294 = vsel %vm2230, %v2198, %v2262
        %v2295 = vsel %vm2231, %v2199, %v2263
        %v2296 = vsel %vm2232, %v2200, %v2264
        %v2297 = vsel %vm2233, %v2201, %v2265
        %v2298 = vsel %vm2234, %v2202, %v2266
        %v2299 = vsel %vm2235, %v2203, %v2267
        %v2300 = vsel %vm2236, %v2204, %v2268
        %v2333 = vrot.slane %v2269, 7
        %v2334 = vrot.slane %v2270, 7
        %v2335 = vsel %vm505, %v2333, %v2334
        %v2336 = vrot.slane %v2271, 7
        %v2337 = vrot.slane %v2272, 7
        %v2338 = vsel %vm505, %v2336, %v2337
        %v2339 = vrot.slane %v2273, 7
        %v2340 = vrot.slane %v2274, 7
        %v2341 = vsel %vm505, %v2339, %v2340
        %v2342 = vrot.slane %v2275, 7
        %v2343 = vrot.slane %v2276, 7
        %v2344 = vsel %vm505, %v2342, %v2343
        %v2345 = vrot.slane %v2277, 7
        %v2346 = vrot.slane %v2278, 7
        %v2347 = vsel %vm505, %v2345, %v2346
        %v2348 = vrot.slane %v2279, 7
        %v2349 = vrot.slane %v2280, 7
        %v2350 = vsel %vm505, %v2348, %v2349
        %v2351 = vrot.slane %v2281, 7
        %v2352 = vrot.slane %v2282, 7
        %v2353 = vsel %vm505, %v2351, %v2352
        %v2354 = vrot.slane %v2283, 7
        %v2355 = vrot.slane %v2284, 7
        %v2356 = vsel %vm505, %v2354, %v2355
        %v2357 = vrot.slane %v2285, 7
        %v2358 = vrot.slane %v2286, 7
        %v2359 = vsel %vm505, %v2357, %v2358
        %v2360 = vrot.slane %v2287, 7
        %v2361 = vrot.slane %v2288, 7
        %v2362 = vsel %vm505, %v2360, %v2361
        %v2363 = vrot.slane %v2289, 7
        %v2364 = vrot.slane %v2290, 7
        %v2365 = vsel %vm505, %v2363, %v2364
        %v2366 = vrot.slane %v2291, 7
        %v2367 = vrot.slane %v2292, 7
        %v2368 = vsel %vm505, %v2366, %v2367
        %v2369 = vrot.slane %v2293, 7
        %v2370 = vrot.slane %v2294, 7
        %v2371 = vsel %vm505, %v2369, %v2370
        %v2372 = vrot.slane %v2295, 7
        %v2373 = vrot.slane %v2296, 7
        %v2374 = vsel %vm505, %v2372, %v2373
        %v2375 = vrot.slane %v2297, 7
        %v2376 = vrot.slane %v2298, 7
        %v2377 = vsel %vm505, %v2375, %v2376
        %v2378 = vrot.slane %v2299, 7
        %v2379 = vrot.slane %v2300, 7
        %v2380 = vsel %vm505, %v2378, %v2379
        %v2428 = vsel %vm505, 0.0, %v2333
        %v2429 = vsel %vm505, 0.0, %v2336
        %v2430 = vsel %vm505, 0.0, %v2339
        %v2431 = vsel %vm505, 0.0, %v2342
        %v2432 = vsel %vm505, 0.0, %v2345
        %v2433 = vsel %vm505, 0.0, %v2348
        %v2434 = vsel %vm505, 0.0, %v2351
        %v2435 = vsel %vm505, 0.0, %v2354
        %v2436 = vsel %vm505, 0.0, %v2357
        %v2437 = vsel %vm505, 0.0, %v2360
        %v2438 = vsel %vm505, 0.0, %v2363
        %v2439 = vsel %vm505, 0.0, %v2366
        %v2440 = vsel %vm505, 0.0, %v2369
        %v2441 = vsel %vm505, 0.0, %v2372
        %v2442 = vsel %vm505, 0.0, %v2375
        %v2443 = vsel %vm505, 0.0, %v2378
        %v2444 = vsel %vm505, %v2334, 0.0
        %v2445 = vsel %vm505, %v2337, 0.0
        %v2446 = vsel %vm505, %v2340, 0.0
        %v2447 = vsel %vm505, %v2343, 0.0
        %v2448 = vsel %vm505, %v2346, 0.0
        %v2449 = vsel %vm505, %v2349, 0.0
        %v2450 = vsel %vm505, %v2352, 0.0
        %v2451 = vsel %vm505, %v2355, 0.0
        %v2452 = vsel %vm505, %v2358, 0.0
        %v2453 = vsel %vm505, %v2361, 0.0
        %v2454 = vsel %vm505, %v2364, 0.0
        %v2455 = vsel %vm505, %v2367, 0.0
        %v2456 = vsel %vm505, %v2370, 0.0
        %v2457 = vsel %vm505, %v2373, 0.0
        %v2458 = vsel %vm505, %v2376, 0.0
        %v2459 = vsel %vm505, %v2379, 0.0
        %v2490 = vrot.slane %v2428, 1
        %v2491 = vrot.slane %v2335, 1
        %v2492 = vsel %vm671, %v2490, %v2491
        %v2493 = vrot.slane %v2444, 1
        %v2494 = vsel %vm671, %v2491, %v2493
        %v2495 = vrot.slane %v2429, 1
        %v2496 = vrot.slane %v2338, 1
        %v2497 = vsel %vm671, %v2495, %v2496
        %v2498 = vrot.slane %v2445, 1
        %v2499 = vsel %vm671, %v2496, %v2498
        %v2500 = vrot.slane %v2430, 1
        %v2501 = vrot.slane %v2341, 1
        %v2502 = vsel %vm671, %v2500, %v2501
        %v2503 = vrot.slane %v2446, 1
        %v2504 = vsel %vm671, %v2501, %v2503
        %v2505 = vrot.slane %v2431, 1
        %v2506 = vrot.slane %v2344, 1
        %v2507 = vsel %vm671, %v2505, %v2506
        %v2508 = vrot.slane %v2447, 1
        %v2509 = vsel %vm671, %v2506, %v2508
        %v2510 = vrot.slane %v2432, 1
        %v2511 = vrot.slane %v2347, 1
        %v2512 = vsel %vm671, %v2510, %v2511
        %v2513 = vrot.slane %v2448, 1
        %v2514 = vsel %vm671, %v2511, %v2513
        %v2515 = vrot.slane %v2433, 1
        %v2516 = vrot.slane %v2350, 1
        %v2517 = vsel %vm671, %v2515, %v2516
        %v2518 = vrot.slane %v2449, 1
        %v2519 = vsel %vm671, %v2516, %v2518
        %v2520 = vrot.slane %v2434, 1
        %v2521 = vrot.slane %v2353, 1
        %v2522 = vsel %vm671, %v2520, %v2521
        %v2523 = vrot.slane %v2450, 1
        %v2524 = vsel %vm671, %v2521, %v2523
        %v2525 = vrot.slane %v2435, 1
        %v2526 = vrot.slane %v2356, 1
        %v2527 = vsel %vm671, %v2525, %v2526
        %v2528 = vrot.slane %v2451, 1
        %v2529 = vsel %vm671, %v2526, %v2528
        %v2530 = vrot.slane %v2436, 1
        %v2531 = vrot.slane %v2359, 1
        %v2532 = vsel %vm671, %v2530, %v2531
        %v2533 = vrot.slane %v2452, 1
        %v2534 = vsel %vm671, %v2531, %v2533
        %v2535 = vrot.slane %v2437, 1
        %v2536 = vrot.slane %v2362, 1
        %v2537 = vsel %vm671, %v2535, %v2536
        %v2538 = vrot.slane %v2453, 1
        %v2539 = vsel %vm671, %v2536, %v2538
        %v2540 = vrot.slane %v2438, 1
        %v2541 = vrot.slane %v2365, 1
        %v2542 = vsel %vm671, %v2540, %v2541
        %v2543 = vrot.slane %v2454, 1
        %v2544 = vsel %vm671, %v2541, %v2543
        %v2545 = vrot.slane %v2439, 1
        %v2546 = vrot.slane %v2368, 1
        %v2547 = vsel %vm671, %v2545, %v2546
        %v2548 = vrot.slane %v2455, 1
        %v2549 = vsel %vm671, %v2546, %v2548
        %v2550 = vrot.slane %v2440, 1
        %v2551 = vrot.slane %v2371, 1
        %v2552 = vsel %vm671, %v2550, %v2551
        %v2553 = vrot.slane %v2456, 1
        %v2554 = vsel %vm671, %v2551, %v2553
        %v2555 = vrot.slane %v2441, 1
        %v2556 = vrot.slane %v2374, 1
        %v2557 = vsel %vm671, %v2555, %v2556
        %v2558 = vrot.slane %v2457, 1
        %v2559 = vsel %vm671, %v2556, %v2558
        %v2560 = vrot.slane %v2442, 1
        %v2561 = vrot.slane %v2377, 1
        %v2562 = vsel %vm671, %v2560, %v2561
        %v2563 = vrot.slane %v2458, 1
        %v2564 = vsel %vm671, %v2561, %v2563
        %2565 = vrot.lane.b32.xlu0 %v674, 32
        %v2566 = vpop.permute.xlu0 %2565
        %2567 = vrot.lane.b32.xlu0 %v676, 32
        %v2568 = vpop.permute.xlu0 %2567
        %2569 = vrot.lane.b32.xlu0 %v2492, 32
        %v2570 = vpop.permute.xlu0 %2569
        %2571 = vrot.lane.b32.xlu0 %v2494, 32
        %v2572 = vpop.permute.xlu0 %2571
        %2573 = vrot.lane.b32.xlu0 %v2497, 32
        %v2574 = vpop.permute.xlu0 %2573
        %2575 = vrot.lane.b32.xlu0 %v2499, 32
        %v2576 = vpop.permute.xlu0 %2575
        %2577 = vrot.lane.b32.xlu0 %v2502, 32
        %v2578 = vpop.permute.xlu0 %2577
        %2579 = vrot.lane.b32.xlu0 %v2504, 32
        %v2580 = vpop.permute.xlu0 %2579
        %2581 = vrot.lane.b32.xlu0 %v2507, 32
        %v2582 = vpop.permute.xlu0 %2581
        %2583 = vrot.lane.b32.xlu0 %v2509, 32
        %v2584 = vpop.permute.xlu0 %2583
        %2585 = vrot.lane.b32.xlu0 %v2512, 32
        %v2586 = vpop.permute.xlu0 %2585
        %2587 = vrot.lane.b32.xlu0 %v2514, 32
        %v2588 = vpop.permute.xlu0 %2587
        %2589 = vrot.lane.b32.xlu0 %v2517, 32
        %v2590 = vpop.permute.xlu0 %2589
        %2591 = vrot.lane.b32.xlu0 %v2519, 32
        %v2592 = vpop.permute.xlu0 %2591
        %2593 = vrot.lane.b32.xlu0 %v2522, 32
        %v2594 = vpop.permute.xlu0 %2593
        %2595 = vrot.lane.b32.xlu0 %v2524, 32
        %v2596 = vpop.permute.xlu0 %2595
        %2597 = vrot.lane.b32.xlu0 %v2527, 32
        %v2598 = vpop.permute.xlu0 %2597
        %2599 = vrot.lane.b32.xlu0 %v2529, 32
        %v2600 = vpop.permute.xlu0 %2599
        %2601 = vrot.lane.b32.xlu0 %v2532, 32
        %v2602 = vpop.permute.xlu0 %2601
        %2603 = vrot.lane.b32.xlu0 %v2534, 32
        %v2604 = vpop.permute.xlu0 %2603
        %2605 = vrot.lane.b32.xlu0 %v2537, 32
        %v2606 = vpop.permute.xlu0 %2605
        %2607 = vrot.lane.b32.xlu0 %v2539, 32
        %v2608 = vpop.permute.xlu0 %2607
        %2609 = vrot.lane.b32.xlu0 %v2542, 32
        %v2610 = vpop.permute.xlu0 %2609
        %2611 = vrot.lane.b32.xlu0 %v2544, 32
        %v2612 = vpop.permute.xlu0 %2611
        %2613 = vrot.lane.b32.xlu0 %v2547, 32
        %v2614 = vpop.permute.xlu0 %2613
        %2615 = vrot.lane.b32.xlu0 %v2549, 32
        %v2616 = vpop.permute.xlu0 %2615
        %2617 = vrot.lane.b32.xlu0 %v2552, 32
        %v2618 = vpop.permute.xlu0 %2617
        %2619 = vrot.lane.b32.xlu0 %v2554, 32
        %v2620 = vpop.permute.xlu0 %2619
        %2621 = vrot.lane.b32.xlu0 %v2557, 32
        %v2622 = vpop.permute.xlu0 %2621
        %2623 = vrot.lane.b32.xlu0 %v2559, 32
        %v2624 = vpop.permute.xlu0 %2623
        %2625 = vrot.lane.b32.xlu0 %v2562, 32
        %v2626 = vpop.permute.xlu0 %2625
        %2627 = vrot.lane.b32.xlu0 %v2564, 32
        %v2628 = vpop.permute.xlu0 %2627
        %v2661 = vrot.slane %v2428, 2
        %v2662 = vrot.slane %v2335, 2
        %v2663 = vsel %vm848, %v2661, %v2662
        %v2664 = vrot.slane %v2444, 2
        %v2665 = vsel %vm848, %v2662, %v2664
        %v2666 = vrot.slane %v2429, 2
        %v2667 = vrot.slane %v2338, 2
        %v2668 = vsel %vm848, %v2666, %v2667
        %v2669 = vrot.slane %v2445, 2
        %v2670 = vsel %vm848, %v2667, %v2669
        %v2671 = vrot.slane %v2430, 2
        %v2672 = vrot.slane %v2341, 2
        %v2673 = vsel %vm848, %v2671, %v2672
        %v2674 = vrot.slane %v2446, 2
        %v2675 = vsel %vm848, %v2672, %v2674
        %v2676 = vrot.slane %v2431, 2
        %v2677 = vrot.slane %v2344, 2
        %v2678 = vsel %vm848, %v2676, %v2677
        %v2679 = vrot.slane %v2447, 2
        %v2680 = vsel %vm848, %v2677, %v2679
        %v2681 = vrot.slane %v2432, 2
        %v2682 = vrot.slane %v2347, 2
        %v2683 = vsel %vm848, %v2681, %v2682
        %v2684 = vrot.slane %v2448, 2
        %v2685 = vsel %vm848, %v2682, %v2684
        %v2686 = vrot.slane %v2433, 2
        %v2687 = vrot.slane %v2350, 2
        %v2688 = vsel %vm848, %v2686, %v2687
        %v2689 = vrot.slane %v2449, 2
        %v2690 = vsel %vm848, %v2687, %v2689
        %v2691 = vrot.slane %v2434, 2
        %v2692 = vrot.slane %v2353, 2
        %v2693 = vsel %vm848, %v2691, %v2692
        %v2694 = vrot.slane %v2450, 2
        %v2695 = vsel %vm848, %v2692, %v2694
        %v2696 = vrot.slane %v2435, 2
        %v2697 = vrot.slane %v2356, 2
        %v2698 = vsel %vm848, %v2696, %v2697
        %v2699 = vrot.slane %v2451, 2
        %v2700 = vsel %vm848, %v2697, %v2699
        %v2701 = vrot.slane %v2436, 2
        %v2702 = vrot.slane %v2359, 2
        %v2703 = vsel %vm848, %v2701, %v2702
        %v2704 = vrot.slane %v2452, 2
        %v2705 = vsel %vm848, %v2702, %v2704
        %v2706 = vrot.slane %v2437, 2
        %v2707 = vrot.slane %v2362, 2
        %v2708 = vsel %vm848, %v2706, %v2707
        %v2709 = vrot.slane %v2453, 2
        %v2710 = vsel %vm848, %v2707, %v2709
        %v2711 = vrot.slane %v2438, 2
        %v2712 = vrot.slane %v2365, 2
        %v2713 = vsel %vm848, %v2711, %v2712
        %v2714 = vrot.slane %v2454, 2
        %v2715 = vsel %vm848, %v2712, %v2714
        %v2716 = vrot.slane %v2439, 2
        %v2717 = vrot.slane %v2368, 2
        %v2718 = vsel %vm848, %v2716, %v2717
        %v2719 = vrot.slane %v2455, 2
        %v2720 = vsel %vm848, %v2717, %v2719
        %v2721 = vrot.slane %v2440, 2
        %v2722 = vrot.slane %v2371, 2
        %v2723 = vsel %vm848, %v2721, %v2722
        %v2724 = vrot.slane %v2456, 2
        %v2725 = vsel %vm848, %v2722, %v2724
        %v2726 = vrot.slane %v2441, 2
        %v2727 = vrot.slane %v2374, 2
        %v2728 = vsel %vm848, %v2726, %v2727
        %v2729 = vrot.slane %v2457, 2
        %v2730 = vsel %vm848, %v2727, %v2729
        %v2731 = vrot.slane %v2442, 2
        %v2732 = vrot.slane %v2377, 2
        %v2733 = vsel %vm848, %v2731, %v2732
        %v2734 = vrot.slane %v2458, 2
        %v2735 = vsel %vm848, %v2732, %v2734
        %2736 = vrot.lane.b32.xlu0 %v851, 64
        %v2737 = vpop.permute.xlu0 %2736
        %2738 = vrot.lane.b32.xlu0 %v853, 64
        %v2739 = vpop.permute.xlu0 %2738
        %2740 = vrot.lane.b32.xlu0 %v2663, 64
        %v2741 = vpop.permute.xlu0 %2740
        %2742 = vrot.lane.b32.xlu0 %v2665, 64
        %v2743 = vpop.permute.xlu0 %2742
        %2744 = vrot.lane.b32.xlu0 %v2668, 64
        %v2745 = vpop.permute.xlu0 %2744
        %2746 = vrot.lane.b32.xlu0 %v2670, 64
        %v2747 = vpop.permute.xlu0 %2746
        %2748 = vrot.lane.b32.xlu0 %v2673, 64
        %v2749 = vpop.permute.xlu0 %2748
        %2750 = vrot.lane.b32.xlu0 %v2675, 64
        %v2751 = vpop.permute.xlu0 %2750
        %2752 = vrot.lane.b32.xlu0 %v2678, 64
        %v2753 = vpop.permute.xlu0 %2752
        %2754 = vrot.lane.b32.xlu0 %v2680, 64
        %v2755 = vpop.permute.xlu0 %2754
        %2756 = vrot.lane.b32.xlu0 %v2683, 64
        %v2757 = vpop.permute.xlu0 %2756
        %2758 = vrot.lane.b32.xlu0 %v2685, 64
        %v2759 = vpop.permute.xlu0 %2758
        %2760 = vrot.lane.b32.xlu0 %v2688, 64
        %v2761 = vpop.permute.xlu0 %2760
        %2762 = vrot.lane.b32.xlu0 %v2690, 64
        %v2763 = vpop.permute.xlu0 %2762
        %2764 = vrot.lane.b32.xlu0 %v2693, 64
        %v2765 = vpop.permute.xlu0 %2764
        %2766 = vrot.lane.b32.xlu0 %v2695, 64
        %v2767 = vpop.permute.xlu0 %2766
        %2768 = vrot.lane.b32.xlu0 %v2698, 64
        %v2769 = vpop.permute.xlu0 %2768
        %2770 = vrot.lane.b32.xlu0 %v2700, 64
        %v2771 = vpop.permute.xlu0 %2770
        %2772 = vrot.lane.b32.xlu0 %v2703, 64
        %v2773 = vpop.permute.xlu0 %2772
        %2774 = vrot.lane.b32.xlu0 %v2705, 64
        %v2775 = vpop.permute.xlu0 %2774
        %2776 = vrot.lane.b32.xlu0 %v2708, 64
        %v2777 = vpop.permute.xlu0 %2776
        %2778 = vrot.lane.b32.xlu0 %v2710, 64
        %v2779 = vpop.permute.xlu0 %2778
        %2780 = vrot.lane.b32.xlu0 %v2713, 64
        %v2781 = vpop.permute.xlu0 %2780
        %2782 = vrot.lane.b32.xlu0 %v2715, 64
        %v2783 = vpop.permute.xlu0 %2782
        %2784 = vrot.lane.b32.xlu0 %v2718, 64
        %v2785 = vpop.permute.xlu0 %2784
        %2786 = vrot.lane.b32.xlu0 %v2720, 64
        %v2787 = vpop.permute.xlu0 %2786
        %2788 = vrot.lane.b32.xlu0 %v2723, 64
        %v2789 = vpop.permute.xlu0 %2788
        %2790 = vrot.lane.b32.xlu0 %v2725, 64
        %v2791 = vpop.permute.xlu0 %2790
        %2792 = vrot.lane.b32.xlu0 %v2728, 64
        %v2793 = vpop.permute.xlu0 %2792
        %2794 = vrot.lane.b32.xlu0 %v2730, 64
        %v2795 = vpop.permute.xlu0 %2794
        %2796 = vrot.lane.b32.xlu0 %v2733, 64
        %v2797 = vpop.permute.xlu0 %2796
        %2798 = vrot.lane.b32.xlu0 %v2735, 64
        %v2799 = vpop.permute.xlu0 %2798
        %2833 = vrot.lane.b32.xlu0 %v2428, 96
        %v2834 = vpop.permute.xlu0 %2833
        %2835 = vrot.lane.b32.xlu0 %v2335, 96
        %v2836 = vpop.permute.xlu0 %2835
        %2837 = vrot.lane.b32.xlu0 %v2429, 96
        %v2838 = vpop.permute.xlu0 %2837
        %2839 = vrot.lane.b32.xlu0 %v2338, 96
        %v2840 = vpop.permute.xlu0 %2839
        %2841 = vrot.lane.b32.xlu0 %v2430, 96
        %v2842 = vpop.permute.xlu0 %2841
        %2843 = vrot.lane.b32.xlu0 %v2341, 96
        %v2844 = vpop.permute.xlu0 %2843
        %2845 = vrot.lane.b32.xlu0 %v2431, 96
        %v2846 = vpop.permute.xlu0 %2845
        %2847 = vrot.lane.b32.xlu0 %v2344, 96
        %v2848 = vpop.permute.xlu0 %2847
        %2849 = vrot.lane.b32.xlu0 %v2432, 96
        %v2850 = vpop.permute.xlu0 %2849
        %2851 = vrot.lane.b32.xlu0 %v2347, 96
        %v2852 = vpop.permute.xlu0 %2851
        %2853 = vrot.lane.b32.xlu0 %v2433, 96
        %v2854 = vpop.permute.xlu0 %2853
        %2855 = vrot.lane.b32.xlu0 %v2350, 96
        %v2856 = vpop.permute.xlu0 %2855
        %2857 = vrot.lane.b32.xlu0 %v2434, 96
        %v2858 = vpop.permute.xlu0 %2857
        %2859 = vrot.lane.b32.xlu0 %v2353, 96
        %v2860 = vpop.permute.xlu0 %2859
        %2861 = vrot.lane.b32.xlu0 %v2435, 96
        %v2862 = vpop.permute.xlu0 %2861
        %2863 = vrot.lane.b32.xlu0 %v2356, 96
        %v2864 = vpop.permute.xlu0 %2863
        %2865 = vrot.lane.b32.xlu0 %v2436, 96
        %v2866 = vpop.permute.xlu0 %2865
        %2867 = vrot.lane.b32.xlu0 %v2359, 96
        %v2868 = vpop.permute.xlu0 %2867
        %2869 = vrot.lane.b32.xlu0 %v2437, 96
        %v2870 = vpop.permute.xlu0 %2869
        %2871 = vrot.lane.b32.xlu0 %v2362, 96
        %v2872 = vpop.permute.xlu0 %2871
        %2873 = vrot.lane.b32.xlu0 %v2438, 96
        %v2874 = vpop.permute.xlu0 %2873
        %2875 = vrot.lane.b32.xlu0 %v2365, 96
        %v2876 = vpop.permute.xlu0 %2875
        %2877 = vrot.lane.b32.xlu0 %v2439, 96
        %v2878 = vpop.permute.xlu0 %2877
        %2879 = vrot.lane.b32.xlu0 %v2368, 96
        %v2880 = vpop.permute.xlu0 %2879
        %2881 = vrot.lane.b32.xlu0 %v2440, 96
        %v2882 = vpop.permute.xlu0 %2881
        %2883 = vrot.lane.b32.xlu0 %v2371, 96
        %v2884 = vpop.permute.xlu0 %2883
        %2885 = vrot.lane.b32.xlu0 %v2441, 96
        %v2886 = vpop.permute.xlu0 %2885
        %2887 = vrot.lane.b32.xlu0 %v2374, 96
        %v2888 = vpop.permute.xlu0 %2887
        %2889 = vrot.lane.b32.xlu0 %v2442, 96
        %v2890 = vpop.permute.xlu0 %2889
        %2891 = vrot.lane.b32.xlu0 %v2377, 96
        %v2892 = vpop.permute.xlu0 %2891
        %2893 = vrot.lane.b32.xlu0 %v2443, 96
        %v2894 = vpop.permute.xlu0 %2893
        %2895 = vrot.lane.b32.xlu0 %v2380, 96
        %v2896 = vpop.permute.xlu0 %2895
        %v2930 = vrot.slane %v2443, 1
        %v2931 = vrot.slane %v2380, 1
        %v2932 = vsel %vm671, %v2930, %v2931
        %v2933 = vrot.slane %v2459, 1
        %v2934 = vsel %vm671, %v2931, %v2933
        %v2967 = vrot.slane %v2443, 2
        %v2968 = vrot.slane %v2380, 2
        %v2969 = vsel %vm848, %v2967, %v2968
        %v2970 = vrot.slane %v2459, 2
        %v2971 = vsel %vm848, %v2968, %v2970
        %2972 = vrot.lane.b32.xlu0 %v2663, 32
        %v2973 = vpop.permute.xlu0 %2972
        %2974 = vrot.lane.b32.xlu0 %v2665, 32
        %v2975 = vpop.permute.xlu0 %2974
        %2976 = vrot.lane.b32.xlu0 %v2668, 32
        %v2977 = vpop.permute.xlu0 %2976
        %2978 = vrot.lane.b32.xlu0 %v2670, 32
        %v2979 = vpop.permute.xlu0 %2978
        %2980 = vrot.lane.b32.xlu0 %v2673, 32
        %v2981 = vpop.permute.xlu0 %2980
        %2982 = vrot.lane.b32.xlu0 %v2675, 32
        %v2983 = vpop.permute.xlu0 %2982
        %2984 = vrot.lane.b32.xlu0 %v2678, 32
        %v2985 = vpop.permute.xlu0 %2984
        %2986 = vrot.lane.b32.xlu0 %v2680, 32
        %v2987 = vpop.permute.xlu0 %2986
        %2988 = vrot.lane.b32.xlu0 %v2683, 32
        %v2989 = vpop.permute.xlu0 %2988
        %2990 = vrot.lane.b32.xlu0 %v2685, 32
        %v2991 = vpop.permute.xlu0 %2990
        %2992 = vrot.lane.b32.xlu0 %v2688, 32
        %v2993 = vpop.permute.xlu0 %2992
        %2994 = vrot.lane.b32.xlu0 %v2690, 32
        %v2995 = vpop.permute.xlu0 %2994
        %2996 = vrot.lane.b32.xlu0 %v2693, 32
        %v2997 = vpop.permute.xlu0 %2996
        %2998 = vrot.lane.b32.xlu0 %v2695, 32
        %v2999 = vpop.permute.xlu0 %2998
        %3000 = vrot.lane.b32.xlu0 %v2698, 32
        %v3001 = vpop.permute.xlu0 %3000
        %3002 = vrot.lane.b32.xlu0 %v2700, 32
        %v3003 = vpop.permute.xlu0 %3002
        %3004 = vrot.lane.b32.xlu0 %v2703, 32
        %v3005 = vpop.permute.xlu0 %3004
        %3006 = vrot.lane.b32.xlu0 %v2705, 32
        %v3007 = vpop.permute.xlu0 %3006
        %3008 = vrot.lane.b32.xlu0 %v2708, 32
        %v3009 = vpop.permute.xlu0 %3008
        %3010 = vrot.lane.b32.xlu0 %v2710, 32
        %v3011 = vpop.permute.xlu0 %3010
        %3012 = vrot.lane.b32.xlu0 %v2713, 32
        %v3013 = vpop.permute.xlu0 %3012
        %3014 = vrot.lane.b32.xlu0 %v2715, 32
        %v3015 = vpop.permute.xlu0 %3014
        %3016 = vrot.lane.b32.xlu0 %v2718, 32
        %v3017 = vpop.permute.xlu0 %3016
        %3018 = vrot.lane.b32.xlu0 %v2720, 32
        %v3019 = vpop.permute.xlu0 %3018
        %3020 = vrot.lane.b32.xlu0 %v2723, 32
        %v3021 = vpop.permute.xlu0 %3020
        %3022 = vrot.lane.b32.xlu0 %v2725, 32
        %v3023 = vpop.permute.xlu0 %3022
        %3024 = vrot.lane.b32.xlu0 %v2728, 32
        %v3025 = vpop.permute.xlu0 %3024
        %3026 = vrot.lane.b32.xlu0 %v2730, 32
        %v3027 = vpop.permute.xlu0 %3026
        %3028 = vrot.lane.b32.xlu0 %v2733, 32
        %v3029 = vpop.permute.xlu0 %3028
        %3030 = vrot.lane.b32.xlu0 %v2735, 32
        %v3031 = vpop.permute.xlu0 %3030
        %3032 = vrot.lane.b32.xlu0 %v2969, 32
        %v3033 = vpop.permute.xlu0 %3032
        %3034 = vrot.lane.b32.xlu0 %v2971, 32
        %v3035 = vpop.permute.xlu0 %3034
        %3068 = vrot.lane.b32.xlu0 %v2429, 64
        %v3069 = vpop.permute.xlu0 %3068
        %3070 = vrot.lane.b32.xlu0 %v2338, 64
        %v3071 = vpop.permute.xlu0 %3070
        %3072 = vrot.lane.b32.xlu0 %v2430, 64
        %v3073 = vpop.permute.xlu0 %3072
        %3074 = vrot.lane.b32.xlu0 %v2341, 64
        %v3075 = vpop.permute.xlu0 %3074
        %3076 = vrot.lane.b32.xlu0 %v2431, 64
        %v3077 = vpop.permute.xlu0 %3076
        %3078 = vrot.lane.b32.xlu0 %v2344, 64
        %v3079 = vpop.permute.xlu0 %3078
        %3080 = vrot.lane.b32.xlu0 %v2432, 64
        %v3081 = vpop.permute.xlu0 %3080
        %3082 = vrot.lane.b32.xlu0 %v2347, 64
        %v3083 = vpop.permute.xlu0 %3082
        %3084 = vrot.lane.b32.xlu0 %v2433, 64
        %v3085 = vpop.permute.xlu0 %3084
        %3086 = vrot.lane.b32.xlu0 %v2350, 64
        %v3087 = vpop.permute.xlu0 %3086
        %3088 = vrot.lane.b32.xlu0 %v2434, 64
        %v3089 = vpop.permute.xlu0 %3088
        %3090 = vrot.lane.b32.xlu0 %v2353, 64
        %v3091 = vpop.permute.xlu0 %3090
        %3092 = vrot.lane.b32.xlu0 %v2435, 64
        %v3093 = vpop.permute.xlu0 %3092
        %3094 = vrot.lane.b32.xlu0 %v2356, 64
        %v3095 = vpop.permute.xlu0 %3094
        %3096 = vrot.lane.b32.xlu0 %v2436, 64
        %v3097 = vpop.permute.xlu0 %3096
        %3098 = vrot.lane.b32.xlu0 %v2359, 64
        %v3099 = vpop.permute.xlu0 %3098
        %3100 = vrot.lane.b32.xlu0 %v2437, 64
        %v3101 = vpop.permute.xlu0 %3100
        %3102 = vrot.lane.b32.xlu0 %v2362, 64
        %v3103 = vpop.permute.xlu0 %3102
        %3104 = vrot.lane.b32.xlu0 %v2438, 64
        %v3105 = vpop.permute.xlu0 %3104
        %3106 = vrot.lane.b32.xlu0 %v2365, 64
        %v3107 = vpop.permute.xlu0 %3106
        %3108 = vrot.lane.b32.xlu0 %v2439, 64
        %v3109 = vpop.permute.xlu0 %3108
        %3110 = vrot.lane.b32.xlu0 %v2368, 64
        %v3111 = vpop.permute.xlu0 %3110
        %3112 = vrot.lane.b32.xlu0 %v2440, 64
        %v3113 = vpop.permute.xlu0 %3112
        %3114 = vrot.lane.b32.xlu0 %v2371, 64
        %v3115 = vpop.permute.xlu0 %3114
        %3116 = vrot.lane.b32.xlu0 %v2441, 64
        %v3117 = vpop.permute.xlu0 %3116
        %3118 = vrot.lane.b32.xlu0 %v2374, 64
        %v3119 = vpop.permute.xlu0 %3118
        %3120 = vrot.lane.b32.xlu0 %v2442, 64
        %v3121 = vpop.permute.xlu0 %3120
        %3122 = vrot.lane.b32.xlu0 %v2377, 64
        %v3123 = vpop.permute.xlu0 %3122
        %3124 = vrot.lane.b32.xlu0 %v2443, 64
        %v3125 = vpop.permute.xlu0 %3124
        %3126 = vrot.lane.b32.xlu0 %v2380, 64
        %v3127 = vpop.permute.xlu0 %3126
        %3128 = vrot.lane.b32.xlu0 %v605, 64
        %v3129 = vpop.permute.xlu0 %3128
        %3130 = vrot.lane.b32.xlu0 %v507, 64
        %v3131 = vpop.permute.xlu0 %3130
        %3164 = vrot.lane.b32.xlu0 %v2497, 96
        %v3165 = vpop.permute.xlu0 %3164
        %3166 = vrot.lane.b32.xlu0 %v2499, 96
        %v3167 = vpop.permute.xlu0 %3166
        %3168 = vrot.lane.b32.xlu0 %v2502, 96
        %v3169 = vpop.permute.xlu0 %3168
        %3170 = vrot.lane.b32.xlu0 %v2504, 96
        %v3171 = vpop.permute.xlu0 %3170
        %3172 = vrot.lane.b32.xlu0 %v2507, 96
        %v3173 = vpop.permute.xlu0 %3172
        %3174 = vrot.lane.b32.xlu0 %v2509, 96
        %v3175 = vpop.permute.xlu0 %3174
        %3176 = vrot.lane.b32.xlu0 %v2512, 96
        %v3177 = vpop.permute.xlu0 %3176
        %3178 = vrot.lane.b32.xlu0 %v2514, 96
        %v3179 = vpop.permute.xlu0 %3178
        %3180 = vrot.lane.b32.xlu0 %v2517, 96
        %v3181 = vpop.permute.xlu0 %3180
        %3182 = vrot.lane.b32.xlu0 %v2519, 96
        %v3183 = vpop.permute.xlu0 %3182
        %3184 = vrot.lane.b32.xlu0 %v2522, 96
        %v3185 = vpop.permute.xlu0 %3184
        %3186 = vrot.lane.b32.xlu0 %v2524, 96
        %v3187 = vpop.permute.xlu0 %3186
        %3188 = vrot.lane.b32.xlu0 %v2527, 96
        %v3189 = vpop.permute.xlu0 %3188
        %3190 = vrot.lane.b32.xlu0 %v2529, 96
        %v3191 = vpop.permute.xlu0 %3190
        %3192 = vrot.lane.b32.xlu0 %v2532, 96
        %v3193 = vpop.permute.xlu0 %3192
        %3194 = vrot.lane.b32.xlu0 %v2534, 96
        %v3195 = vpop.permute.xlu0 %3194
        %3196 = vrot.lane.b32.xlu0 %v2537, 96
        %v3197 = vpop.permute.xlu0 %3196
        %3198 = vrot.lane.b32.xlu0 %v2539, 96
        %v3199 = vpop.permute.xlu0 %3198
        %3200 = vrot.lane.b32.xlu0 %v2542, 96
        %v3201 = vpop.permute.xlu0 %3200
        %3202 = vrot.lane.b32.xlu0 %v2544, 96
        %v3203 = vpop.permute.xlu0 %3202
        %3204 = vrot.lane.b32.xlu0 %v2547, 96
        %v3205 = vpop.permute.xlu0 %3204
        %3206 = vrot.lane.b32.xlu0 %v2549, 96
        %v3207 = vpop.permute.xlu0 %3206
        %3208 = vrot.lane.b32.xlu0 %v2552, 96
        %v3209 = vpop.permute.xlu0 %3208
        %3210 = vrot.lane.b32.xlu0 %v2554, 96
        %v3211 = vpop.permute.xlu0 %3210
        %3212 = vrot.lane.b32.xlu0 %v2557, 96
        %v3213 = vpop.permute.xlu0 %3212
        %3214 = vrot.lane.b32.xlu0 %v2559, 96
        %v3215 = vpop.permute.xlu0 %3214
        %3216 = vrot.lane.b32.xlu0 %v2562, 96
        %v3217 = vpop.permute.xlu0 %3216
        %3218 = vrot.lane.b32.xlu0 %v2564, 96
        %v3219 = vpop.permute.xlu0 %3218
        %3220 = vrot.lane.b32.xlu0 %v2932, 96
        %v3221 = vpop.permute.xlu0 %3220
        %3222 = vrot.lane.b32.xlu0 %v2934, 96
        %v3223 = vpop.permute.xlu0 %3222
        %3224 = vrot.lane.b32.xlu0 %v674, 96
        %v3225 = vpop.permute.xlu0 %3224
        %3226 = vrot.lane.b32.xlu0 %v676, 96
        %v3227 = vpop.permute.xlu0 %3226
        %v3292 = vsel %vm1844, %v605, %v2566
        %v3293 = vsel %vm1844, %v507, %v2568
        %v3294 = vsel %vm1844, %v2428, %v2570
        %v3295 = vsel %vm1844, %v2335, %v2572
        %v3296 = vsel %vm1844, %v2429, %v2574
        %v3297 = vsel %vm1844, %v2338, %v2576
        %v3298 = vsel %vm1844, %v2430, %v2578
        %v3299 = vsel %vm1844, %v2341, %v2580
        %v3300 = vsel %vm1844, %v2431, %v2582
        %v3301 = vsel %vm1844, %v2344, %v2584
        %v3302 = vsel %vm1844, %v2432, %v2586
        %v3303 = vsel %vm1844, %v2347, %v2588
        %v3304 = vsel %vm1844, %v2433, %v2590
        %v3305 = vsel %vm1844, %v2350, %v2592
        %v3306 = vsel %vm1844, %v2434, %v2594
        %v3307 = vsel %vm1844, %v2353, %v2596
        %v3308 = vsel %vm1844, %v2435, %v2598
        %v3309 = vsel %vm1844, %v2356, %v2600
        %v3310 = vsel %vm1844, %v2436, %v2602
        %v3311 = vsel %vm1844, %v2359, %v2604
        %v3312 = vsel %vm1844, %v2437, %v2606
        %v3313 = vsel %vm1844, %v2362, %v2608
        %v3314 = vsel %vm1844, %v2438, %v2610
        %v3315 = vsel %vm1844, %v2365, %v2612
        %v3316 = vsel %vm1844, %v2439, %v2614
        %v3317 = vsel %vm1844, %v2368, %v2616
        %v3318 = vsel %vm1844, %v2440, %v2618
        %v3319 = vsel %vm1844, %v2371, %v2620
        %v3320 = vsel %vm1844, %v2441, %v2622
        %v3321 = vsel %vm1844, %v2374, %v2624
        %v3322 = vsel %vm1844, %v2442, %v2626
        %v3323 = vsel %vm1844, %v2377, %v2628
        %vm3324 = vcmask 523264
        %v3325 = vsel %vm3324, %v3292, %v2737
        %v3326 = vsel %vm3324, %v3293, %v2739
        %v3327 = vsel %vm3324, %v3294, %v2741
        %v3328 = vsel %vm3324, %v3295, %v2743
        %v3329 = vsel %vm3324, %v3296, %v2745
        %v3330 = vsel %vm3324, %v3297, %v2747
        %v3331 = vsel %vm3324, %v3298, %v2749
        %v3332 = vsel %vm3324, %v3299, %v2751
        %v3333 = vsel %vm3324, %v3300, %v2753
        %v3334 = vsel %vm3324, %v3301, %v2755
        %v3335 = vsel %vm3324, %v3302, %v2757
        %v3336 = vsel %vm3324, %v3303, %v2759
        %v3337 = vsel %vm3324, %v3304, %v2761
        %v3338 = vsel %vm3324, %v3305, %v2763
        %v3339 = vsel %vm3324, %v3306, %v2765
        %v3340 = vsel %vm3324, %v3307, %v2767
        %v3341 = vsel %vm3324, %v3308, %v2769
        %v3342 = vsel %vm3324, %v3309, %v2771
        %v3343 = vsel %vm3324, %v3310, %v2773
        %v3344 = vsel %vm3324, %v3311, %v2775
        %v3345 = vsel %vm3324, %v3312, %v2777
        %v3346 = vsel %vm3324, %v3313, %v2779
        %v3347 = vsel %vm3324, %v3314, %v2781
        %v3348 = vsel %vm3324, %v3315, %v2783
        %v3349 = vsel %vm3324, %v3316, %v2785
        %v3350 = vsel %vm3324, %v3317, %v2787
        %v3351 = vsel %vm3324, %v3318, %v2789
        %v3352 = vsel %vm3324, %v3319, %v2791
        %v3353 = vsel %vm3324, %v3320, %v2793
        %v3354 = vsel %vm3324, %v3321, %v2795
        %v3355 = vsel %vm3324, %v3322, %v2797
        %v3356 = vsel %vm3324, %v3323, %v2799
        %vm3357 = vcmask 785408
        %v3358 = vsel %vm3357, %v3325, %v2834
        %v3359 = vsel %vm3357, %v3326, %v2836
        %v3360 = vsel %vm3357, %v3327, %v2838
        %v3361 = vsel %vm3357, %v3328, %v2840
        %v3362 = vsel %vm3357, %v3329, %v2842
        %v3363 = vsel %vm3357, %v3330, %v2844
        %v3364 = vsel %vm3357, %v3331, %v2846
        %v3365 = vsel %vm3357, %v3332, %v2848
        %v3366 = vsel %vm3357, %v3333, %v2850
        %v3367 = vsel %vm3357, %v3334, %v2852
        %v3368 = vsel %vm3357, %v3335, %v2854
        %v3369 = vsel %vm3357, %v3336, %v2856
        %v3370 = vsel %vm3357, %v3337, %v2858
        %v3371 = vsel %vm3357, %v3338, %v2860
        %v3372 = vsel %vm3357, %v3339, %v2862
        %v3373 = vsel %vm3357, %v3340, %v2864
        %v3374 = vsel %vm3357, %v3341, %v2866
        %v3375 = vsel %vm3357, %v3342, %v2868
        %v3376 = vsel %vm3357, %v3343, %v2870
        %v3377 = vsel %vm3357, %v3344, %v2872
        %v3378 = vsel %vm3357, %v3345, %v2874
        %v3379 = vsel %vm3357, %v3346, %v2876
        %v3380 = vsel %vm3357, %v3347, %v2878
        %v3381 = vsel %vm3357, %v3348, %v2880
        %v3382 = vsel %vm3357, %v3349, %v2882
        %v3383 = vsel %vm3357, %v3350, %v2884
        %v3384 = vsel %vm3357, %v3351, %v2886
        %v3385 = vsel %vm3357, %v3352, %v2888
        %v3386 = vsel %vm3357, %v3353, %v2890
        %v3387 = vsel %vm3357, %v3354, %v2892
        %v3388 = vsel %vm3357, %v3355, %v2894
        %v3389 = vsel %vm3357, %v3356, %v2896
        %v3390 = vsel %vm1844, %v2492, %v2973
        %v3391 = vsel %vm1844, %v2494, %v2975
        %v3392 = vsel %vm1844, %v2497, %v2977
        %v3393 = vsel %vm1844, %v2499, %v2979
        %v3394 = vsel %vm1844, %v2502, %v2981
        %v3395 = vsel %vm1844, %v2504, %v2983
        %v3396 = vsel %vm1844, %v2507, %v2985
        %v3397 = vsel %vm1844, %v2509, %v2987
        %v3398 = vsel %vm1844, %v2512, %v2989
        %v3399 = vsel %vm1844, %v2514, %v2991
        %v3400 = vsel %vm1844, %v2517, %v2993
        %v3401 = vsel %vm1844, %v2519, %v2995
        %v3402 = vsel %vm1844, %v2522, %v2997
        %v3403 = vsel %vm1844, %v2524, %v2999
        %v3404 = vsel %vm1844, %v2527, %v3001
        %v3405 = vsel %vm1844, %v2529, %v3003
        %v3406 = vsel %vm1844, %v2532, %v3005
        %v3407 = vsel %vm1844, %v2534, %v3007
        %v3408 = vsel %vm1844, %v2537, %v3009
        %v3409 = vsel %vm1844, %v2539, %v3011
        %v3410 = vsel %vm1844, %v2542, %v3013
        %v3411 = vsel %vm1844, %v2544, %v3015
        %v3412 = vsel %vm1844, %v2547, %v3017
        %v3413 = vsel %vm1844, %v2549, %v3019
        %v3414 = vsel %vm1844, %v2552, %v3021
        %v3415 = vsel %vm1844, %v2554, %v3023
        %v3416 = vsel %vm1844, %v2557, %v3025
        %v3417 = vsel %vm1844, %v2559, %v3027
        %v3418 = vsel %vm1844, %v2562, %v3029
        %v3419 = vsel %vm1844, %v2564, %v3031
        %v3420 = vsel %vm1844, %v2932, %v3033
        %v3421 = vsel %vm1844, %v2934, %v3035
        %v3422 = vsel %vm3324, %v3390, %v3069
        %v3423 = vsel %vm3324, %v3391, %v3071
        %v3424 = vsel %vm3324, %v3392, %v3073
        %v3425 = vsel %vm3324, %v3393, %v3075
        %v3426 = vsel %vm3324, %v3394, %v3077
        %v3427 = vsel %vm3324, %v3395, %v3079
        %v3428 = vsel %vm3324, %v3396, %v3081
        %v3429 = vsel %vm3324, %v3397, %v3083
        %v3430 = vsel %vm3324, %v3398, %v3085
        %v3431 = vsel %vm3324, %v3399, %v3087
        %v3432 = vsel %vm3324, %v3400, %v3089
        %v3433 = vsel %vm3324, %v3401, %v3091
        %v3434 = vsel %vm3324, %v3402, %v3093
        %v3435 = vsel %vm3324, %v3403, %v3095
        %v3436 = vsel %vm3324, %v3404, %v3097
        %v3437 = vsel %vm3324, %v3405, %v3099
        %v3438 = vsel %vm3324, %v3406, %v3101
        %v3439 = vsel %vm3324, %v3407, %v3103
        %v3440 = vsel %vm3324, %v3408, %v3105
        %v3441 = vsel %vm3324, %v3409, %v3107
        %v3442 = vsel %vm3324, %v3410, %v3109
        %v3443 = vsel %vm3324, %v3411, %v3111
        %v3444 = vsel %vm3324, %v3412, %v3113
        %v3445 = vsel %vm3324, %v3413, %v3115
        %v3446 = vsel %vm3324, %v3414, %v3117
        %v3447 = vsel %vm3324, %v3415, %v3119
        %v3448 = vsel %vm3324, %v3416, %v3121
        %v3449 = vsel %vm3324, %v3417, %v3123
        %v3450 = vsel %vm3324, %v3418, %v3125
        %v3451 = vsel %vm3324, %v3419, %v3127
        %v3452 = vsel %vm3324, %v3420, %v3129
        %v3453 = vsel %vm3324, %v3421, %v3131
        %v3454 = vsel %vm3357, %v3422, %v3165
        %v3455 = vsel %vm3357, %v3423, %v3167
        %v3456 = vsel %vm3357, %v3424, %v3169
        %v3457 = vsel %vm3357, %v3425, %v3171
        %v3458 = vsel %vm3357, %v3426, %v3173
        %v3459 = vsel %vm3357, %v3427, %v3175
        %v3460 = vsel %vm3357, %v3428, %v3177
        %v3461 = vsel %vm3357, %v3429, %v3179
        %v3462 = vsel %vm3357, %v3430, %v3181
        %v3463 = vsel %vm3357, %v3431, %v3183
        %v3464 = vsel %vm3357, %v3432, %v3185
        %v3465 = vsel %vm3357, %v3433, %v3187
        %v3466 = vsel %vm3357, %v3434, %v3189
        %v3467 = vsel %vm3357, %v3435, %v3191
        %v3468 = vsel %vm3357, %v3436, %v3193
        %v3469 = vsel %vm3357, %v3437, %v3195
        %v3470 = vsel %vm3357, %v3438, %v3197
        %v3471 = vsel %vm3357, %v3439, %v3199
        %v3472 = vsel %vm3357, %v3440, %v3201
        %v3473 = vsel %vm3357, %v3441, %v3203
        %v3474 = vsel %vm3357, %v3442, %v3205
        %v3475 = vsel %vm3357, %v3443, %v3207
        %v3476 = vsel %vm3357, %v3444, %v3209
        %v3477 = vsel %vm3357, %v3445, %v3211
        %v3478 = vsel %vm3357, %v3446, %v3213
        %v3479 = vsel %vm3357, %v3447, %v3215
        %v3480 = vsel %vm3357, %v3448, %v3217
        %v3481 = vsel %vm3357, %v3449, %v3219
        %v3482 = vsel %vm3357, %v3450, %v3221
        %v3483 = vsel %vm3357, %v3451, %v3223
        %v3484 = vsel %vm3357, %v3452, %v3225
        %v3485 = vsel %vm3357, %v3453, %v3227
        %v3486 = vpack.c.bf16 %v3359, %v3358
        %v3487 = vpack.c.bf16 %v3455, %v3454
        %v3488 = vpack.c.bf16 %v2670, %v2668
        %v3489 = vpack.c.bf16 %v3361, %v3360
        %v3490 = vpack.c.bf16 %v3457, %v3456
        %v3491 = vpack.c.bf16 %v2675, %v2673
        %v3492 = vpack.c.bf16 %v3363, %v3362
        %v3493 = vpack.c.bf16 %v3459, %v3458
        %v3494 = vpack.c.bf16 %v2680, %v2678
        %v3495 = vpack.c.bf16 %v3365, %v3364
        %v3496 = vpack.c.bf16 %v3461, %v3460
        %v3497 = vpack.c.bf16 %v2685, %v2683
        %v3498 = vpack.c.bf16 %v3367, %v3366
        %v3499 = vpack.c.bf16 %v3463, %v3462
        %v3500 = vpack.c.bf16 %v2690, %v2688
        %v3501 = vpack.c.bf16 %v3369, %v3368
        %v3502 = vpack.c.bf16 %v3465, %v3464
        %v3503 = vpack.c.bf16 %v2695, %v2693
        %v3504 = vpack.c.bf16 %v3371, %v3370
        %v3505 = vpack.c.bf16 %v3467, %v3466
        %v3506 = vpack.c.bf16 %v2700, %v2698
        %v3507 = vpack.c.bf16 %v3373, %v3372
        %v3508 = vpack.c.bf16 %v3469, %v3468
        %v3509 = vpack.c.bf16 %v2705, %v2703
        %v3510 = vpack.c.bf16 %v3375, %v3374
        %v3511 = vpack.c.bf16 %v3471, %v3470
        %v3512 = vpack.c.bf16 %v2710, %v2708
        %v3513 = vpack.c.bf16 %v3377, %v3376
        %v3514 = vpack.c.bf16 %v3473, %v3472
        %v3515 = vpack.c.bf16 %v2715, %v2713
        %v3516 = vpack.c.bf16 %v3379, %v3378
        %v3517 = vpack.c.bf16 %v3475, %v3474
        %v3518 = vpack.c.bf16 %v2720, %v2718
        %v3519 = vpack.c.bf16 %v3381, %v3380
        %v3520 = vpack.c.bf16 %v3477, %v3476
        %v3521 = vpack.c.bf16 %v2725, %v2723
        %v3522 = vpack.c.bf16 %v3383, %v3382
        %v3523 = vpack.c.bf16 %v3479, %v3478
        %v3524 = vpack.c.bf16 %v2730, %v2728
        %v3525 = vpack.c.bf16 %v3385, %v3384
        %v3526 = vpack.c.bf16 %v3481, %v3480
        %v3527 = vpack.c.bf16 %v2735, %v2733
        %v3528 = vpack.c.bf16 %v3387, %v3386
        %v3529 = vpack.c.bf16 %v3483, %v3482
        %v3530 = vpack.c.bf16 %v2971, %v2969
        %v3531 = vpack.c.bf16 %v3389, %v3388
        %v3532 = vpack.c.bf16 %v3485, %v3484
        %v3533 = vpack.c.bf16 %v853, %v851
        %v3534 = vld [vmem:[%s4] sm:$0xf]
        %v3535 = vld [vmem:[%s4 + $0x4] sm:$0xf]
        %v3536 = vld [vmem:[%s4 + $0x8] sm:$0xf]
        %v3537 = vld [vmem:[%s4 + $0xc] sm:$0xf]
        %v3538 = vld [vmem:[%s4 + $0x10] sm:$0xf]
        %v3539 = vld [vmem:[%s4 + $0x14] sm:$0xf]
        %v3540 = vld [vmem:[%s4 + $0x18] sm:$0xf]
        %v3541 = vld [vmem:[%s4 + $0x1c] sm:$0xf]
        %v3542 = vld [vmem:[%s4 + $0x20] sm:$0xf]
        %v3543 = vld [vmem:[%s4 + $0x24] sm:$0xf]
        %v3544 = vld [vmem:[%s4 + $0x28] sm:$0xf]
        %v3545 = vld [vmem:[%s4 + $0x2c] sm:$0xf]
        %v3546 = vld [vmem:[%s4 + $0x30] sm:$0xf]
        %v3547 = vld [vmem:[%s4 + $0x34] sm:$0xf]
        %v3548 = vld [vmem:[%s4 + $0x38] sm:$0xf]
        %v3549 = vld [vmem:[%s4 + $0x3c] sm:$0xf]
        %v3550 = vld [vmem:[%s4 + $0x40] sm:$0xf]
        %v3551 = vld [vmem:[%s4 + $0x44] sm:$0xf]
        %v3552 = vld [vmem:[%s4 + $0x48] sm:$0xf]
        %v3553 = vld [vmem:[%s4 + $0x4c] sm:$0xf]
        %v3554 = vld [vmem:[%s4 + $0x50] sm:$0xf]
        %v3555 = vld [vmem:[%s4 + $0x54] sm:$0xf]
        %v3556 = vld [vmem:[%s4 + $0x58] sm:$0xf]
        %v3557 = vld [vmem:[%s4 + $0x5c] sm:$0xf]
        %v3558 = vld [vmem:[%s4 + $0x60] sm:$0xf]
        %v3559 = vld [vmem:[%s4 + $0x64] sm:$0xf]
        %v3560 = vld [vmem:[%s4 + $0x68] sm:$0xf]
        %v3561 = vld [vmem:[%s4 + $0x6c] sm:$0xf]
        %v3562 = vld [vmem:[%s4 + $0x70] sm:$0xf]
        %v3563 = vld [vmem:[%s4 + $0x74] sm:$0xf]
        %v3564 = vld [vmem:[%s4 + $0x78] sm:$0xf]
        %v3565 = vld [vmem:[%s4 + $0x7c] sm:$0xf]
        %v3566 = vld [vmem:[%s4 + $0x80] sm:$0xf]
        %v3567 = vld [vmem:[%s4 + $0x84] sm:$0xf]
        %v3568 = vld [vmem:[%s4 + $0x88] sm:$0xf]
        %v3569 = vld [vmem:[%s4 + $0x8c] sm:$0xf]
        %v3606 = vunpack.c.l.b16 %v3534
        %v3607 = vunpack.c.l.b16 %v3535
        %v3608 = vunpack.c.l.b16 %v3536
        %v3609 = vunpack.c.l.b16 %v3537
        %v3610 = vunpack.c.l.b16 %v3538
        %v3611 = vunpack.c.l.b16 %v3539
        %v3612 = vunpack.c.l.b16 %v3540
        %v3613 = vunpack.c.l.b16 %v3541
        %v3614 = vunpack.c.l.b16 %v3542
        %v3615 = vunpack.c.l.b16 %v3543
        %v3616 = vunpack.c.l.b16 %v3544
        %v3617 = vunpack.c.l.b16 %v3545
        %v3618 = vunpack.c.l.b16 %v3546
        %v3619 = vunpack.c.l.b16 %v3547
        %v3620 = vunpack.c.l.b16 %v3548
        %v3621 = vunpack.c.l.b16 %v3549
        %v3622 = vunpack.c.l.b16 %v3550
        %v3623 = vunpack.c.l.b16 %v3551
        %v3624 = vunpack.c.l.b16 %v3552
        %v3625 = vunpack.c.l.b16 %v3553
        %v3626 = vunpack.c.l.b16 %v3554
        %v3627 = vunpack.c.l.b16 %v3555
        %v3628 = vunpack.c.l.b16 %v3556
        %v3629 = vunpack.c.l.b16 %v3557
        %v3630 = vunpack.c.l.b16 %v3558
        %v3631 = vunpack.c.l.b16 %v3559
        %v3632 = vunpack.c.l.b16 %v3560
        %v3633 = vunpack.c.l.b16 %v3561
        %v3634 = vunpack.c.l.b16 %v3562
        %v3635 = vunpack.c.l.b16 %v3563
        %v3636 = vunpack.c.l.b16 %v3564
        %v3637 = vunpack.c.l.b16 %v3565
        %v3638 = vunpack.c.l.b16 %v3566
        %v3639 = vunpack.c.l.b16 %v3567
        %v3640 = vunpack.c.l.b16 %v3568
        %v3641 = vunpack.c.l.b16 %v3569
        %v3642 = vpack.c.b16 %v3607, %v3606
        %v3643 = vpack.c.b16 %v3609, %v3608
        %v3644 = vpack.c.b16 %v3611, %v3610
        %v3645 = vpack.c.b16 %v3613, %v3612
        %v3646 = vpack.c.b16 %v3615, %v3614
        %v3647 = vpack.c.b16 %v3617, %v3616
        %v3648 = vpack.c.b16 %v3619, %v3618
        %v3649 = vpack.c.b16 %v3621, %v3620
        %v3650 = vpack.c.b16 %v3623, %v3622
        %v3651 = vpack.c.b16 %v3625, %v3624
        %v3652 = vpack.c.b16 %v3627, %v3626
        %v3653 = vpack.c.b16 %v3629, %v3628
        %v3654 = vpack.c.b16 %v3631, %v3630
        %v3655 = vpack.c.b16 %v3633, %v3632
        %v3656 = vpack.c.b16 %v3635, %v3634
        %v3657 = vpack.c.b16 %v3637, %v3636
        %v3658 = vpack.c.b16 %v3639, %v3638
        %v3659 = vpack.c.b16 %v3641, %v3640
        %v3679 = vsel %vm1844, %v3488, 0
        %v3682 = vsel %vm1844, %v3491, 0
        %v3685 = vsel %vm1844, %v3494, 0
        %v3688 = vsel %vm1844, %v3497, 0
        %v3691 = vsel %vm1844, %v3500, 0
        %v3694 = vsel %vm1844, %v3503, 0
        %v3697 = vsel %vm1844, %v3506, 0
        %v3700 = vsel %vm1844, %v3509, 0
        %v3703 = vsel %vm1844, %v3512, 0
        %v3706 = vsel %vm1844, %v3515, 0
        %v3709 = vsel %vm1844, %v3518, 0
        %v3712 = vsel %vm1844, %v3521, 0
        %v3715 = vsel %vm1844, %v3524, 0
        %v3718 = vsel %vm1844, %v3527, 0
        %v3721 = vsel %vm1844, %v3530, 0
        %v3724 = vsel %vm1844, %v3533, 0
        %3726 = vmatprep.subr.bf16.mxu0 0
        %3727 = vmatpush1.bf16.msra.mxu0 %v3642
        %3728 = vmatprep.subr.bf16.mxu0 0
        %3729 = vmatpush1.bf16.msra.mxu0 %v3643
        %3730 = vmatprep.subr.bf16.mxu0 0
        %3731 = vmatpush1.bf16.msra.mxu0 %v3644
        %3732 = vmatprep.subr.bf16.mxu0 0
        %3733 = vmatpush1.bf16.msra.mxu0 %v3645
        %3734 = vmatprep.subr.bf16.mxu0 0
        %3735 = vmatpush1.bf16.msra.mxu0 %v3646
        %3736 = vmatprep.subr.bf16.mxu0 0
        %3737 = vmatpush1.bf16.msra.mxu0 %v3647
        %3738 = vmatprep.subr.bf16.mxu0 0
        %3739 = vmatpush1.bf16.msra.mxu0 %v3648
        %3740 = vmatprep.subr.bf16.mxu0 0
        %3741 = vmatpush1.bf16.msra.mxu0 %v3649
        %3742 = vmatprep.subr.bf16.mxu0 0
        %3743 = vmatpush1.bf16.msra.mxu0 %v3650
        %3744 = vmatprep.subr.bf16.mxu0 0
        %3745 = vmatpush1.bf16.msra.mxu0 %v3651
        %3746 = vmatprep.subr.bf16.mxu0 0
        %3747 = vmatpush1.bf16.msra.mxu0 %v3652
        %3748 = vmatprep.subr.bf16.mxu0 0
        %3749 = vmatpush1.bf16.msra.mxu0 %v3653
        %3750 = vmatprep.subr.bf16.mxu0 0
        %3751 = vmatpush1.bf16.msra.mxu0 %v3654
        %3752 = vmatprep.subr.bf16.mxu0 0
        %3753 = vmatpush1.bf16.msra.mxu0 %v3655
        %3754 = vmatprep.subr.bf16.mxu0 0
        %3755 = vmatpush1.bf16.msra.mxu0 %v3656
        %3756 = vmatprep.subr.bf16.mxu0 0
        %3757 = vmatpush1.bf16.msra.mxu0 %v3657
        %3758 = vmatprep.mubr.bf16.mxu0 %v3487
        %3759 = vmatmul.mubr.bf16.gmra.mrb[0].mxu0 %v3486
        %v3760 = vpop.f32.mrb[0].mxu0
        %v3761 = vadd.f32 0.0, %v3760
        %v3762 = vpop.f32.mrb[0].mxu0
        %v3763 = vpop.f32.mrb[0].mxu0
        %v3764 = vadd.f32 0.0, %v3763
        %v3765 = vpop.f32.mrb[0].mxu0
        %3766 = vmatprep.mubr.bf16.mxu0 %v3490
        %3767 = vmatmul.mubr.bf16.gmra.mrb[0].mxu0 %v3489
        %v3768 = vpop.f32.mrb[0].mxu0
        %v3769 = vadd.f32 0.0, %v3768
        %v3770 = vpop.f32.mrb[0].mxu0
        %v3771 = vpop.f32.mrb[0].mxu0
        %v3772 = vadd.f32 0.0, %v3771
        %v3773 = vpop.f32.mrb[0].mxu0
        %3774 = vmatprep.mubr.bf16.mxu0 %v3493
        %3775 = vmatmul.mubr.bf16.gmra.mrb[0].mxu0 %v3492
        %v3776 = vpop.f32.mrb[0].mxu0
        %v3777 = vadd.f32 0.0, %v3776
        %v3778 = vpop.f32.mrb[0].mxu0
        %v3779 = vpop.f32.mrb[0].mxu0
        %v3780 = vadd.f32 0.0, %v3779
        %v3781 = vpop.f32.mrb[0].mxu0
        %3782 = vmatprep.mubr.bf16.mxu0 %v3496
        %3783 = vmatmul.mubr.bf16.gmra.mrb[0].mxu0 %v3495
        %v3784 = vpop.f32.mrb[0].mxu0
        %v3785 = vadd.f32 0.0, %v3784
        %v3786 = vpop.f32.mrb[0].mxu0
        %v3787 = vpop.f32.mrb[0].mxu0
        %v3788 = vadd.f32 0.0, %v3787
        %v3789 = vpop.f32.mrb[0].mxu0
        %3790 = vmatprep.mubr.bf16.mxu0 %v3499
        %3791 = vmatmul.mubr.bf16.gmra.mrb[0].mxu0 %v3498
        %v3792 = vpop.f32.mrb[0].mxu0
        %v3793 = vadd.f32 0.0, %v3792
        %v3794 = vpop.f32.mrb[0].mxu0
        %v3795 = vpop.f32.mrb[0].mxu0
        %v3796 = vadd.f32 0.0, %v3795
        %v3797 = vpop.f32.mrb[0].mxu0
        %3798 = vmatprep.mubr.bf16.mxu0 %v3502
        %3799 = vmatmul.mubr.bf16.gmra.mrb[0].mxu0 %v3501
        %v3800 = vpop.f32.mrb[0].mxu0
        %v3801 = vadd.f32 0.0, %v3800
        %v3802 = vpop.f32.mrb[0].mxu0
        %v3803 = vpop.f32.mrb[0].mxu0
        %v3804 = vadd.f32 0.0, %v3803
        %v3805 = vpop.f32.mrb[0].mxu0
        %3806 = vmatprep.mubr.bf16.mxu0 %v3505
        %3807 = vmatmul.mubr.bf16.gmra.mrb[0].mxu0 %v3504
        %v3808 = vpop.f32.mrb[0].mxu0
        %v3809 = vadd.f32 0.0, %v3808
        %v3810 = vpop.f32.mrb[0].mxu0
        %v3811 = vpop.f32.mrb[0].mxu0
        %v3812 = vadd.f32 0.0, %v3811
        %v3813 = vpop.f32.mrb[0].mxu0
        %3814 = vmatprep.mubr.bf16.mxu0 %v3508
        %3815 = vmatmul.mubr.bf16.gmra.mrb[0].mxu0 %v3507
        %v3816 = vpop.f32.mrb[0].mxu0
        %v3817 = vadd.f32 0.0, %v3816
        %v3818 = vpop.f32.mrb[0].mxu0
        %v3819 = vpop.f32.mrb[0].mxu0
        %v3820 = vadd.f32 0.0, %v3819
        %v3821 = vpop.f32.mrb[0].mxu0
        %3822 = vmatprep.mubr.bf16.mxu0 %v3511
        %3823 = vmatmul.mubr.bf16.gmra.mrb[0].mxu0 %v3510
        %v3824 = vpop.f32.mrb[0].mxu0
        %v3825 = vadd.f32 0.0, %v3824
        %v3826 = vpop.f32.mrb[0].mxu0
        %v3827 = vpop.f32.mrb[0].mxu0
        %v3828 = vadd.f32 0.0, %v3827
        %v3829 = vpop.f32.mrb[0].mxu0
        %3830 = vmatprep.mubr.bf16.mxu0 %v3514
        %3831 = vmatmul.mubr.bf16.gmra.mrb[0].mxu0 %v3513
        %v3832 = vpop.f32.mrb[0].mxu0
        %v3833 = vadd.f32 0.0, %v3832
        %v3834 = vpop.f32.mrb[0].mxu0
        %v3835 = vpop.f32.mrb[0].mxu0
        %v3836 = vadd.f32 0.0, %v3835
        %v3837 = vpop.f32.mrb[0].mxu0
        %3838 = vmatprep.mubr.bf16.mxu0 %v3517
        %3839 = vmatmul.mubr.bf16.gmra.mrb[0].mxu0 %v3516
        %v3840 = vpop.f32.mrb[0].mxu0
        %v3841 = vadd.f32 0.0, %v3840
        %v3842 = vpop.f32.mrb[0].mxu0
        %v3843 = vpop.f32.mrb[0].mxu0
        %v3844 = vadd.f32 0.0, %v3843
        %v3845 = vpop.f32.mrb[0].mxu0
        %3846 = vmatprep.mubr.bf16.mxu0 %v3520
        %3847 = vmatmul.mubr.bf16.gmra.mrb[0].mxu0 %v3519
        %v3848 = vpop.f32.mrb[0].mxu0
        %v3849 = vadd.f32 0.0, %v3848
        %v3850 = vpop.f32.mrb[0].mxu0
        %v3851 = vpop.f32.mrb[0].mxu0
        %v3852 = vadd.f32 0.0, %v3851
        %v3853 = vpop.f32.mrb[0].mxu0
        %3854 = vmatprep.mubr.bf16.mxu0 %v3523
        %3855 = vmatmul.mubr.bf16.gmra.mrb[0].mxu0 %v3522
        %v3856 = vpop.f32.mrb[0].mxu0
        %v3857 = vadd.f32 0.0, %v3856
        %v3858 = vpop.f32.mrb[0].mxu0
        %v3859 = vpop.f32.mrb[0].mxu0
        %v3860 = vadd.f32 0.0, %v3859
        %v3861 = vpop.f32.mrb[0].mxu0
        %3862 = vmatprep.mubr.bf16.mxu0 %v3526
        %3863 = vmatmul.mubr.bf16.gmra.mrb[0].mxu0 %v3525
        %v3864 = vpop.f32.mrb[0].mxu0
        %v3865 = vadd.f32 0.0, %v3864
        %v3866 = vpop.f32.mrb[0].mxu0
        %v3867 = vpop.f32.mrb[0].mxu0
        %v3868 = vadd.f32 0.0, %v3867
        %v3869 = vpop.f32.mrb[0].mxu0
        %3870 = vmatprep.mubr.bf16.mxu0 %v3529
        %3871 = vmatmul.mubr.bf16.gmra.mrb[0].mxu0 %v3528
        %v3872 = vpop.f32.mrb[0].mxu0
        %v3873 = vadd.f32 0.0, %v3872
        %v3874 = vpop.f32.mrb[0].mxu0
        %v3875 = vpop.f32.mrb[0].mxu0
        %v3876 = vadd.f32 0.0, %v3875
        %v3877 = vpop.f32.mrb[0].mxu0
        %3878 = vmatprep.mubr.bf16.mxu0 %v3532
        %3879 = vmatmul.mubr.bf16.gmra.mrb[0].mxu0 %v3531
        %v3880 = vpop.f32.mrb[0].mxu0
        %v3881 = vadd.f32 0.0, %v3880
        %v3882 = vpop.f32.mrb[0].mxu0
        %v3883 = vpop.f32.mrb[0].mxu0
        %v3884 = vadd.f32 0.0, %v3883
        %v3885 = vpop.f32.mrb[0].mxu0
        %3886 = vdwg.mxu0
        %3887 = vmatprep.subr.bf16.mxu0 0
        %3888 = vmatpush1.bf16.msra.mxu0 %v3658
        %3889 = vmatprep.subr.bf16.mxu0 0
        %3890 = vmatpush1.bf16.msra.mxu0 %v3659
        %3891 = vmatprep.subr.bf16.mxu0 0
        %3892 = vmatpush1.bf16.msra.mxu0 0
        %3893 = vmatprep.subr.bf16.mxu0 0
        %3894 = vmatpush1.bf16.msra.mxu0 0
        %3895 = vmatprep.subr.bf16.mxu0 0
        %3896 = vmatpush1.bf16.msra.mxu0 0
        %3897 = vmatprep.subr.bf16.mxu0 0
        %3898 = vmatpush1.bf16.msra.mxu0 0
        %3899 = vmatprep.subr.bf16.mxu0 0
        %3900 = vmatpush1.bf16.msra.mxu0 0
        %3901 = vmatprep.subr.bf16.mxu0 0
        %3902 = vmatpush1.bf16.msra.mxu0 0
        %3903 = vmatprep.subr.bf16.mxu0 0
        %3904 = vmatpush1.bf16.msra.mxu0 0
        %3905 = vmatprep.subr.bf16.mxu0 0
        %3906 = vmatpush1.bf16.msra.mxu0 0
        %3907 = vmatprep.subr.bf16.mxu0 0
        %3908 = vmatpush1.bf16.msra.mxu0 0
        %3909 = vmatprep.subr.bf16.mxu0 0
        %3910 = vmatpush1.bf16.msra.mxu0 0
        %3911 = vmatprep.subr.bf16.mxu0 0
        %3912 = vmatpush1.bf16.msra.mxu0 0
        %3913 = vmatprep.subr.bf16.mxu0 0
        %3914 = vmatpush1.bf16.msra.mxu0 0
        %3915 = vmatprep.subr.bf16.mxu0 0
        %3916 = vmatpush1.bf16.msra.mxu0 0
        %3917 = vmatprep.subr.bf16.mxu0 0
        %3918 = vmatpush1.bf16.msra.mxu0 0
        %3919 = vmatprep.mubr.bf16.mxu0 0
        %3920 = vmatmul.mubr.bf16.gmra.mrb[0].mxu0 %v3679
        %v3921 = vpop.f32.mrb[0].mxu0
        %v3922 = vadd.f32 %v3761, %v3921
        %v3923 = vpop.f32.mrb[0].mxu0
        %v3924 = vpop.f32.mrb[0].mxu0
        %v3925 = vadd.f32 %v3764, %v3924
        %v3926 = vpop.f32.mrb[0].mxu0
        %3927 = vmatprep.mubr.bf16.mxu0 0
        %3928 = vmatmul.mubr.bf16.gmra.mrb[0].mxu0 %v3682
        %v3929 = vpop.f32.mrb[0].mxu0
        %v3930 = vadd.f32 %v3769, %v3929
        %v3931 = vpop.f32.mrb[0].mxu0
        %v3932 = vpop.f32.mrb[0].mxu0
        %v3933 = vadd.f32 %v3772, %v3932
        %v3934 = vpop.f32.mrb[0].mxu0
        %3935 = vmatprep.mubr.bf16.mxu0 0
        %3936 = vmatmul.mubr.bf16.gmra.mrb[0].mxu0 %v3685
        %v3937 = vpop.f32.mrb[0].mxu0
        %v3938 = vadd.f32 %v3777, %v3937
        %v3939 = vpop.f32.mrb[0].mxu0
        %v3940 = vpop.f32.mrb[0].mxu0
        %v3941 = vadd.f32 %v3780, %v3940
        %v3942 = vpop.f32.mrb[0].mxu0
        %3943 = vmatprep.mubr.bf16.mxu0 0
        %3944 = vmatmul.mubr.bf16.gmra.mrb[0].mxu0 %v3688
        %v3945 = vpop.f32.mrb[0].mxu0
        %v3946 = vadd.f32 %v3785, %v3945
        %v3947 = vpop.f32.mrb[0].mxu0
        %v3948 = vpop.f32.mrb[0].mxu0
        %v3949 = vadd.f32 %v3788, %v3948
        %v3950 = vpop.f32.mrb[0].mxu0
        %3951 = vmatprep.mubr.bf16.mxu0 0
        %3952 = vmatmul.mubr.bf16.gmra.mrb[0].mxu0 %v3691
        %v3953 = vpop.f32.mrb[0].mxu0
        %v3954 = vadd.f32 %v3793, %v3953
        %v3955 = vpop.f32.mrb[0].mxu0
        %v3956 = vpop.f32.mrb[0].mxu0
        %v3957 = vadd.f32 %v3796, %v3956
        %v3958 = vpop.f32.mrb[0].mxu0
        %3959 = vmatprep.mubr.bf16.mxu0 0
        %3960 = vmatmul.mubr.bf16.gmra.mrb[0].mxu0 %v3694
        %v3961 = vpop.f32.mrb[0].mxu0
        %v3962 = vadd.f32 %v3801, %v3961
        %v3963 = vpop.f32.mrb[0].mxu0
        %v3964 = vpop.f32.mrb[0].mxu0
        %v3965 = vadd.f32 %v3804, %v3964
        %v3966 = vpop.f32.mrb[0].mxu0
        %3967 = vmatprep.mubr.bf16.mxu0 0
        %3968 = vmatmul.mubr.bf16.gmra.mrb[0].mxu0 %v3697
        %v3969 = vpop.f32.mrb[0].mxu0
        %v3970 = vadd.f32 %v3809, %v3969
        %v3971 = vpop.f32.mrb[0].mxu0
        %v3972 = vpop.f32.mrb[0].mxu0
        %v3973 = vadd.f32 %v3812, %v3972
        %v3974 = vpop.f32.mrb[0].mxu0
        %3975 = vmatprep.mubr.bf16.mxu0 0
        %3976 = vmatmul.mubr.bf16.gmra.mrb[0].mxu0 %v3700
        %v3977 = vpop.f32.mrb[0].mxu0
        %v3978 = vadd.f32 %v3817, %v3977
        %v3979 = vpop.f32.mrb[0].mxu0
        %v3980 = vpop.f32.mrb[0].mxu0
        %v3981 = vadd.f32 %v3820, %v3980
        %v3982 = vpop.f32.mrb[0].mxu0
        %3983 = vmatprep.mubr.bf16.mxu0 0
        %3984 = vmatmul.mubr.bf16.gmra.mrb[0].mxu0 %v3703
        %v3985 = vpop.f32.mrb[0].mxu0
        %v3986 = vadd.f32 %v3825, %v3985
        %v3987 = vpop.f32.mrb[0].mxu0
        %v3988 = vpop.f32.mrb[0].mxu0
        %v3989 = vadd.f32 %v3828, %v3988
        %v3990 = vpop.f32.mrb[0].mxu0
        %3991 = vmatprep.mubr.bf16.mxu0 0
        %3992 = vmatmul.mubr.bf16.gmra.mrb[0].mxu0 %v3706
        %v3993 = vpop.f32.mrb[0].mxu0
        %v3994 = vadd.f32 %v3833, %v3993
        %v3995 = vpop.f32.mrb[0].mxu0
        %v3996 = vpop.f32.mrb[0].mxu0
        %v3997 = vadd.f32 %v3836, %v3996
        %v3998 = vpop.f32.mrb[0].mxu0
        %3999 = vmatprep.mubr.bf16.mxu0 0
        %4000 = vmatmul.mubr.bf16.gmra.mrb[0].mxu0 %v3709
        %v4001 = vpop.f32.mrb[0].mxu0
        %v4002 = vadd.f32 %v3841, %v4001
        %v4003 = vpop.f32.mrb[0].mxu0
        %v4004 = vpop.f32.mrb[0].mxu0
        %v4005 = vadd.f32 %v3844, %v4004
        %v4006 = vpop.f32.mrb[0].mxu0
        %4007 = vmatprep.mubr.bf16.mxu0 0
        %4008 = vmatmul.mubr.bf16.gmra.mrb[0].mxu0 %v3712
        %v4009 = vpop.f32.mrb[0].mxu0
        %v4010 = vadd.f32 %v3849, %v4009
        %v4011 = vpop.f32.mrb[0].mxu0
        %v4012 = vpop.f32.mrb[0].mxu0
        %v4013 = vadd.f32 %v3852, %v4012
        %v4014 = vpop.f32.mrb[0].mxu0
        %4015 = vmatprep.mubr.bf16.mxu0 0
        %4016 = vmatmul.mubr.bf16.gmra.mrb[0].mxu0 %v3715
        %v4017 = vpop.f32.mrb[0].mxu0
        %v4018 = vadd.f32 %v3857, %v4017
        %v4019 = vpop.f32.mrb[0].mxu0
        %v4020 = vpop.f32.mrb[0].mxu0
        %v4021 = vadd.f32 %v3860, %v4020
        %v4022 = vpop.f32.mrb[0].mxu0
        %4023 = vmatprep.mubr.bf16.mxu0 0
        %4024 = vmatmul.mubr.bf16.gmra.mrb[0].mxu0 %v3718
        %v4025 = vpop.f32.mrb[0].mxu0
        %v4026 = vadd.f32 %v3865, %v4025
        %v4027 = vpop.f32.mrb[0].mxu0
        %v4028 = vpop.f32.mrb[0].mxu0
        %v4029 = vadd.f32 %v3868, %v4028
        %v4030 = vpop.f32.mrb[0].mxu0
        %4031 = vmatprep.mubr.bf16.mxu0 0
        %4032 = vmatmul.mubr.bf16.gmra.mrb[0].mxu0 %v3721
        %v4033 = vpop.f32.mrb[0].mxu0
        %v4034 = vadd.f32 %v3873, %v4033
        %v4035 = vpop.f32.mrb[0].mxu0
        %v4036 = vpop.f32.mrb[0].mxu0
        %v4037 = vadd.f32 %v3876, %v4036
        %v4038 = vpop.f32.mrb[0].mxu0
        %4039 = vmatprep.mubr.bf16.mxu0 0
        %4040 = vmatmul.mubr.bf16.gmra.mrb[0].mxu0 %v3724
        %v4041 = vpop.f32.mrb[0].mxu0
        %v4042 = vadd.f32 %v3881, %v4041
        %v4043 = vpop.f32.mrb[0].mxu0
        %v4044 = vpop.f32.mrb[0].mxu0
        %v4045 = vadd.f32 %v3884, %v4044
        %v4046 = vpop.f32.mrb[0].mxu0
        %4047 = vdwg.mxu0
        %v4048 = vld [vmem:[%s5] sm:$0x1]
        %v4050 = vlaneseq
        %v4051 = vshrl.u32 %v4050, 7
        %v4052 = vsub.s32 0, %v4051
        %v4053 = vrot.slane %v4048, %v4052
        %v4055 = vmul.f32 %v3922, %v4053
        %v4056 = vmul.f32 %v3925, %v4053
        %v4057 = vmul.f32 %v3930, %v4053
        %v4058 = vmul.f32 %v3933, %v4053
        %v4059 = vmul.f32 %v3938, %v4053
        %v4060 = vmul.f32 %v3941, %v4053
        %v4061 = vmul.f32 %v3946, %v4053
        %v4062 = vmul.f32 %v3949, %v4053
        %v4063 = vmul.f32 %v3954, %v4053
        %v4064 = vmul.f32 %v3957, %v4053
        %v4065 = vmul.f32 %v3962, %v4053
        %v4066 = vmul.f32 %v3965, %v4053
        %v4067 = vmul.f32 %v3970, %v4053
        %v4068 = vmul.f32 %v3973, %v4053
        %v4069 = vmul.f32 %v3978, %v4053
        %v4070 = vmul.f32 %v3981, %v4053
        %v4071 = vmul.f32 %v3986, %v4053
        %v4072 = vmul.f32 %v3989, %v4053
        %v4073 = vmul.f32 %v3994, %v4053
        %v4074 = vmul.f32 %v3997, %v4053
        %v4075 = vmul.f32 %v4002, %v4053
        %v4076 = vmul.f32 %v4005, %v4053
        %v4077 = vmul.f32 %v4010, %v4053
        %v4078 = vmul.f32 %v4013, %v4053
        %v4079 = vmul.f32 %v4018, %v4053
        %v4080 = vmul.f32 %v4021, %v4053
        %v4081 = vmul.f32 %v4026, %v4053
        %v4082 = vmul.f32 %v4029, %v4053
        %v4083 = vmul.f32 %v4034, %v4053
        %v4084 = vmul.f32 %v4037, %v4053
        %v4085 = vmul.f32 %v4042, %v4053
        %v4086 = vmul.f32 %v4045, %v4053
        %v4087 = vld [vmem:[%s6] sm:$0x1]
        %v4089 = vlaneseq
        %v4090 = vshrl.u32 %v4089, 7
        %v4091 = vsub.s32 0, %v4090
        %v4092 = vrot.slane %v4087, %v4091
        %v4094 = vadd.f32 %v4055, %v4092
        %v4095 = vadd.f32 %v4056, %v4092
        %v4096 = vadd.f32 %v4057, %v4092
        %v4097 = vadd.f32 %v4058, %v4092
        %v4098 = vadd.f32 %v4059, %v4092
        %v4099 = vadd.f32 %v4060, %v4092
        %v4100 = vadd.f32 %v4061, %v4092
        %v4101 = vadd.f32 %v4062, %v4092
        %v4102 = vadd.f32 %v4063, %v4092
        %v4103 = vadd.f32 %v4064, %v4092
        %v4104 = vadd.f32 %v4065, %v4092
        %v4105 = vadd.f32 %v4066, %v4092
        %v4106 = vadd.f32 %v4067, %v4092
        %v4107 = vadd.f32 %v4068, %v4092
        %v4108 = vadd.f32 %v4069, %v4092
        %v4109 = vadd.f32 %v4070, %v4092
        %v4110 = vadd.f32 %v4071, %v4092
        %v4111 = vadd.f32 %v4072, %v4092
        %v4112 = vadd.f32 %v4073, %v4092
        %v4113 = vadd.f32 %v4074, %v4092
        %v4114 = vadd.f32 %v4075, %v4092
        %v4115 = vadd.f32 %v4076, %v4092
        %v4116 = vadd.f32 %v4077, %v4092
        %v4117 = vadd.f32 %v4078, %v4092
        %v4118 = vadd.f32 %v4079, %v4092
        %v4119 = vadd.f32 %v4080, %v4092
        %v4120 = vadd.f32 %v4081, %v4092
        %v4121 = vadd.f32 %v4082, %v4092
        %v4122 = vadd.f32 %v4083, %v4092
        %v4123 = vadd.f32 %v4084, %v4092
        %v4124 = vadd.f32 %v4085, %v4092
        %v4125 = vadd.f32 %v4086, %v4092
        %vm4126 = vcmp.ge.f32.partialorder %v4094, 0.0
        %vm4127 = vcmp.ge.f32.partialorder %v4095, 0.0
        %vm4128 = vcmp.ge.f32.partialorder %v4096, 0.0
        %vm4129 = vcmp.ge.f32.partialorder %v4097, 0.0
        %vm4130 = vcmp.ge.f32.partialorder %v4098, 0.0
        %vm4131 = vcmp.ge.f32.partialorder %v4099, 0.0
        %vm4132 = vcmp.ge.f32.partialorder %v4100, 0.0
        %vm4133 = vcmp.ge.f32.partialorder %v4101, 0.0
        %vm4134 = vcmp.ge.f32.partialorder %v4102, 0.0
        %vm4135 = vcmp.ge.f32.partialorder %v4103, 0.0
        %vm4136 = vcmp.ge.f32.partialorder %v4104, 0.0
        %vm4137 = vcmp.ge.f32.partialorder %v4105, 0.0
        %vm4138 = vcmp.ge.f32.partialorder %v4106, 0.0
        %vm4139 = vcmp.ge.f32.partialorder %v4107, 0.0
        %vm4140 = vcmp.ge.f32.partialorder %v4108, 0.0
        %vm4141 = vcmp.ge.f32.partialorder %v4109, 0.0
        %vm4142 = vcmp.ge.f32.partialorder %v4110, 0.0
        %vm4143 = vcmp.ge.f32.partialorder %v4111, 0.0
        %vm4144 = vcmp.ge.f32.partialorder %v4112, 0.0
        %vm4145 = vcmp.ge.f32.partialorder %v4113, 0.0
        %vm4146 = vcmp.ge.f32.partialorder %v4114, 0.0
        %vm4147 = vcmp.ge.f32.partialorder %v4115, 0.0
        %vm4148 = vcmp.ge.f32.partialorder %v4116, 0.0
        %vm4149 = vcmp.ge.f32.partialorder %v4117, 0.0
        %vm4150 = vcmp.ge.f32.partialorder %v4118, 0.0
        %vm4151 = vcmp.ge.f32.partialorder %v4119, 0.0
        %vm4152 = vcmp.ge.f32.partialorder %v4120, 0.0
        %vm4153 = vcmp.ge.f32.partialorder %v4121, 0.0
        %vm4154 = vcmp.ge.f32.partialorder %v4122, 0.0
        %vm4155 = vcmp.ge.f32.partialorder %v4123, 0.0
        %vm4156 = vcmp.ge.f32.partialorder %v4124, 0.0
        %vm4157 = vcmp.ge.f32.partialorder %v4125, 0.0
        %v4158 = vmul.f32 %v4094, 0.2
        %v4159 = vmul.f32 %v4095, 0.2
        %v4160 = vmul.f32 %v4096, 0.2
        %v4161 = vmul.f32 %v4097, 0.2
        %v4162 = vmul.f32 %v4098, 0.2
        %v4163 = vmul.f32 %v4099, 0.2
        %v4164 = vmul.f32 %v4100, 0.2
        %v4165 = vmul.f32 %v4101, 0.2
        %v4166 = vmul.f32 %v4102, 0.2
        %v4167 = vmul.f32 %v4103, 0.2
        %v4168 = vmul.f32 %v4104, 0.2
        %v4169 = vmul.f32 %v4105, 0.2
        %v4170 = vmul.f32 %v4106, 0.2
        %v4171 = vmul.f32 %v4107, 0.2
        %v4172 = vmul.f32 %v4108, 0.2
        %v4173 = vmul.f32 %v4109, 0.2
        %v4174 = vmul.f32 %v4110, 0.2
        %v4175 = vmul.f32 %v4111, 0.2
        %v4176 = vmul.f32 %v4112, 0.2
        %v4177 = vmul.f32 %v4113, 0.2
        %v4178 = vmul.f32 %v4114, 0.2
        %v4179 = vmul.f32 %v4115, 0.2
        %v4180 = vmul.f32 %v4116, 0.2
        %v4181 = vmul.f32 %v4117, 0.2
        %v4182 = vmul.f32 %v4118, 0.2
        %v4183 = vmul.f32 %v4119, 0.2
        %v4184 = vmul.f32 %v4120, 0.2
        %v4185 = vmul.f32 %v4121, 0.2
        %v4186 = vmul.f32 %v4122, 0.2
        %v4187 = vmul.f32 %v4123, 0.2
        %v4188 = vmul.f32 %v4124, 0.2
        %v4189 = vmul.f32 %v4125, 0.2
        %v4190 = vsel %vm4126, %v4094, %v4158
        %v4191 = vsel %vm4127, %v4095, %v4159
        %v4192 = vsel %vm4128, %v4096, %v4160
        %v4193 = vsel %vm4129, %v4097, %v4161
        %v4194 = vsel %vm4130, %v4098, %v4162
        %v4195 = vsel %vm4131, %v4099, %v4163
        %v4196 = vsel %vm4132, %v4100, %v4164
        %v4197 = vsel %vm4133, %v4101, %v4165
        %v4198 = vsel %vm4134, %v4102, %v4166
        %v4199 = vsel %vm4135, %v4103, %v4167
        %v4200 = vsel %vm4136, %v4104, %v4168
        %v4201 = vsel %vm4137, %v4105, %v4169
        %v4202 = vsel %vm4138, %v4106, %v4170
        %v4203 = vsel %vm4139, %v4107, %v4171
        %v4204 = vsel %vm4140, %v4108, %v4172
        %v4205 = vsel %vm4141, %v4109, %v4173
        %v4206 = vsel %vm4142, %v4110, %v4174
        %v4207 = vsel %vm4143, %v4111, %v4175
        %v4208 = vsel %vm4144, %v4112, %v4176
        %v4209 = vsel %vm4145, %v4113, %v4177
        %v4210 = vsel %vm4146, %v4114, %v4178
        %v4211 = vsel %vm4147, %v4115, %v4179
        %v4212 = vsel %vm4148, %v4116, %v4180
        %v4213 = vsel %vm4149, %v4117, %v4181
        %v4214 = vsel %vm4150, %v4118, %v4182
        %v4215 = vsel %vm4151, %v4119, %v4183
        %v4216 = vsel %vm4152, %v4120, %v4184
        %v4217 = vsel %vm4153, %v4121, %v4185
        %v4218 = vsel %vm4154, %v4122, %v4186
        %v4219 = vsel %vm4155, %v4123, %v4187
        %v4220 = vsel %vm4156, %v4124, %v4188
        %v4221 = vsel %vm4157, %v4125, %v4189
        %v4254 = vrot.slane %v4190, 7
        %v4255 = vrot.slane %v4191, 7
        %v4256 = vsel %vm505, %v4254, %v4255
        %v4257 = vrot.slane %v4192, 7
        %v4258 = vrot.slane %v4193, 7
        %v4259 = vsel %vm505, %v4257, %v4258
        %v4260 = vrot.slane %v4194, 7
        %v4261 = vrot.slane %v4195, 7
        %v4262 = vsel %vm505, %v4260, %v4261
        %v4263 = vrot.slane %v4196, 7
        %v4264 = vrot.slane %v4197, 7
        %v4265 = vsel %vm505, %v4263, %v4264
        %v4266 = vrot.slane %v4198, 7
        %v4267 = vrot.slane %v4199, 7
        %v4268 = vsel %vm505, %v4266, %v4267
        %v4269 = vrot.slane %v4200, 7
        %v4270 = vrot.slane %v4201, 7
        %v4271 = vsel %vm505, %v4269, %v4270
        %v4272 = vrot.slane %v4202, 7
        %v4273 = vrot.slane %v4203, 7
        %v4274 = vsel %vm505, %v4272, %v4273
        %v4275 = vrot.slane %v4204, 7
        %v4276 = vrot.slane %v4205, 7
        %v4277 = vsel %vm505, %v4275, %v4276
        %v4278 = vrot.slane %v4206, 7
        %v4279 = vrot.slane %v4207, 7
        %v4280 = vsel %vm505, %v4278, %v4279
        %v4281 = vrot.slane %v4208, 7
        %v4282 = vrot.slane %v4209, 7
        %v4283 = vsel %vm505, %v4281, %v4282
        %v4284 = vrot.slane %v4210, 7
        %v4285 = vrot.slane %v4211, 7
        %v4286 = vsel %vm505, %v4284, %v4285
        %v4287 = vrot.slane %v4212, 7
        %v4288 = vrot.slane %v4213, 7
        %v4289 = vsel %vm505, %v4287, %v4288
        %v4290 = vrot.slane %v4214, 7
        %v4291 = vrot.slane %v4215, 7
        %v4292 = vsel %vm505, %v4290, %v4291
        %v4293 = vrot.slane %v4216, 7
        %v4294 = vrot.slane %v4217, 7
        %v4295 = vsel %vm505, %v4293, %v4294
        %v4296 = vrot.slane %v4218, 7
        %v4297 = vrot.slane %v4219, 7
        %v4298 = vsel %vm505, %v4296, %v4297
        %v4299 = vrot.slane %v4220, 7
        %v4300 = vrot.slane %v4221, 7
        %v4301 = vsel %vm505, %v4299, %v4300
        %v4349 = vsel %vm505, 0.0, %v4254
        %v4350 = vsel %vm505, 0.0, %v4257
        %v4351 = vsel %vm505, 0.0, %v4260
        %v4352 = vsel %vm505, 0.0, %v4263
        %v4353 = vsel %vm505, 0.0, %v4266
        %v4354 = vsel %vm505, 0.0, %v4269
        %v4355 = vsel %vm505, 0.0, %v4272
        %v4356 = vsel %vm505, 0.0, %v4275
        %v4357 = vsel %vm505, 0.0, %v4278
        %v4358 = vsel %vm505, 0.0, %v4281
        %v4359 = vsel %vm505, 0.0, %v4284
        %v4360 = vsel %vm505, 0.0, %v4287
        %v4361 = vsel %vm505, 0.0, %v4290
        %v4362 = vsel %vm505, 0.0, %v4293
        %v4363 = vsel %vm505, 0.0, %v4296
        %v4364 = vsel %vm505, 0.0, %v4299
        %v4365 = vsel %vm505, %v4255, 0.0
        %v4366 = vsel %vm505, %v4258, 0.0
        %v4367 = vsel %vm505, %v4261, 0.0
        %v4368 = vsel %vm505, %v4264, 0.0
        %v4369 = vsel %vm505, %v4267, 0.0
        %v4370 = vsel %vm505, %v4270, 0.0
        %v4371 = vsel %vm505, %v4273, 0.0
        %v4372 = vsel %vm505, %v4276, 0.0
        %v4373 = vsel %vm505, %v4279, 0.0
        %v4374 = vsel %vm505, %v4282, 0.0
        %v4375 = vsel %vm505, %v4285, 0.0
        %v4376 = vsel %vm505, %v4288, 0.0
        %v4377 = vsel %vm505, %v4291, 0.0
        %v4378 = vsel %vm505, %v4294, 0.0
        %v4379 = vsel %vm505, %v4297, 0.0
        %v4380 = vsel %vm505, %v4300, 0.0
        %v4411 = vrot.slane %v4349, 1
        %v4412 = vrot.slane %v4256, 1
        %v4413 = vsel %vm671, %v4411, %v4412
        %v4414 = vrot.slane %v4365, 1
        %v4415 = vsel %vm671, %v4412, %v4414
        %v4416 = vrot.slane %v4350, 1
        %v4417 = vrot.slane %v4259, 1
        %v4418 = vsel %vm671, %v4416, %v4417
        %v4419 = vrot.slane %v4366, 1
        %v4420 = vsel %vm671, %v4417, %v4419
        %v4421 = vrot.slane %v4351, 1
        %v4422 = vrot.slane %v4262, 1
        %v4423 = vsel %vm671, %v4421, %v4422
        %v4424 = vrot.slane %v4367, 1
        %v4425 = vsel %vm671, %v4422, %v4424
        %v4426 = vrot.slane %v4352, 1
        %v4427 = vrot.slane %v4265, 1
        %v4428 = vsel %vm671, %v4426, %v4427
        %v4429 = vrot.slane %v4368, 1
        %v4430 = vsel %vm671, %v4427, %v4429
        %v4431 = vrot.slane %v4353, 1
        %v4432 = vrot.slane %v4268, 1
        %v4433 = vsel %vm671, %v4431, %v4432
        %v4434 = vrot.slane %v4369, 1
        %v4435 = vsel %vm671, %v4432, %v4434
        %v4436 = vrot.slane %v4354, 1
        %v4437 = vrot.slane %v4271, 1
        %v4438 = vsel %vm671, %v4436, %v4437
        %v4439 = vrot.slane %v4370, 1
        %v4440 = vsel %vm671, %v4437, %v4439
        %v4441 = vrot.slane %v4355, 1
        %v4442 = vrot.slane %v4274, 1
        %v4443 = vsel %vm671, %v4441, %v4442
        %v4444 = vrot.slane %v4371, 1
        %v4445 = vsel %vm671, %v4442, %v4444
        %v4446 = vrot.slane %v4356, 1
        %v4447 = vrot.slane %v4277, 1
        %v4448 = vsel %vm671, %v4446, %v4447
        %v4449 = vrot.slane %v4372, 1
        %v4450 = vsel %vm671, %v4447, %v4449
        %v4451 = vrot.slane %v4357, 1
        %v4452 = vrot.slane %v4280, 1
        %v4453 = vsel %vm671, %v4451, %v4452
        %v4454 = vrot.slane %v4373, 1
        %v4455 = vsel %vm671, %v4452, %v4454
        %v4456 = vrot.slane %v4358, 1
        %v4457 = vrot.slane %v4283, 1
        %v4458 = vsel %vm671, %v4456, %v4457
        %v4459 = vrot.slane %v4374, 1
        %v4460 = vsel %vm671, %v4457, %v4459
        %v4461 = vrot.slane %v4359, 1
        %v4462 = vrot.slane %v4286, 1
        %v4463 = vsel %vm671, %v4461, %v4462
        %v4464 = vrot.slane %v4375, 1
        %v4465 = vsel %vm671, %v4462, %v4464
        %v4466 = vrot.slane %v4360, 1
        %v4467 = vrot.slane %v4289, 1
        %v4468 = vsel %vm671, %v4466, %v4467
        %v4469 = vrot.slane %v4376, 1
        %v4470 = vsel %vm671, %v4467, %v4469
        %v4471 = vrot.slane %v4361, 1
        %v4472 = vrot.slane %v4292, 1
        %v4473 = vsel %vm671, %v4471, %v4472
        %v4474 = vrot.slane %v4377, 1
        %v4475 = vsel %vm671, %v4472, %v4474
        %v4476 = vrot.slane %v4362, 1
        %v4477 = vrot.slane %v4295, 1
        %v4478 = vsel %vm671, %v4476, %v4477
        %v4479 = vrot.slane %v4378, 1
        %v4480 = vsel %vm671, %v4477, %v4479
        %v4481 = vrot.slane %v4363, 1
        %v4482 = vrot.slane %v4298, 1
        %v4483 = vsel %vm671, %v4481, %v4482
        %v4484 = vrot.slane %v4379, 1
        %v4485 = vsel %vm671, %v4482, %v4484
        %4486 = vrot.lane.b32.xlu0 %v4413, 32
        %v4487 = vpop.permute.xlu0 %4486
        %4488 = vrot.lane.b32.xlu0 %v4415, 32
        %v4489 = vpop.permute.xlu0 %4488
        %4490 = vrot.lane.b32.xlu0 %v4418, 32
        %v4491 = vpop.permute.xlu0 %4490
        %4492 = vrot.lane.b32.xlu0 %v4420, 32
        %v4493 = vpop.permute.xlu0 %4492
        %4494 = vrot.lane.b32.xlu0 %v4423, 32
        %v4495 = vpop.permute.xlu0 %4494
        %4496 = vrot.lane.b32.xlu0 %v4425, 32
        %v4497 = vpop.permute.xlu0 %4496
        %4498 = vrot.lane.b32.xlu0 %v4428, 32
        %v4499 = vpop.permute.xlu0 %4498
        %4500 = vrot.lane.b32.xlu0 %v4430, 32
        %v4501 = vpop.permute.xlu0 %4500
        %4502 = vrot.lane.b32.xlu0 %v4433, 32
        %v4503 = vpop.permute.xlu0 %4502
        %4504 = vrot.lane.b32.xlu0 %v4435, 32
        %v4505 = vpop.permute.xlu0 %4504
        %4506 = vrot.lane.b32.xlu0 %v4438, 32
        %v4507 = vpop.permute.xlu0 %4506
        %4508 = vrot.lane.b32.xlu0 %v4440, 32
        %v4509 = vpop.permute.xlu0 %4508
        %4510 = vrot.lane.b32.xlu0 %v4443, 32
        %v4511 = vpop.permute.xlu0 %4510
        %4512 = vrot.lane.b32.xlu0 %v4445, 32
        %v4513 = vpop.permute.xlu0 %4512
        %4514 = vrot.lane.b32.xlu0 %v4448, 32
        %v4515 = vpop.permute.xlu0 %4514
        %4516 = vrot.lane.b32.xlu0 %v4450, 32
        %v4517 = vpop.permute.xlu0 %4516
        %4518 = vrot.lane.b32.xlu0 %v4453, 32
        %v4519 = vpop.permute.xlu0 %4518
        %4520 = vrot.lane.b32.xlu0 %v4455, 32
        %v4521 = vpop.permute.xlu0 %4520
        %4522 = vrot.lane.b32.xlu0 %v4458, 32
        %v4523 = vpop.permute.xlu0 %4522
        %4524 = vrot.lane.b32.xlu0 %v4460, 32
        %v4525 = vpop.permute.xlu0 %4524
        %4526 = vrot.lane.b32.xlu0 %v4463, 32
        %v4527 = vpop.permute.xlu0 %4526
        %4528 = vrot.lane.b32.xlu0 %v4465, 32
        %v4529 = vpop.permute.xlu0 %4528
        %4530 = vrot.lane.b32.xlu0 %v4468, 32
        %v4531 = vpop.permute.xlu0 %4530
        %4532 = vrot.lane.b32.xlu0 %v4470, 32
        %v4533 = vpop.permute.xlu0 %4532
        %4534 = vrot.lane.b32.xlu0 %v4473, 32
        %v4535 = vpop.permute.xlu0 %4534
        %4536 = vrot.lane.b32.xlu0 %v4475, 32
        %v4537 = vpop.permute.xlu0 %4536
        %4538 = vrot.lane.b32.xlu0 %v4478, 32
        %v4539 = vpop.permute.xlu0 %4538
        %4540 = vrot.lane.b32.xlu0 %v4480, 32
        %v4541 = vpop.permute.xlu0 %4540
        %4542 = vrot.lane.b32.xlu0 %v4483, 32
        %v4543 = vpop.permute.xlu0 %4542
        %4544 = vrot.lane.b32.xlu0 %v4485, 32
        %v4545 = vpop.permute.xlu0 %4544
        %v4576 = vrot.slane %v4349, 2
        %v4577 = vrot.slane %v4256, 2
        %v4578 = vsel %vm848, %v4576, %v4577
        %v4579 = vrot.slane %v4365, 2
        %v4580 = vsel %vm848, %v4577, %v4579
        %v4581 = vrot.slane %v4350, 2
        %v4582 = vrot.slane %v4259, 2
        %v4583 = vsel %vm848, %v4581, %v4582
        %v4584 = vrot.slane %v4366, 2
        %v4585 = vsel %vm848, %v4582, %v4584
        %v4586 = vrot.slane %v4351, 2
        %v4587 = vrot.slane %v4262, 2
        %v4588 = vsel %vm848, %v4586, %v4587
        %v4589 = vrot.slane %v4367, 2
        %v4590 = vsel %vm848, %v4587, %v4589
        %v4591 = vrot.slane %v4352, 2
        %v4592 = vrot.slane %v4265, 2
        %v4593 = vsel %vm848, %v4591, %v4592
        %v4594 = vrot.slane %v4368, 2
        %v4595 = vsel %vm848, %v4592, %v4594
        %v4596 = vrot.slane %v4353, 2
        %v4597 = vrot.slane %v4268, 2
        %v4598 = vsel %vm848, %v4596, %v4597
        %v4599 = vrot.slane %v4369, 2
        %v4600 = vsel %vm848, %v4597, %v4599
        %v4601 = vrot.slane %v4354, 2
        %v4602 = vrot.slane %v4271, 2
        %v4603 = vsel %vm848, %v4601, %v4602
        %v4604 = vrot.slane %v4370, 2
        %v4605 = vsel %vm848, %v4602, %v4604
        %v4606 = vrot.slane %v4355, 2
        %v4607 = vrot.slane %v4274, 2
        %v4608 = vsel %vm848, %v4606, %v4607
        %v4609 = vrot.slane %v4371, 2
        %v4610 = vsel %vm848, %v4607, %v4609
        %v4611 = vrot.slane %v4356, 2
        %v4612 = vrot.slane %v4277, 2
        %v4613 = vsel %vm848, %v4611, %v4612
        %v4614 = vrot.slane %v4372, 2
        %v4615 = vsel %vm848, %v4612, %v4614
        %v4616 = vrot.slane %v4357, 2
        %v4617 = vrot.slane %v4280, 2
        %v4618 = vsel %vm848, %v4616, %v4617
        %v4619 = vrot.slane %v4373, 2
        %v4620 = vsel %vm848, %v4617, %v4619
        %v4621 = vrot.slane %v4358, 2
        %v4622 = vrot.slane %v4283, 2
        %v4623 = vsel %vm848, %v4621, %v4622
        %v4624 = vrot.slane %v4374, 2
        %v4625 = vsel %vm848, %v4622, %v4624
        %v4626 = vrot.slane %v4359, 2
        %v4627 = vrot.slane %v4286, 2
        %v4628 = vsel %vm848, %v4626, %v4627
        %v4629 = vrot.slane %v4375, 2
        %v4630 = vsel %vm848, %v4627, %v4629
        %v4631 = vrot.slane %v4360, 2
        %v4632 = vrot.slane %v4289, 2
        %v4633 = vsel %vm848, %v4631, %v4632
        %v4634 = vrot.slane %v4376, 2
        %v4635 = vsel %vm848, %v4632, %v4634
        %v4636 = vrot.slane %v4361, 2
        %v4637 = vrot.slane %v4292, 2
        %v4638 = vsel %vm848, %v4636, %v4637
        %v4639 = vrot.slane %v4377, 2
        %v4640 = vsel %vm848, %v4637, %v4639
        %v4641 = vrot.slane %v4362, 2
        %v4642 = vrot.slane %v4295, 2
        %v4643 = vsel %vm848, %v4641, %v4642
        %v4644 = vrot.slane %v4378, 2
        %v4645 = vsel %vm848, %v4642, %v4644
        %v4646 = vrot.slane %v4363, 2
        %v4647 = vrot.slane %v4298, 2
        %v4648 = vsel %vm848, %v4646, %v4647
        %v4649 = vrot.slane %v4379, 2
        %v4650 = vsel %vm848, %v4647, %v4649
        %4651 = vrot.lane.b32.xlu0 %v4578, 64
        %v4652 = vpop.permute.xlu0 %4651
        %4653 = vrot.lane.b32.xlu0 %v4580, 64
        %v4654 = vpop.permute.xlu0 %4653
        %4655 = vrot.lane.b32.xlu0 %v4583, 64
        %v4656 = vpop.permute.xlu0 %4655
        %4657 = vrot.lane.b32.xlu0 %v4585, 64
        %v4658 = vpop.permute.xlu0 %4657
        %4659 = vrot.lane.b32.xlu0 %v4588, 64
        %v4660 = vpop.permute.xlu0 %4659
        %4661 = vrot.lane.b32.xlu0 %v4590, 64
        %v4662 = vpop.permute.xlu0 %4661
        %4663 = vrot.lane.b32.xlu0 %v4593, 64
        %v4664 = vpop.permute.xlu0 %4663
        %4665 = vrot.lane.b32.xlu0 %v4595, 64
        %v4666 = vpop.permute.xlu0 %4665
        %4667 = vrot.lane.b32.xlu0 %v4598, 64
        %v4668 = vpop.permute.xlu0 %4667
        %4669 = vrot.lane.b32.xlu0 %v4600, 64
        %v4670 = vpop.permute.xlu0 %4669
        %4671 = vrot.lane.b32.xlu0 %v4603, 64
        %v4672 = vpop.permute.xlu0 %4671
        %4673 = vrot.lane.b32.xlu0 %v4605, 64
        %v4674 = vpop.permute.xlu0 %4673
        %4675 = vrot.lane.b32.xlu0 %v4608, 64
        %v4676 = vpop.permute.xlu0 %4675
        %4677 = vrot.lane.b32.xlu0 %v4610, 64
        %v4678 = vpop.permute.xlu0 %4677
        %4679 = vrot.lane.b32.xlu0 %v4613, 64
        %v4680 = vpop.permute.xlu0 %4679
        %4681 = vrot.lane.b32.xlu0 %v4615, 64
        %v4682 = vpop.permute.xlu0 %4681
        %4683 = vrot.lane.b32.xlu0 %v4618, 64
        %v4684 = vpop.permute.xlu0 %4683
        %4685 = vrot.lane.b32.xlu0 %v4620, 64
        %v4686 = vpop.permute.xlu0 %4685
        %4687 = vrot.lane.b32.xlu0 %v4623, 64
        %v4688 = vpop.permute.xlu0 %4687
        %4689 = vrot.lane.b32.xlu0 %v4625, 64
        %v4690 = vpop.permute.xlu0 %4689
        %4691 = vrot.lane.b32.xlu0 %v4628, 64
        %v4692 = vpop.permute.xlu0 %4691
        %4693 = vrot.lane.b32.xlu0 %v4630, 64
        %v4694 = vpop.permute.xlu0 %4693
        %4695 = vrot.lane.b32.xlu0 %v4633, 64
        %v4696 = vpop.permute.xlu0 %4695
        %4697 = vrot.lane.b32.xlu0 %v4635, 64
        %v4698 = vpop.permute.xlu0 %4697
        %4699 = vrot.lane.b32.xlu0 %v4638, 64
        %v4700 = vpop.permute.xlu0 %4699
        %4701 = vrot.lane.b32.xlu0 %v4640, 64
        %v4702 = vpop.permute.xlu0 %4701
        %4703 = vrot.lane.b32.xlu0 %v4643, 64
        %v4704 = vpop.permute.xlu0 %4703
        %4705 = vrot.lane.b32.xlu0 %v4645, 64
        %v4706 = vpop.permute.xlu0 %4705
        %4707 = vrot.lane.b32.xlu0 %v4648, 64
        %v4708 = vpop.permute.xlu0 %4707
        %4709 = vrot.lane.b32.xlu0 %v4650, 64
        %v4710 = vpop.permute.xlu0 %4709
        %4742 = vrot.lane.b32.xlu0 %v4349, 96
        %v4743 = vpop.permute.xlu0 %4742
        %4744 = vrot.lane.b32.xlu0 %v4256, 96
        %v4745 = vpop.permute.xlu0 %4744
        %4746 = vrot.lane.b32.xlu0 %v4350, 96
        %v4747 = vpop.permute.xlu0 %4746
        %4748 = vrot.lane.b32.xlu0 %v4259, 96
        %v4749 = vpop.permute.xlu0 %4748
        %4750 = vrot.lane.b32.xlu0 %v4351, 96
        %v4751 = vpop.permute.xlu0 %4750
        %4752 = vrot.lane.b32.xlu0 %v4262, 96
        %v4753 = vpop.permute.xlu0 %4752
        %4754 = vrot.lane.b32.xlu0 %v4352, 96
        %v4755 = vpop.permute.xlu0 %4754
        %4756 = vrot.lane.b32.xlu0 %v4265, 96
        %v4757 = vpop.permute.xlu0 %4756
        %4758 = vrot.lane.b32.xlu0 %v4353, 96
        %v4759 = vpop.permute.xlu0 %4758
        %4760 = vrot.lane.b32.xlu0 %v4268, 96
        %v4761 = vpop.permute.xlu0 %4760
        %4762 = vrot.lane.b32.xlu0 %v4354, 96
        %v4763 = vpop.permute.xlu0 %4762
        %4764 = vrot.lane.b32.xlu0 %v4271, 96
        %v4765 = vpop.permute.xlu0 %4764
        %4766 = vrot.lane.b32.xlu0 %v4355, 96
        %v4767 = vpop.permute.xlu0 %4766
        %4768 = vrot.lane.b32.xlu0 %v4274, 96
        %v4769 = vpop.permute.xlu0 %4768
        %4770 = vrot.lane.b32.xlu0 %v4356, 96
        %v4771 = vpop.permute.xlu0 %4770
        %4772 = vrot.lane.b32.xlu0 %v4277, 96
        %v4773 = vpop.permute.xlu0 %4772
        %4774 = vrot.lane.b32.xlu0 %v4357, 96
        %v4775 = vpop.permute.xlu0 %4774
        %4776 = vrot.lane.b32.xlu0 %v4280, 96
        %v4777 = vpop.permute.xlu0 %4776
        %4778 = vrot.lane.b32.xlu0 %v4358, 96
        %v4779 = vpop.permute.xlu0 %4778
        %4780 = vrot.lane.b32.xlu0 %v4283, 96
        %v4781 = vpop.permute.xlu0 %4780
        %4782 = vrot.lane.b32.xlu0 %v4359, 96
        %v4783 = vpop.permute.xlu0 %4782
        %4784 = vrot.lane.b32.xlu0 %v4286, 96
        %v4785 = vpop.permute.xlu0 %4784
        %4786 = vrot.lane.b32.xlu0 %v4360, 96
        %v4787 = vpop.permute.xlu0 %4786
        %4788 = vrot.lane.b32.xlu0 %v4289, 96
        %v4789 = vpop.permute.xlu0 %4788
        %4790 = vrot.lane.b32.xlu0 %v4361, 96
        %v4791 = vpop.permute.xlu0 %4790
        %4792 = vrot.lane.b32.xlu0 %v4292, 96
        %v4793 = vpop.permute.xlu0 %4792
        %4794 = vrot.lane.b32.xlu0 %v4362, 96
        %v4795 = vpop.permute.xlu0 %4794
        %4796 = vrot.lane.b32.xlu0 %v4295, 96
        %v4797 = vpop.permute.xlu0 %4796
        %4798 = vrot.lane.b32.xlu0 %v4363, 96
        %v4799 = vpop.permute.xlu0 %4798
        %4800 = vrot.lane.b32.xlu0 %v4298, 96
        %v4801 = vpop.permute.xlu0 %4800
        %4802 = vrot.lane.b32.xlu0 %v4364, 96
        %v4803 = vpop.permute.xlu0 %4802
        %4804 = vrot.lane.b32.xlu0 %v4301, 96
        %v4805 = vpop.permute.xlu0 %4804
        %v4839 = vrot.slane %v4364, 1
        %v4840 = vrot.slane %v4301, 1
        %v4841 = vsel %vm671, %v4839, %v4840
        %v4842 = vrot.slane %v4380, 1
        %v4843 = vsel %vm671, %v4840, %v4842
        %v4876 = vrot.slane %v4364, 2
        %v4877 = vrot.slane %v4301, 2
        %v4878 = vsel %vm848, %v4876, %v4877
        %v4879 = vrot.slane %v4380, 2
        %v4880 = vsel %vm848, %v4877, %v4879
        %4881 = vrot.lane.b32.xlu0 %v4578, 32
        %v4882 = vpop.permute.xlu0 %4881
        %4883 = vrot.lane.b32.xlu0 %v4580, 32
        %v4884 = vpop.permute.xlu0 %4883
        %4885 = vrot.lane.b32.xlu0 %v4583, 32
        %v4886 = vpop.permute.xlu0 %4885
        %4887 = vrot.lane.b32.xlu0 %v4585, 32
        %v4888 = vpop.permute.xlu0 %4887
        %4889 = vrot.lane.b32.xlu0 %v4588, 32
        %v4890 = vpop.permute.xlu0 %4889
        %4891 = vrot.lane.b32.xlu0 %v4590, 32
        %v4892 = vpop.permute.xlu0 %4891
        %4893 = vrot.lane.b32.xlu0 %v4593, 32
        %v4894 = vpop.permute.xlu0 %4893
        %4895 = vrot.lane.b32.xlu0 %v4595, 32
        %v4896 = vpop.permute.xlu0 %4895
        %4897 = vrot.lane.b32.xlu0 %v4598, 32
        %v4898 = vpop.permute.xlu0 %4897
        %4899 = vrot.lane.b32.xlu0 %v4600, 32
        %v4900 = vpop.permute.xlu0 %4899
        %4901 = vrot.lane.b32.xlu0 %v4603, 32
        %v4902 = vpop.permute.xlu0 %4901
        %4903 = vrot.lane.b32.xlu0 %v4605, 32
        %v4904 = vpop.permute.xlu0 %4903
        %4905 = vrot.lane.b32.xlu0 %v4608, 32
        %v4906 = vpop.permute.xlu0 %4905
        %4907 = vrot.lane.b32.xlu0 %v4610, 32
        %v4908 = vpop.permute.xlu0 %4907
        %4909 = vrot.lane.b32.xlu0 %v4613, 32
        %v4910 = vpop.permute.xlu0 %4909
        %4911 = vrot.lane.b32.xlu0 %v4615, 32
        %v4912 = vpop.permute.xlu0 %4911
        %4913 = vrot.lane.b32.xlu0 %v4618, 32
        %v4914 = vpop.permute.xlu0 %4913
        %4915 = vrot.lane.b32.xlu0 %v4620, 32
        %v4916 = vpop.permute.xlu0 %4915
        %4917 = vrot.lane.b32.xlu0 %v4623, 32
        %v4918 = vpop.permute.xlu0 %4917
        %4919 = vrot.lane.b32.xlu0 %v4625, 32
        %v4920 = vpop.permute.xlu0 %4919
        %4921 = vrot.lane.b32.xlu0 %v4628, 32
        %v4922 = vpop.permute.xlu0 %4921
        %4923 = vrot.lane.b32.xlu0 %v4630, 32
        %v4924 = vpop.permute.xlu0 %4923
        %4925 = vrot.lane.b32.xlu0 %v4633, 32
        %v4926 = vpop.permute.xlu0 %4925
        %4927 = vrot.lane.b32.xlu0 %v4635, 32
        %v4928 = vpop.permute.xlu0 %4927
        %4929 = vrot.lane.b32.xlu0 %v4638, 32
        %v4930 = vpop.permute.xlu0 %4929
        %4931 = vrot.lane.b32.xlu0 %v4640, 32
        %v4932 = vpop.permute.xlu0 %4931
        %4933 = vrot.lane.b32.xlu0 %v4643, 32
        %v4934 = vpop.permute.xlu0 %4933
        %4935 = vrot.lane.b32.xlu0 %v4645, 32
        %v4936 = vpop.permute.xlu0 %4935
        %4937 = vrot.lane.b32.xlu0 %v4648, 32
        %v4938 = vpop.permute.xlu0 %4937
        %4939 = vrot.lane.b32.xlu0 %v4650, 32
        %v4940 = vpop.permute.xlu0 %4939
        %4941 = vrot.lane.b32.xlu0 %v4878, 32
        %v4942 = vpop.permute.xlu0 %4941
        %4943 = vrot.lane.b32.xlu0 %v4880, 32
        %v4944 = vpop.permute.xlu0 %4943
        %4977 = vrot.lane.b32.xlu0 %v4350, 64
        %v4978 = vpop.permute.xlu0 %4977
        %4979 = vrot.lane.b32.xlu0 %v4259, 64
        %v4980 = vpop.permute.xlu0 %4979
        %4981 = vrot.lane.b32.xlu0 %v4351, 64
        %v4982 = vpop.permute.xlu0 %4981
        %4983 = vrot.lane.b32.xlu0 %v4262, 64
        %v4984 = vpop.permute.xlu0 %4983
        %4985 = vrot.lane.b32.xlu0 %v4352, 64
        %v4986 = vpop.permute.xlu0 %4985
        %4987 = vrot.lane.b32.xlu0 %v4265, 64
        %v4988 = vpop.permute.xlu0 %4987
        %4989 = vrot.lane.b32.xlu0 %v4353, 64
        %v4990 = vpop.permute.xlu0 %4989
        %4991 = vrot.lane.b32.xlu0 %v4268, 64
        %v4992 = vpop.permute.xlu0 %4991
        %4993 = vrot.lane.b32.xlu0 %v4354, 64
        %v4994 = vpop.permute.xlu0 %4993
        %4995 = vrot.lane.b32.xlu0 %v4271, 64
        %v4996 = vpop.permute.xlu0 %4995
        %4997 = vrot.lane.b32.xlu0 %v4355, 64
        %v4998 = vpop.permute.xlu0 %4997
        %4999 = vrot.lane.b32.xlu0 %v4274, 64
        %v5000 = vpop.permute.xlu0 %4999
        %5001 = vrot.lane.b32.xlu0 %v4356, 64
        %v5002 = vpop.permute.xlu0 %5001
        %5003 = vrot.lane.b32.xlu0 %v4277, 64
        %v5004 = vpop.permute.xlu0 %5003
        %5005 = vrot.lane.b32.xlu0 %v4357, 64
        %v5006 = vpop.permute.xlu0 %5005
        %5007 = vrot.lane.b32.xlu0 %v4280, 64
        %v5008 = vpop.permute.xlu0 %5007
        %5009 = vrot.lane.b32.xlu0 %v4358, 64
        %v5010 = vpop.permute.xlu0 %5009
        %5011 = vrot.lane.b32.xlu0 %v4283, 64
        %v5012 = vpop.permute.xlu0 %5011
        %5013 = vrot.lane.b32.xlu0 %v4359, 64
        %v5014 = vpop.permute.xlu0 %5013
        %5015 = vrot.lane.b32.xlu0 %v4286, 64
        %v5016 = vpop.permute.xlu0 %5015
        %5017 = vrot.lane.b32.xlu0 %v4360, 64
        %v5018 = vpop.permute.xlu0 %5017
        %5019 = vrot.lane.b32.xlu0 %v4289, 64
        %v5020 = vpop.permute.xlu0 %5019
        %5021 = vrot.lane.b32.xlu0 %v4361, 64
        %v5022 = vpop.permute.xlu0 %5021
        %5023 = vrot.lane.b32.xlu0 %v4292, 64
        %v5024 = vpop.permute.xlu0 %5023
        %5025 = vrot.lane.b32.xlu0 %v4362, 64
        %v5026 = vpop.permute.xlu0 %5025
        %5027 = vrot.lane.b32.xlu0 %v4295, 64
        %v5028 = vpop.permute.xlu0 %5027
        %5029 = vrot.lane.b32.xlu0 %v4363, 64
        %v5030 = vpop.permute.xlu0 %5029
        %5031 = vrot.lane.b32.xlu0 %v4298, 64
        %v5032 = vpop.permute.xlu0 %5031
        %5033 = vrot.lane.b32.xlu0 %v4364, 64
        %v5034 = vpop.permute.xlu0 %5033
        %5035 = vrot.lane.b32.xlu0 %v4301, 64
        %v5036 = vpop.permute.xlu0 %5035
        %5067 = vrot.lane.b32.xlu0 %v4418, 96
        %v5068 = vpop.permute.xlu0 %5067
        %5069 = vrot.lane.b32.xlu0 %v4420, 96
        %v5070 = vpop.permute.xlu0 %5069
        %5071 = vrot.lane.b32.xlu0 %v4423, 96
        %v5072 = vpop.permute.xlu0 %5071
        %5073 = vrot.lane.b32.xlu0 %v4425, 96
        %v5074 = vpop.permute.xlu0 %5073
        %5075 = vrot.lane.b32.xlu0 %v4428, 96
        %v5076 = vpop.permute.xlu0 %5075
        %5077 = vrot.lane.b32.xlu0 %v4430, 96
        %v5078 = vpop.permute.xlu0 %5077
        %5079 = vrot.lane.b32.xlu0 %v4433, 96
        %v5080 = vpop.permute.xlu0 %5079
        %5081 = vrot.lane.b32.xlu0 %v4435, 96
        %v5082 = vpop.permute.xlu0 %5081
        %5083 = vrot.lane.b32.xlu0 %v4438, 96
        %v5084 = vpop.permute.xlu0 %5083
        %5085 = vrot.lane.b32.xlu0 %v4440, 96
        %v5086 = vpop.permute.xlu0 %5085
        %5087 = vrot.lane.b32.xlu0 %v4443, 96
        %v5088 = vpop.permute.xlu0 %5087
        %5089 = vrot.lane.b32.xlu0 %v4445, 96
        %v5090 = vpop.permute.xlu0 %5089
        %5091 = vrot.lane.b32.xlu0 %v4448, 96
        %v5092 = vpop.permute.xlu0 %5091
        %5093 = vrot.lane.b32.xlu0 %v4450, 96
        %v5094 = vpop.permute.xlu0 %5093
        %5095 = vrot.lane.b32.xlu0 %v4453, 96
        %v5096 = vpop.permute.xlu0 %5095
        %5097 = vrot.lane.b32.xlu0 %v4455, 96
        %v5098 = vpop.permute.xlu0 %5097
        %5099 = vrot.lane.b32.xlu0 %v4458, 96
        %v5100 = vpop.permute.xlu0 %5099
        %5101 = vrot.lane.b32.xlu0 %v4460, 96
        %v5102 = vpop.permute.xlu0 %5101
        %5103 = vrot.lane.b32.xlu0 %v4463, 96
        %v5104 = vpop.permute.xlu0 %5103
        %5105 = vrot.lane.b32.xlu0 %v4465, 96
        %v5106 = vpop.permute.xlu0 %5105
        %5107 = vrot.lane.b32.xlu0 %v4468, 96
        %v5108 = vpop.permute.xlu0 %5107
        %5109 = vrot.lane.b32.xlu0 %v4470, 96
        %v5110 = vpop.permute.xlu0 %5109
        %5111 = vrot.lane.b32.xlu0 %v4473, 96
        %v5112 = vpop.permute.xlu0 %5111
        %5113 = vrot.lane.b32.xlu0 %v4475, 96
        %v5114 = vpop.permute.xlu0 %5113
        %5115 = vrot.lane.b32.xlu0 %v4478, 96
        %v5116 = vpop.permute.xlu0 %5115
        %5117 = vrot.lane.b32.xlu0 %v4480, 96
        %v5118 = vpop.permute.xlu0 %5117
        %5119 = vrot.lane.b32.xlu0 %v4483, 96
        %v5120 = vpop.permute.xlu0 %5119
        %5121 = vrot.lane.b32.xlu0 %v4485, 96
        %v5122 = vpop.permute.xlu0 %5121
        %5123 = vrot.lane.b32.xlu0 %v4841, 96
        %v5124 = vpop.permute.xlu0 %5123
        %5125 = vrot.lane.b32.xlu0 %v4843, 96
        %v5126 = vpop.permute.xlu0 %5125
        %v5187 = vsel %vm1844, %v4349, %v4487
        %v5188 = vsel %vm1844, %v4256, %v4489
        %v5189 = vsel %vm1844, %v4350, %v4491
        %v5190 = vsel %vm1844, %v4259, %v4493
        %v5191 = vsel %vm1844, %v4351, %v4495
        %v5192 = vsel %vm1844, %v4262, %v4497
        %v5193 = vsel %vm1844, %v4352, %v4499
        %v5194 = vsel %vm1844, %v4265, %v4501
        %v5195 = vsel %vm1844, %v4353, %v4503
        %v5196 = vsel %vm1844, %v4268, %v4505
        %v5197 = vsel %vm1844, %v4354, %v4507
        %v5198 = vsel %vm1844, %v4271, %v4509
        %v5199 = vsel %vm1844, %v4355, %v4511
        %v5200 = vsel %vm1844, %v4274, %v4513
        %v5201 = vsel %vm1844, %v4356, %v4515
        %v5202 = vsel %vm1844, %v4277, %v4517
        %v5203 = vsel %vm1844, %v4357, %v4519
        %v5204 = vsel %vm1844, %v4280, %v4521
        %v5205 = vsel %vm1844, %v4358, %v4523
        %v5206 = vsel %vm1844, %v4283, %v4525
        %v5207 = vsel %vm1844, %v4359, %v4527
        %v5208 = vsel %vm1844, %v4286, %v4529
        %v5209 = vsel %vm1844, %v4360, %v4531
        %v5210 = vsel %vm1844, %v4289, %v4533
        %v5211 = vsel %vm1844, %v4361, %v4535
        %v5212 = vsel %vm1844, %v4292, %v4537
        %v5213 = vsel %vm1844, %v4362, %v4539
        %v5214 = vsel %vm1844, %v4295, %v4541
        %v5215 = vsel %vm1844, %v4363, %v4543
        %v5216 = vsel %vm1844, %v4298, %v4545
        %v5217 = vsel %vm3324, %v5187, %v4652
        %v5218 = vsel %vm3324, %v5188, %v4654
        %v5219 = vsel %vm3324, %v5189, %v4656
        %v5220 = vsel %vm3324, %v5190, %v4658
        %v5221 = vsel %vm3324, %v5191, %v4660
        %v5222 = vsel %vm3324, %v5192, %v4662
        %v5223 = vsel %vm3324, %v5193, %v4664
        %v5224 = vsel %vm3324, %v5194, %v4666
        %v5225 = vsel %vm3324, %v5195, %v4668
        %v5226 = vsel %vm3324, %v5196, %v4670
        %v5227 = vsel %vm3324, %v5197, %v4672
        %v5228 = vsel %vm3324, %v5198, %v4674
        %v5229 = vsel %vm3324, %v5199, %v4676
        %v5230 = vsel %vm3324, %v5200, %v4678
        %v5231 = vsel %vm3324, %v5201, %v4680
        %v5232 = vsel %vm3324, %v5202, %v4682
        %v5233 = vsel %vm3324, %v5203, %v4684
        %v5234 = vsel %vm3324, %v5204, %v4686
        %v5235 = vsel %vm3324, %v5205, %v4688
        %v5236 = vsel %vm3324, %v5206, %v4690
        %v5237 = vsel %vm3324, %v5207, %v4692
        %v5238 = vsel %vm3324, %v5208, %v4694
        %v5239 = vsel %vm3324, %v5209, %v4696
        %v5240 = vsel %vm3324, %v5210, %v4698
        %v5241 = vsel %vm3324, %v5211, %v4700
        %v5242 = vsel %vm3324, %v5212, %v4702
        %v5243 = vsel %vm3324, %v5213, %v4704
        %v5244 = vsel %vm3324, %v5214, %v4706
        %v5245 = vsel %vm3324, %v5215, %v4708
        %v5246 = vsel %vm3324, %v5216, %v4710
        %v5247 = vsel %vm3357, %v3325, %v4743
        %v5248 = vsel %vm3357, %v3326, %v4745
        %v5249 = vsel %vm3357, %v5217, %v4747
        %v5250 = vsel %vm3357, %v5218, %v4749
        %v5251 = vsel %vm3357, %v5219, %v4751
        %v5252 = vsel %vm3357, %v5220, %v4753
        %v5253 = vsel %vm3357, %v5221, %v4755
        %v5254 = vsel %vm3357, %v5222, %v4757
        %v5255 = vsel %vm3357, %v5223, %v4759
        %v5256 = vsel %vm3357, %v5224, %v4761
        %v5257 = vsel %vm3357, %v5225, %v4763
        %v5258 = vsel %vm3357, %v5226, %v4765
        %v5259 = vsel %vm3357, %v5227, %v4767
        %v5260 = vsel %vm3357, %v5228, %v4769
        %v5261 = vsel %vm3357, %v5229, %v4771
        %v5262 = vsel %vm3357, %v5230, %v4773
        %v5263 = vsel %vm3357, %v5231, %v4775
        %v5264 = vsel %vm3357, %v5232, %v4777
        %v5265 = vsel %vm3357, %v5233, %v4779
        %v5266 = vsel %vm3357, %v5234, %v4781
        %v5267 = vsel %vm3357, %v5235, %v4783
        %v5268 = vsel %vm3357, %v5236, %v4785
        %v5269 = vsel %vm3357, %v5237, %v4787
        %v5270 = vsel %vm3357, %v5238, %v4789
        %v5271 = vsel %vm3357, %v5239, %v4791
        %v5272 = vsel %vm3357, %v5240, %v4793
        %v5273 = vsel %vm3357, %v5241, %v4795
        %v5274 = vsel %vm3357, %v5242, %v4797
        %v5275 = vsel %vm3357, %v5243, %v4799
        %v5276 = vsel %vm3357, %v5244, %v4801
        %v5277 = vsel %vm3357, %v5245, %v4803
        %v5278 = vsel %vm3357, %v5246, %v4805
        %v5279 = vsel %vm1844, %v4413, %v4882
        %v5280 = vsel %vm1844, %v4415, %v4884
        %v5281 = vsel %vm1844, %v4418, %v4886
        %v5282 = vsel %vm1844, %v4420, %v4888
        %v5283 = vsel %vm1844, %v4423, %v4890
        %v5284 = vsel %vm1844, %v4425, %v4892
        %v5285 = vsel %vm1844, %v4428, %v4894
        %v5286 = vsel %vm1844, %v4430, %v4896
        %v5287 = vsel %vm1844, %v4433, %v4898
        %v5288 = vsel %vm1844, %v4435, %v4900
        %v5289 = vsel %vm1844, %v4438, %v4902
        %v5290 = vsel %vm1844, %v4440, %v4904
        %v5291 = vsel %vm1844, %v4443, %v4906
        %v5292 = vsel %vm1844, %v4445, %v4908
        %v5293 = vsel %vm1844, %v4448, %v4910
        %v5294 = vsel %vm1844, %v4450, %v4912
        %v5295 = vsel %vm1844, %v4453, %v4914
        %v5296 = vsel %vm1844, %v4455, %v4916
        %v5297 = vsel %vm1844, %v4458, %v4918
        %v5298 = vsel %vm1844, %v4460, %v4920
        %v5299 = vsel %vm1844, %v4463, %v4922
        %v5300 = vsel %vm1844, %v4465, %v4924
        %v5301 = vsel %vm1844, %v4468, %v4926
        %v5302 = vsel %vm1844, %v4470, %v4928
        %v5303 = vsel %vm1844, %v4473, %v4930
        %v5304 = vsel %vm1844, %v4475, %v4932
        %v5305 = vsel %vm1844, %v4478, %v4934
        %v5306 = vsel %vm1844, %v4480, %v4936
        %v5307 = vsel %vm1844, %v4483, %v4938
        %v5308 = vsel %vm1844, %v4485, %v4940
        %v5309 = vsel %vm1844, %v4841, %v4942
        %v5310 = vsel %vm1844, %v4843, %v4944
        %v5311 = vsel %vm3324, %v5279, %v4978
        %v5312 = vsel %vm3324, %v5280, %v4980
        %v5313 = vsel %vm3324, %v5281, %v4982
        %v5314 = vsel %vm3324, %v5282, %v4984
        %v5315 = vsel %vm3324, %v5283, %v4986
        %v5316 = vsel %vm3324, %v5284, %v4988
        %v5317 = vsel %vm3324, %v5285, %v4990
        %v5318 = vsel %vm3324, %v5286, %v4992
        %v5319 = vsel %vm3324, %v5287, %v4994
        %v5320 = vsel %vm3324, %v5288, %v4996
        %v5321 = vsel %vm3324, %v5289, %v4998
        %v5322 = vsel %vm3324, %v5290, %v5000
        %v5323 = vsel %vm3324, %v5291, %v5002
        %v5324 = vsel %vm3324, %v5292, %v5004
        %v5325 = vsel %vm3324, %v5293, %v5006
        %v5326 = vsel %vm3324, %v5294, %v5008
        %v5327 = vsel %vm3324, %v5295, %v5010
        %v5328 = vsel %vm3324, %v5296, %v5012
        %v5329 = vsel %vm3324, %v5297, %v5014
        %v5330 = vsel %vm3324, %v5298, %v5016
        %v5331 = vsel %vm3324, %v5299, %v5018
        %v5332 = vsel %vm3324, %v5300, %v5020
        %v5333 = vsel %vm3324, %v5301, %v5022
        %v5334 = vsel %vm3324, %v5302, %v5024
        %v5335 = vsel %vm3324, %v5303, %v5026
        %v5336 = vsel %vm3324, %v5304, %v5028
        %v5337 = vsel %vm3324, %v5305, %v5030
        %v5338 = vsel %vm3324, %v5306, %v5032
        %v5339 = vsel %vm3324, %v5307, %v5034
        %v5340 = vsel %vm3324, %v5308, %v5036
        %v5341 = vsel %vm3324, %v5309, %v3129
        %v5342 = vsel %vm3324, %v5310, %v3131
        %v5343 = vsel %vm3357, %v5311, %v5068
        %v5344 = vsel %vm3357, %v5312, %v5070
        %v5345 = vsel %vm3357, %v5313, %v5072
        %v5346 = vsel %vm3357, %v5314, %v5074
        %v5347 = vsel %vm3357, %v5315, %v5076
        %v5348 = vsel %vm3357, %v5316, %v5078
        %v5349 = vsel %vm3357, %v5317, %v5080
        %v5350 = vsel %vm3357, %v5318, %v5082
        %v5351 = vsel %vm3357, %v5319, %v5084
        %v5352 = vsel %vm3357, %v5320, %v5086
        %v5353 = vsel %vm3357, %v5321, %v5088
        %v5354 = vsel %vm3357, %v5322, %v5090
        %v5355 = vsel %vm3357, %v5323, %v5092
        %v5356 = vsel %vm3357, %v5324, %v5094
        %v5357 = vsel %vm3357, %v5325, %v5096
        %v5358 = vsel %vm3357, %v5326, %v5098
        %v5359 = vsel %vm3357, %v5327, %v5100
        %v5360 = vsel %vm3357, %v5328, %v5102
        %v5361 = vsel %vm3357, %v5329, %v5104
        %v5362 = vsel %vm3357, %v5330, %v5106
        %v5363 = vsel %vm3357, %v5331, %v5108
        %v5364 = vsel %vm3357, %v5332, %v5110
        %v5365 = vsel %vm3357, %v5333, %v5112
        %v5366 = vsel %vm3357, %v5334, %v5114
        %v5367 = vsel %vm3357, %v5335, %v5116
        %v5368 = vsel %vm3357, %v5336, %v5118
        %v5369 = vsel %vm3357, %v5337, %v5120
        %v5370 = vsel %vm3357, %v5338, %v5122
        %v5371 = vsel %vm3357, %v5339, %v5124
        %v5372 = vsel %vm3357, %v5340, %v5126
        %v5373 = vsel %vm3357, %v5341, %v3225
        %v5374 = vsel %vm3357, %v5342, %v3227
        %v5375 = vpack.c.bf16 %v5248, %v5247
        %v5376 = vpack.c.bf16 %v5344, %v5343
        %v5377 = vpack.c.bf16 %v4585, %v4583
        %v5378 = vpack.c.bf16 %v5250, %v5249
        %v5379 = vpack.c.bf16 %v5346, %v5345
        %v5380 = vpack.c.bf16 %v4590, %v4588
        %v5381 = vpack.c.bf16 %v5252, %v5251
        %v5382 = vpack.c.bf16 %v5348, %v5347
        %v5383 = vpack.c.bf16 %v4595, %v4593
        %v5384 = vpack.c.bf16 %v5254, %v5253
        %v5385 = vpack.c.bf16 %v5350, %v5349
        %v5386 = vpack.c.bf16 %v4600, %v4598
        %v5387 = vpack.c.bf16 %v5256, %v5255
        %v5388 = vpack.c.bf16 %v5352, %v5351
        %v5389 = vpack.c.bf16 %v4605, %v4603
        %v5390 = vpack.c.bf16 %v5258, %v5257
        %v5391 = vpack.c.bf16 %v5354, %v5353
        %v5392 = vpack.c.bf16 %v4610, %v4608
        %v5393 = vpack.c.bf16 %v5260, %v5259
        %v5394 = vpack.c.bf16 %v5356, %v5355
        %v5395 = vpack.c.bf16 %v4615, %v4613
        %v5396 = vpack.c.bf16 %v5262, %v5261
        %v5397 = vpack.c.bf16 %v5358, %v5357
        %v5398 = vpack.c.bf16 %v4620, %v4618
        %v5399 = vpack.c.bf16 %v5264, %v5263
        %v5400 = vpack.c.bf16 %v5360, %v5359
        %v5401 = vpack.c.bf16 %v4625, %v4623
        %v5402 = vpack.c.bf16 %v5266, %v5265
        %v5403 = vpack.c.bf16 %v5362, %v5361
        %v5404 = vpack.c.bf16 %v4630, %v4628
        %v5405 = vpack.c.bf16 %v5268, %v5267
        %v5406 = vpack.c.bf16 %v5364, %v5363
        %v5407 = vpack.c.bf16 %v4635, %v4633
        %v5408 = vpack.c.bf16 %v5270, %v5269
        %v5409 = vpack.c.bf16 %v5366, %v5365
        %v5410 = vpack.c.bf16 %v4640, %v4638
        %v5411 = vpack.c.bf16 %v5272, %v5271
        %v5412 = vpack.c.bf16 %v5368, %v5367
        %v5413 = vpack.c.bf16 %v4645, %v4643
        %v5414 = vpack.c.bf16 %v5274, %v5273
        %v5415 = vpack.c.bf16 %v5370, %v5369
        %v5416 = vpack.c.bf16 %v4650, %v4648
        %v5417 = vpack.c.bf16 %v5276, %v5275
        %v5418 = vpack.c.bf16 %v5372, %v5371
        %v5419 = vpack.c.bf16 %v4880, %v4878
        %v5420 = vpack.c.bf16 %v5278, %v5277
        %v5421 = vpack.c.bf16 %v5374, %v5373
        %v5422 = vld [vmem:[%s7] sm:$0xf]
        %v5423 = vld [vmem:[%s7 + $0x4] sm:$0xf]
        %v5424 = vld [vmem:[%s7 + $0x8] sm:$0xf]
        %v5425 = vld [vmem:[%s7 + $0xc] sm:$0xf]
        %v5426 = vld [vmem:[%s7 + $0x10] sm:$0xf]
        %v5427 = vld [vmem:[%s7 + $0x14] sm:$0xf]
        %v5428 = vld [vmem:[%s7 + $0x18] sm:$0xf]
        %v5429 = vld [vmem:[%s7 + $0x1c] sm:$0xf]
        %v5430 = vld [vmem:[%s7 + $0x20] sm:$0xf]
        %v5431 = vld [vmem:[%s7 + $0x24] sm:$0xf]
        %v5432 = vld [vmem:[%s7 + $0x28] sm:$0xf]
        %v5433 = vld [vmem:[%s7 + $0x2c] sm:$0xf]
        %v5434 = vld [vmem:[%s7 + $0x30] sm:$0xf]
        %v5435 = vld [vmem:[%s7 + $0x34] sm:$0xf]
        %v5436 = vld [vmem:[%s7 + $0x38] sm:$0xf]
        %v5437 = vld [vmem:[%s7 + $0x3c] sm:$0xf]
        %v5438 = vld [vmem:[%s7 + $0x40] sm:$0xf]
        %v5439 = vld [vmem:[%s7 + $0x44] sm:$0xf]
        %v5440 = vld [vmem:[%s7 + $0x48] sm:$0xf]
        %v5441 = vld [vmem:[%s7 + $0x4c] sm:$0xf]
        %v5442 = vld [vmem:[%s7 + $0x50] sm:$0xf]
        %v5443 = vld [vmem:[%s7 + $0x54] sm:$0xf]
        %v5444 = vld [vmem:[%s7 + $0x58] sm:$0xf]
        %v5445 = vld [vmem:[%s7 + $0x5c] sm:$0xf]
        %v5446 = vld [vmem:[%s7 + $0x60] sm:$0xf]
        %v5447 = vld [vmem:[%s7 + $0x64] sm:$0xf]
        %v5448 = vld [vmem:[%s7 + $0x68] sm:$0xf]
        %v5449 = vld [vmem:[%s7 + $0x6c] sm:$0xf]
        %v5450 = vld [vmem:[%s7 + $0x70] sm:$0xf]
        %v5451 = vld [vmem:[%s7 + $0x74] sm:$0xf]
        %v5452 = vld [vmem:[%s7 + $0x78] sm:$0xf]
        %v5453 = vld [vmem:[%s7 + $0x7c] sm:$0xf]
        %v5454 = vld [vmem:[%s7 + $0x80] sm:$0xf]
        %v5455 = vld [vmem:[%s7 + $0x84] sm:$0xf]
        %v5456 = vld [vmem:[%s7 + $0x88] sm:$0xf]
        %v5457 = vld [vmem:[%s7 + $0x8c] sm:$0xf]
        %v5494 = vunpack.c.l.b16 %v5422
        %v5495 = vunpack.c.l.b16 %v5423
        %v5496 = vunpack.c.l.b16 %v5424
        %v5497 = vunpack.c.l.b16 %v5425
        %v5498 = vunpack.c.l.b16 %v5426
        %v5499 = vunpack.c.l.b16 %v5427
        %v5500 = vunpack.c.l.b16 %v5428
        %v5501 = vunpack.c.l.b16 %v5429
        %v5502 = vunpack.c.l.b16 %v5430
        %v5503 = vunpack.c.l.b16 %v5431
        %v5504 = vunpack.c.l.b16 %v5432
        %v5505 = vunpack.c.l.b16 %v5433
        %v5506 = vunpack.c.l.b16 %v5434
        %v5507 = vunpack.c.l.b16 %v5435
        %v5508 = vunpack.c.l.b16 %v5436
        %v5509 = vunpack.c.l.b16 %v5437
        %v5510 = vunpack.c.l.b16 %v5438
        %v5511 = vunpack.c.l.b16 %v5439
        %v5512 = vunpack.c.l.b16 %v5440
        %v5513 = vunpack.c.l.b16 %v5441
        %v5514 = vunpack.c.l.b16 %v5442
        %v5515 = vunpack.c.l.b16 %v5443
        %v5516 = vunpack.c.l.b16 %v5444
        %v5517 = vunpack.c.l.b16 %v5445
        %v5518 = vunpack.c.l.b16 %v5446
        %v5519 = vunpack.c.l.b16 %v5447
        %v5520 = vunpack.c.l.b16 %v5448
        %v5521 = vunpack.c.l.b16 %v5449
        %v5522 = vunpack.c.l.b16 %v5450
        %v5523 = vunpack.c.l.b16 %v5451
        %v5524 = vunpack.c.l.b16 %v5452
        %v5525 = vunpack.c.l.b16 %v5453
        %v5526 = vunpack.c.l.b16 %v5454
        %v5527 = vunpack.c.l.b16 %v5455
        %v5528 = vunpack.c.l.b16 %v5456
        %v5529 = vunpack.c.l.b16 %v5457
        %v5530 = vpack.c.b16 %v5495, %v5494
        %v5531 = vpack.c.b16 %v5497, %v5496
        %v5532 = vpack.c.b16 %v5499, %v5498
        %v5533 = vpack.c.b16 %v5501, %v5500
        %v5534 = vpack.c.b16 %v5503, %v5502
        %v5535 = vpack.c.b16 %v5505, %v5504
        %v5536 = vpack.c.b16 %v5507, %v5506
        %v5537 = vpack.c.b16 %v5509, %v5508
        %v5538 = vpack.c.b16 %v5511, %v5510
        %v5539 = vpack.c.b16 %v5513, %v5512
        %v5540 = vpack.c.b16 %v5515, %v5514
        %v5541 = vpack.c.b16 %v5517, %v5516
        %v5542 = vpack.c.b16 %v5519, %v5518
        %v5543 = vpack.c.b16 %v5521, %v5520
        %v5544 = vpack.c.b16 %v5523, %v5522
        %v5545 = vpack.c.b16 %v5525, %v5524
        %v5546 = vpack.c.b16 %v5527, %v5526
        %v5547 = vpack.c.b16 %v5529, %v5528
        %v5567 = vsel %vm1844, %v5377, 0
        %v5570 = vsel %vm1844, %v5380, 0
        %v5573 = vsel %vm1844, %v5383, 0
        %v5576 = vsel %vm1844, %v5386, 0
        %v5579 = vsel %vm1844, %v5389, 0
        %v5582 = vsel %vm1844, %v5392, 0
        %v5585 = vsel %vm1844, %v5395, 0
        %v5588 = vsel %vm1844, %v5398, 0
        %v5591 = vsel %vm1844, %v5401, 0
        %v5594 = vsel %vm1844, %v5404, 0
        %v5597 = vsel %vm1844, %v5407, 0
        %v5600 = vsel %vm1844, %v5410, 0
        %v5603 = vsel %vm1844, %v5413, 0
        %v5606 = vsel %vm1844, %v5416, 0
        %v5609 = vsel %vm1844, %v5419, 0
        %5611 = vmatprep.subr.bf16.mxu0 0
        %5612 = vmatpush1.bf16.msra.mxu0 %v5530
        %5613 = vmatprep.subr.bf16.mxu0 0
        %5614 = vmatpush1.bf16.msra.mxu0 %v5531
        %5615 = vmatprep.subr.bf16.mxu0 0
        %5616 = vmatpush1.bf16.msra.mxu0 %v5532
        %5617 = vmatprep.subr.bf16.mxu0 0
        %5618 = vmatpush1.bf16.msra.mxu0 %v5533
        %5619 = vmatprep.subr.bf16.mxu0 0
        %5620 = vmatpush1.bf16.msra.mxu0 %v5534
        %5621 = vmatprep.subr.bf16.mxu0 0
        %5622 = vmatpush1.bf16.msra.mxu0 %v5535
        %5623 = vmatprep.subr.bf16.mxu0 0
        %5624 = vmatpush1.bf16.msra.mxu0 %v5536
        %5625 = vmatprep.subr.bf16.mxu0 0
        %5626 = vmatpush1.bf16.msra.mxu0 %v5537
        %5627 = vmatprep.subr.bf16.mxu0 0
        %5628 = vmatpush1.bf16.msra.mxu0 %v5538
        %5629 = vmatprep.subr.bf16.mxu0 0
        %5630 = vmatpush1.bf16.msra.mxu0 %v5539
        %5631 = vmatprep.subr.bf16.mxu0 0
        %5632 = vmatpush1.bf16.msra.mxu0 %v5540
        %5633 = vmatprep.subr.bf16.mxu0 0
        %5634 = vmatpush1.bf16.msra.mxu0 %v5541
        %5635 = vmatprep.subr.bf16.mxu0 0
        %5636 = vmatpush1.bf16.msra.mxu0 %v5542
        %5637 = vmatprep.subr.bf16.mxu0 0
        %5638 = vmatpush1.bf16.msra.mxu0 %v5543
        %5639 = vmatprep.subr.bf16.mxu0 0
        %5640 = vmatpush1.bf16.msra.mxu0 %v5544
        %5641 = vmatprep.subr.bf16.mxu0 0
        %5642 = vmatpush1.bf16.msra.mxu0 %v5545
        %5643 = vmatprep.mubr.bf16.mxu0 %v5376
        %5644 = vmatmul.mubr.bf16.gmra.mrb[0].mxu0 %v5375
        %v5645 = vpop.f32.mrb[0].mxu0
        %v5646 = vadd.f32 0.0, %v5645
        %v5647 = vpop.f32.mrb[0].mxu0
        %v5648 = vpop.f32.mrb[0].mxu0
        %v5649 = vadd.f32 0.0, %v5648
        %v5650 = vpop.f32.mrb[0].mxu0
        %5651 = vmatprep.mubr.bf16.mxu0 %v5379
        %5652 = vmatmul.mubr.bf16.gmra.mrb[0].mxu0 %v5378
        %v5653 = vpop.f32.mrb[0].mxu0
        %v5654 = vadd.f32 0.0, %v5653
        %v5655 = vpop.f32.mrb[0].mxu0
        %v5656 = vpop.f32.mrb[0].mxu0
        %v5657 = vadd.f32 0.0, %v5656
        %v5658 = vpop.f32.mrb[0].mxu0
        %5659 = vmatprep.mubr.bf16.mxu0 %v5382
        %5660 = vmatmul.mubr.bf16.gmra.mrb[0].mxu0 %v5381
        %v5661 = vpop.f32.mrb[0].mxu0
        %v5662 = vadd.f32 0.0, %v5661
        %v5663 = vpop.f32.mrb[0].mxu0
        %v5664 = vpop.f32.mrb[0].mxu0
        %v5665 = vadd.f32 0.0, %v5664
        %v5666 = vpop.f32.mrb[0].mxu0
        %5667 = vmatprep.mubr.bf16.mxu0 %v5385
        %5668 = vmatmul.mubr.bf16.gmra.mrb[0].mxu0 %v5384
        %v5669 = vpop.f32.mrb[0].mxu0
        %v5670 = vadd.f32 0.0, %v5669
        %v5671 = vpop.f32.mrb[0].mxu0
        %v5672 = vpop.f32.mrb[0].mxu0
        %v5673 = vadd.f32 0.0, %v5672
        %v5674 = vpop.f32.mrb[0].mxu0
        %5675 = vmatprep.mubr.bf16.mxu0 %v5388
        %5676 = vmatmul.mubr.bf16.gmra.mrb[0].mxu0 %v5387
        %v5677 = vpop.f32.mrb[0].mxu0
        %v5678 = vadd.f32 0.0, %v5677
        %v5679 = vpop.f32.mrb[0].mxu0
        %v5680 = vpop.f32.mrb[0].mxu0
        %v5681 = vadd.f32 0.0, %v5680
        %v5682 = vpop.f32.mrb[0].mxu0
        %5683 = vmatprep.mubr.bf16.mxu0 %v5391
        %5684 = vmatmul.mubr.bf16.gmra.mrb[0].mxu0 %v5390
        %v5685 = vpop.f32.mrb[0].mxu0
        %v5686 = vadd.f32 0.0, %v5685
        %v5687 = vpop.f32.mrb[0].mxu0
        %v5688 = vpop.f32.mrb[0].mxu0
        %v5689 = vadd.f32 0.0, %v5688
        %v5690 = vpop.f32.mrb[0].mxu0
        %5691 = vmatprep.mubr.bf16.mxu0 %v5394
        %5692 = vmatmul.mubr.bf16.gmra.mrb[0].mxu0 %v5393
        %v5693 = vpop.f32.mrb[0].mxu0
        %v5694 = vadd.f32 0.0, %v5693
        %v5695 = vpop.f32.mrb[0].mxu0
        %v5696 = vpop.f32.mrb[0].mxu0
        %v5697 = vadd.f32 0.0, %v5696
        %v5698 = vpop.f32.mrb[0].mxu0
        %5699 = vmatprep.mubr.bf16.mxu0 %v5397
        %5700 = vmatmul.mubr.bf16.gmra.mrb[0].mxu0 %v5396
        %v5701 = vpop.f32.mrb[0].mxu0
        %v5702 = vadd.f32 0.0, %v5701
        %v5703 = vpop.f32.mrb[0].mxu0
        %v5704 = vpop.f32.mrb[0].mxu0
        %v5705 = vadd.f32 0.0, %v5704
        %v5706 = vpop.f32.mrb[0].mxu0
        %5707 = vmatprep.mubr.bf16.mxu0 %v5400
        %5708 = vmatmul.mubr.bf16.gmra.mrb[0].mxu0 %v5399
        %v5709 = vpop.f32.mrb[0].mxu0
        %v5710 = vadd.f32 0.0, %v5709
        %v5711 = vpop.f32.mrb[0].mxu0
        %v5712 = vpop.f32.mrb[0].mxu0
        %v5713 = vadd.f32 0.0, %v5712
        %v5714 = vpop.f32.mrb[0].mxu0
        %5715 = vmatprep.mubr.bf16.mxu0 %v5403
        %5716 = vmatmul.mubr.bf16.gmra.mrb[0].mxu0 %v5402
        %v5717 = vpop.f32.mrb[0].mxu0
        %v5718 = vadd.f32 0.0, %v5717
        %v5719 = vpop.f32.mrb[0].mxu0
        %v5720 = vpop.f32.mrb[0].mxu0
        %v5721 = vadd.f32 0.0, %v5720
        %v5722 = vpop.f32.mrb[0].mxu0
        %5723 = vmatprep.mubr.bf16.mxu0 %v5406
        %5724 = vmatmul.mubr.bf16.gmra.mrb[0].mxu0 %v5405
        %v5725 = vpop.f32.mrb[0].mxu0
        %v5726 = vadd.f32 0.0, %v5725
        %v5727 = vpop.f32.mrb[0].mxu0
        %v5728 = vpop.f32.mrb[0].mxu0
        %v5729 = vadd.f32 0.0, %v5728
        %v5730 = vpop.f32.mrb[0].mxu0
        %5731 = vmatprep.mubr.bf16.mxu0 %v5409
        %5732 = vmatmul.mubr.bf16.gmra.mrb[0].mxu0 %v5408
        %v5733 = vpop.f32.mrb[0].mxu0
        %v5734 = vadd.f32 0.0, %v5733
        %v5735 = vpop.f32.mrb[0].mxu0
        %v5736 = vpop.f32.mrb[0].mxu0
        %v5737 = vadd.f32 0.0, %v5736
        %v5738 = vpop.f32.mrb[0].mxu0
        %5739 = vmatprep.mubr.bf16.mxu0 %v5412
        %5740 = vmatmul.mubr.bf16.gmra.mrb[0].mxu0 %v5411
        %v5741 = vpop.f32.mrb[0].mxu0
        %v5742 = vadd.f32 0.0, %v5741
        %v5743 = vpop.f32.mrb[0].mxu0
        %v5744 = vpop.f32.mrb[0].mxu0
        %v5745 = vadd.f32 0.0, %v5744
        %v5746 = vpop.f32.mrb[0].mxu0
        %5747 = vmatprep.mubr.bf16.mxu0 %v5415
        %5748 = vmatmul.mubr.bf16.gmra.mrb[0].mxu0 %v5414
        %v5749 = vpop.f32.mrb[0].mxu0
        %v5750 = vadd.f32 0.0, %v5749
        %v5751 = vpop.f32.mrb[0].mxu0
        %v5752 = vpop.f32.mrb[0].mxu0
        %v5753 = vadd.f32 0.0, %v5752
        %v5754 = vpop.f32.mrb[0].mxu0
        %5755 = vmatprep.mubr.bf16.mxu0 %v5418
        %5756 = vmatmul.mubr.bf16.gmra.mrb[0].mxu0 %v5417
        %v5757 = vpop.f32.mrb[0].mxu0
        %v5758 = vadd.f32 0.0, %v5757
        %v5759 = vpop.f32.mrb[0].mxu0
        %v5760 = vpop.f32.mrb[0].mxu0
        %v5761 = vadd.f32 0.0, %v5760
        %v5762 = vpop.f32.mrb[0].mxu0
        %5763 = vmatprep.mubr.bf16.mxu0 %v5421
        %5764 = vmatmul.mubr.bf16.gmra.mrb[0].mxu0 %v5420
        %v5765 = vpop.f32.mrb[0].mxu0
        %v5766 = vadd.f32 0.0, %v5765
        %v5767 = vpop.f32.mrb[0].mxu0
        %v5768 = vpop.f32.mrb[0].mxu0
        %v5769 = vadd.f32 0.0, %v5768
        %v5770 = vpop.f32.mrb[0].mxu0
        %5771 = vdwg.mxu0
        %5772 = vmatprep.subr.bf16.mxu0 0
        %5773 = vmatpush1.bf16.msra.mxu0 %v5546
        %5774 = vmatprep.subr.bf16.mxu0 0
        %5775 = vmatpush1.bf16.msra.mxu0 %v5547
        %5776 = vmatprep.subr.bf16.mxu0 0
        %5777 = vmatpush1.bf16.msra.mxu0 0
        %5778 = vmatprep.subr.bf16.mxu0 0
        %5779 = vmatpush1.bf16.msra.mxu0 0
        %5780 = vmatprep.subr.bf16.mxu0 0
        %5781 = vmatpush1.bf16.msra.mxu0 0
        %5782 = vmatprep.subr.bf16.mxu0 0
        %5783 = vmatpush1.bf16.msra.mxu0 0
        %5784 = vmatprep.subr.bf16.mxu0 0
        %5785 = vmatpush1.bf16.msra.mxu0 0
        %5786 = vmatprep.subr.bf16.mxu0 0
        %5787 = vmatpush1.bf16.msra.mxu0 0
        %5788 = vmatprep.subr.bf16.mxu0 0
        %5789 = vmatpush1.bf16.msra.mxu0 0
        %5790 = vmatprep.subr.bf16.mxu0 0
        %5791 = vmatpush1.bf16.msra.mxu0 0
        %5792 = vmatprep.subr.bf16.mxu0 0
        %5793 = vmatpush1.bf16.msra.mxu0 0
        %5794 = vmatprep.subr.bf16.mxu0 0
        %5795 = vmatpush1.bf16.msra.mxu0 0
        %5796 = vmatprep.subr.bf16.mxu0 0
        %5797 = vmatpush1.bf16.msra.mxu0 0
        %5798 = vmatprep.subr.bf16.mxu0 0
        %5799 = vmatpush1.bf16.msra.mxu0 0
        %5800 = vmatprep.subr.bf16.mxu0 0
        %5801 = vmatpush1.bf16.msra.mxu0 0
        %5802 = vmatprep.subr.bf16.mxu0 0
        %5803 = vmatpush1.bf16.msra.mxu0 0
        %5804 = vmatprep.mubr.bf16.mxu0 0
        %5805 = vmatmul.mubr.bf16.gmra.mrb[0].mxu0 %v5567
        %v5806 = vpop.f32.mrb[0].mxu0
        %v5807 = vadd.f32 %v5646, %v5806
        %v5808 = vpop.f32.mrb[0].mxu0
        %v5809 = vpop.f32.mrb[0].mxu0
        %v5810 = vadd.f32 %v5649, %v5809
        %v5811 = vpop.f32.mrb[0].mxu0
        %5812 = vmatprep.mubr.bf16.mxu0 0
        %5813 = vmatmul.mubr.bf16.gmra.mrb[0].mxu0 %v5570
        %v5814 = vpop.f32.mrb[0].mxu0
        %v5815 = vadd.f32 %v5654, %v5814
        %v5816 = vpop.f32.mrb[0].mxu0
        %v5817 = vpop.f32.mrb[0].mxu0
        %v5818 = vadd.f32 %v5657, %v5817
        %v5819 = vpop.f32.mrb[0].mxu0
        %5820 = vmatprep.mubr.bf16.mxu0 0
        %5821 = vmatmul.mubr.bf16.gmra.mrb[0].mxu0 %v5573
        %v5822 = vpop.f32.mrb[0].mxu0
        %v5823 = vadd.f32 %v5662, %v5822
        %v5824 = vpop.f32.mrb[0].mxu0
        %v5825 = vpop.f32.mrb[0].mxu0
        %v5826 = vadd.f32 %v5665, %v5825
        %v5827 = vpop.f32.mrb[0].mxu0
        %5828 = vmatprep.mubr.bf16.mxu0 0
        %5829 = vmatmul.mubr.bf16.gmra.mrb[0].mxu0 %v5576
        %v5830 = vpop.f32.mrb[0].mxu0
        %v5831 = vadd.f32 %v5670, %v5830
        %v5832 = vpop.f32.mrb[0].mxu0
        %v5833 = vpop.f32.mrb[0].mxu0
        %v5834 = vadd.f32 %v5673, %v5833
        %v5835 = vpop.f32.mrb[0].mxu0
        %5836 = vmatprep.mubr.bf16.mxu0 0
        %5837 = vmatmul.mubr.bf16.gmra.mrb[0].mxu0 %v5579
        %v5838 = vpop.f32.mrb[0].mxu0
        %v5839 = vadd.f32 %v5678, %v5838
        %v5840 = vpop.f32.mrb[0].mxu0
        %v5841 = vpop.f32.mrb[0].mxu0
        %v5842 = vadd.f32 %v5681, %v5841
        %v5843 = vpop.f32.mrb[0].mxu0
        %5844 = vmatprep.mubr.bf16.mxu0 0
        %5845 = vmatmul.mubr.bf16.gmra.mrb[0].mxu0 %v5582
        %v5846 = vpop.f32.mrb[0].mxu0
        %v5847 = vadd.f32 %v5686, %v5846
        %v5848 = vpop.f32.mrb[0].mxu0
        %v5849 = vpop.f32.mrb[0].mxu0
        %v5850 = vadd.f32 %v5689, %v5849
        %v5851 = vpop.f32.mrb[0].mxu0
        %5852 = vmatprep.mubr.bf16.mxu0 0
        %5853 = vmatmul.mubr.bf16.gmra.mrb[0].mxu0 %v5585
        %v5854 = vpop.f32.mrb[0].mxu0
        %v5855 = vadd.f32 %v5694, %v5854
        %v5856 = vpop.f32.mrb[0].mxu0
        %v5857 = vpop.f32.mrb[0].mxu0
        %v5858 = vadd.f32 %v5697, %v5857
        %v5859 = vpop.f32.mrb[0].mxu0
        %5860 = vmatprep.mubr.bf16.mxu0 0
        %5861 = vmatmul.mubr.bf16.gmra.mrb[0].mxu0 %v5588
        %v5862 = vpop.f32.mrb[0].mxu0
        %v5863 = vadd.f32 %v5702, %v5862
        %v5864 = vpop.f32.mrb[0].mxu0
        %v5865 = vpop.f32.mrb[0].mxu0
        %v5866 = vadd.f32 %v5705, %v5865
        %v5867 = vpop.f32.mrb[0].mxu0
        %5868 = vmatprep.mubr.bf16.mxu0 0
        %5869 = vmatmul.mubr.bf16.gmra.mrb[0].mxu0 %v5591
        %v5870 = vpop.f32.mrb[0].mxu0
        %v5871 = vadd.f32 %v5710, %v5870
        %v5872 = vpop.f32.mrb[0].mxu0
        %v5873 = vpop.f32.mrb[0].mxu0
        %v5874 = vadd.f32 %v5713, %v5873
        %v5875 = vpop.f32.mrb[0].mxu0
        %5876 = vmatprep.mubr.bf16.mxu0 0
        %5877 = vmatmul.mubr.bf16.gmra.mrb[0].mxu0 %v5594
        %v5878 = vpop.f32.mrb[0].mxu0
        %v5879 = vadd.f32 %v5718, %v5878
        %v5880 = vpop.f32.mrb[0].mxu0
        %v5881 = vpop.f32.mrb[0].mxu0
        %v5882 = vadd.f32 %v5721, %v5881
        %v5883 = vpop.f32.mrb[0].mxu0
        %5884 = vmatprep.mubr.bf16.mxu0 0
        %5885 = vmatmul.mubr.bf16.gmra.mrb[0].mxu0 %v5597
        %v5886 = vpop.f32.mrb[0].mxu0
        %v5887 = vadd.f32 %v5726, %v5886
        %v5888 = vpop.f32.mrb[0].mxu0
        %v5889 = vpop.f32.mrb[0].mxu0
        %v5890 = vadd.f32 %v5729, %v5889
        %v5891 = vpop.f32.mrb[0].mxu0
        %5892 = vmatprep.mubr.bf16.mxu0 0
        %5893 = vmatmul.mubr.bf16.gmra.mrb[0].mxu0 %v5600
        %v5894 = vpop.f32.mrb[0].mxu0
        %v5895 = vadd.f32 %v5734, %v5894
        %v5896 = vpop.f32.mrb[0].mxu0
        %v5897 = vpop.f32.mrb[0].mxu0
        %v5898 = vadd.f32 %v5737, %v5897
        %v5899 = vpop.f32.mrb[0].mxu0
        %5900 = vmatprep.mubr.bf16.mxu0 0
        %5901 = vmatmul.mubr.bf16.gmra.mrb[0].mxu0 %v5603
        %v5902 = vpop.f32.mrb[0].mxu0
        %v5903 = vadd.f32 %v5742, %v5902
        %v5904 = vpop.f32.mrb[0].mxu0
        %v5905 = vpop.f32.mrb[0].mxu0
        %v5906 = vadd.f32 %v5745, %v5905
        %v5907 = vpop.f32.mrb[0].mxu0
        %5908 = vmatprep.mubr.bf16.mxu0 0
        %5909 = vmatmul.mubr.bf16.gmra.mrb[0].mxu0 %v5606
        %v5910 = vpop.f32.mrb[0].mxu0
        %v5911 = vadd.f32 %v5750, %v5910
        %v5912 = vpop.f32.mrb[0].mxu0
        %v5913 = vpop.f32.mrb[0].mxu0
        %v5914 = vadd.f32 %v5753, %v5913
        %v5915 = vpop.f32.mrb[0].mxu0
        %5916 = vmatprep.mubr.bf16.mxu0 0
        %5917 = vmatmul.mubr.bf16.gmra.mrb[0].mxu0 %v5609
        %v5918 = vpop.f32.mrb[0].mxu0
        %v5919 = vadd.f32 %v5758, %v5918
        %v5920 = vpop.f32.mrb[0].mxu0
        %v5921 = vpop.f32.mrb[0].mxu0
        %v5922 = vadd.f32 %v5761, %v5921
        %v5923 = vpop.f32.mrb[0].mxu0
        %5924 = vmatprep.mubr.bf16.mxu0 0
        %5925 = vmatmul.mubr.bf16.gmra.mrb[0].mxu0 %v3724
        %v5926 = vpop.f32.mrb[0].mxu0
        %v5927 = vadd.f32 %v5766, %v5926
        %v5928 = vpop.f32.mrb[0].mxu0
        %v5929 = vpop.f32.mrb[0].mxu0
        %v5930 = vadd.f32 %v5769, %v5929
        %v5931 = vpop.f32.mrb[0].mxu0
        %5932 = vdwg.mxu0
        %v5933 = vld [vmem:[%s8] sm:$0x1]
        %v5935 = vlaneseq
        %v5936 = vshrl.u32 %v5935, 7
        %v5937 = vsub.s32 0, %v5936
        %v5938 = vrot.slane %v5933, %v5937
        %v5940 = vmul.f32 %v5807, %v5938
        %v5941 = vmul.f32 %v5810, %v5938
        %v5942 = vmul.f32 %v5815, %v5938
        %v5943 = vmul.f32 %v5818, %v5938
        %v5944 = vmul.f32 %v5823, %v5938
        %v5945 = vmul.f32 %v5826, %v5938
        %v5946 = vmul.f32 %v5831, %v5938
        %v5947 = vmul.f32 %v5834, %v5938
        %v5948 = vmul.f32 %v5839, %v5938
        %v5949 = vmul.f32 %v5842, %v5938
        %v5950 = vmul.f32 %v5847, %v5938
        %v5951 = vmul.f32 %v5850, %v5938
        %v5952 = vmul.f32 %v5855, %v5938
        %v5953 = vmul.f32 %v5858, %v5938
        %v5954 = vmul.f32 %v5863, %v5938
        %v5955 = vmul.f32 %v5866, %v5938
        %v5956 = vmul.f32 %v5871, %v5938
        %v5957 = vmul.f32 %v5874, %v5938
        %v5958 = vmul.f32 %v5879, %v5938
        %v5959 = vmul.f32 %v5882, %v5938
        %v5960 = vmul.f32 %v5887, %v5938
        %v5961 = vmul.f32 %v5890, %v5938
        %v5962 = vmul.f32 %v5895, %v5938
        %v5963 = vmul.f32 %v5898, %v5938
        %v5964 = vmul.f32 %v5903, %v5938
        %v5965 = vmul.f32 %v5906, %v5938
        %v5966 = vmul.f32 %v5911, %v5938
        %v5967 = vmul.f32 %v5914, %v5938
        %v5968 = vmul.f32 %v5919, %v5938
        %v5969 = vmul.f32 %v5922, %v5938
        %v5970 = vmul.f32 %v5927, %v5938
        %v5971 = vmul.f32 %v5930, %v5938
        %v5972 = vld [vmem:[%s9] sm:$0x1]
        %v5974 = vlaneseq
        %v5975 = vshrl.u32 %v5974, 7
        %v5976 = vsub.s32 0, %v5975
        %v5977 = vrot.slane %v5972, %v5976
        %v5979 = vadd.f32 %v5940, %v5977
        %v5980 = vadd.f32 %v5941, %v5977
        %v5981 = vadd.f32 %v5942, %v5977
        %v5982 = vadd.f32 %v5943, %v5977
        %v5983 = vadd.f32 %v5944, %v5977
        %v5984 = vadd.f32 %v5945, %v5977
        %v5985 = vadd.f32 %v5946, %v5977
        %v5986 = vadd.f32 %v5947, %v5977
        %v5987 = vadd.f32 %v5948, %v5977
        %v5988 = vadd.f32 %v5949, %v5977
        %v5989 = vadd.f32 %v5950, %v5977
        %v5990 = vadd.f32 %v5951, %v5977
        %v5991 = vadd.f32 %v5952, %v5977
        %v5992 = vadd.f32 %v5953, %v5977
        %v5993 = vadd.f32 %v5954, %v5977
        %v5994 = vadd.f32 %v5955, %v5977
        %v5995 = vadd.f32 %v5956, %v5977
        %v5996 = vadd.f32 %v5957, %v5977
        %v5997 = vadd.f32 %v5958, %v5977
        %v5998 = vadd.f32 %v5959, %v5977
        %v5999 = vadd.f32 %v5960, %v5977
        %v6000 = vadd.f32 %v5961, %v5977
        %v6001 = vadd.f32 %v5962, %v5977
        %v6002 = vadd.f32 %v5963, %v5977
        %v6003 = vadd.f32 %v5964, %v5977
        %v6004 = vadd.f32 %v5965, %v5977
        %v6005 = vadd.f32 %v5966, %v5977
        %v6006 = vadd.f32 %v5967, %v5977
        %v6007 = vadd.f32 %v5968, %v5977
        %v6008 = vadd.f32 %v5969, %v5977
        %v6009 = vadd.f32 %v5970, %v5977
        %v6010 = vadd.f32 %v5971, %v5977
        %vm6011 = vcmp.ge.f32.partialorder %v5979, 0.0
        %vm6012 = vcmp.ge.f32.partialorder %v5980, 0.0
        %vm6013 = vcmp.ge.f32.partialorder %v5981, 0.0
        %vm6014 = vcmp.ge.f32.partialorder %v5982, 0.0
        %vm6015 = vcmp.ge.f32.partialorder %v5983, 0.0
        %vm6016 = vcmp.ge.f32.partialorder %v5984, 0.0
        %vm6017 = vcmp.ge.f32.partialorder %v5985, 0.0
        %vm6018 = vcmp.ge.f32.partialorder %v5986, 0.0
        %vm6019 = vcmp.ge.f32.partialorder %v5987, 0.0
        %vm6020 = vcmp.ge.f32.partialorder %v5988, 0.0
        %vm6021 = vcmp.ge.f32.partialorder %v5989, 0.0
        %vm6022 = vcmp.ge.f32.partialorder %v5990, 0.0
        %vm6023 = vcmp.ge.f32.partialorder %v5991, 0.0
        %vm6024 = vcmp.ge.f32.partialorder %v5992, 0.0
        %vm6025 = vcmp.ge.f32.partialorder %v5993, 0.0
        %vm6026 = vcmp.ge.f32.partialorder %v5994, 0.0
        %vm6027 = vcmp.ge.f32.partialorder %v5995, 0.0
        %vm6028 = vcmp.ge.f32.partialorder %v5996, 0.0
        %vm6029 = vcmp.ge.f32.partialorder %v5997, 0.0
        %vm6030 = vcmp.ge.f32.partialorder %v5998, 0.0
        %vm6031 = vcmp.ge.f32.partialorder %v5999, 0.0
        %vm6032 = vcmp.ge.f32.partialorder %v6000, 0.0
        %vm6033 = vcmp.ge.f32.partialorder %v6001, 0.0
        %vm6034 = vcmp.ge.f32.partialorder %v6002, 0.0
        %vm6035 = vcmp.ge.f32.partialorder %v6003, 0.0
        %vm6036 = vcmp.ge.f32.partialorder %v6004, 0.0
        %vm6037 = vcmp.ge.f32.partialorder %v6005, 0.0
        %vm6038 = vcmp.ge.f32.partialorder %v6006, 0.0
        %vm6039 = vcmp.ge.f32.partialorder %v6007, 0.0
        %vm6040 = vcmp.ge.f32.partialorder %v6008, 0.0
        %vm6041 = vcmp.ge.f32.partialorder %v6009, 0.0
        %vm6042 = vcmp.ge.f32.partialorder %v6010, 0.0
        %v6043 = vmul.f32 %v5979, 0.2
        %v6044 = vmul.f32 %v5980, 0.2
        %v6045 = vmul.f32 %v5981, 0.2
        %v6046 = vmul.f32 %v5982, 0.2
        %v6047 = vmul.f32 %v5983, 0.2
        %v6048 = vmul.f32 %v5984, 0.2
        %v6049 = vmul.f32 %v5985, 0.2
        %v6050 = vmul.f32 %v5986, 0.2
        %v6051 = vmul.f32 %v5987, 0.2
        %v6052 = vmul.f32 %v5988, 0.2
        %v6053 = vmul.f32 %v5989, 0.2
        %v6054 = vmul.f32 %v5990, 0.2
        %v6055 = vmul.f32 %v5991, 0.2
        %v6056 = vmul.f32 %v5992, 0.2
        %v6057 = vmul.f32 %v5993, 0.2
        %v6058 = vmul.f32 %v5994, 0.2
        %v6059 = vmul.f32 %v5995, 0.2
        %v6060 = vmul.f32 %v5996, 0.2
        %v6061 = vmul.f32 %v5997, 0.2
        %v6062 = vmul.f32 %v5998, 0.2
        %v6063 = vmul.f32 %v5999, 0.2
        %v6064 = vmul.f32 %v6000, 0.2
        %v6065 = vmul.f32 %v6001, 0.2
        %v6066 = vmul.f32 %v6002, 0.2
        %v6067 = vmul.f32 %v6003, 0.2
        %v6068 = vmul.f32 %v6004, 0.2
        %v6069 = vmul.f32 %v6005, 0.2
        %v6070 = vmul.f32 %v6006, 0.2
        %v6071 = vmul.f32 %v6007, 0.2
        %v6072 = vmul.f32 %v6008, 0.2
        %v6073 = vmul.f32 %v6009, 0.2
        %v6074 = vmul.f32 %v6010, 0.2
        %v6075 = vsel %vm6011, %v5979, %v6043
        %v6076 = vsel %vm6012, %v5980, %v6044
        %v6077 = vsel %vm6013, %v5981, %v6045
        %v6078 = vsel %vm6014, %v5982, %v6046
        %v6079 = vsel %vm6015, %v5983, %v6047
        %v6080 = vsel %vm6016, %v5984, %v6048
        %v6081 = vsel %vm6017, %v5985, %v6049
        %v6082 = vsel %vm6018, %v5986, %v6050
        %v6083 = vsel %vm6019, %v5987, %v6051
        %v6084 = vsel %vm6020, %v5988, %v6052
        %v6085 = vsel %vm6021, %v5989, %v6053
        %v6086 = vsel %vm6022, %v5990, %v6054
        %v6087 = vsel %vm6023, %v5991, %v6055
        %v6088 = vsel %vm6024, %v5992, %v6056
        %v6089 = vsel %vm6025, %v5993, %v6057
        %v6090 = vsel %vm6026, %v5994, %v6058
        %v6091 = vsel %vm6027, %v5995, %v6059
        %v6092 = vsel %vm6028, %v5996, %v6060
        %v6093 = vsel %vm6029, %v5997, %v6061
        %v6094 = vsel %vm6030, %v5998, %v6062
        %v6095 = vsel %vm6031, %v5999, %v6063
        %v6096 = vsel %vm6032, %v6000, %v6064
        %v6097 = vsel %vm6033, %v6001, %v6065
        %v6098 = vsel %vm6034, %v6002, %v6066
        %v6099 = vsel %vm6035, %v6003, %v6067
        %v6100 = vsel %vm6036, %v6004, %v6068
        %v6101 = vsel %vm6037, %v6005, %v6069
        %v6102 = vsel %vm6038, %v6006, %v6070
        %v6103 = vsel %vm6039, %v6007, %v6071
        %v6104 = vsel %vm6040, %v6008, %v6072
        %v6105 = vsel %vm6041, %v6009, %v6073
        %v6106 = vsel %vm6042, %v6010, %v6074
        %v6107 = vld [vmem:[%s10] sm:$0xf]
        %v6108 = vld [vmem:[%s10 + $0x4] sm:$0xf]
        %v6109 = vld [vmem:[%s10 + $0x8] sm:$0xf]
        %v6110 = vld [vmem:[%s10 + $0xc] sm:$0xf]
        %v6111 = vld [vmem:[%s10 + $0x10] sm:$0x3]
        %v6117 = vunpack.c.l.b16 %v6107
        %v6118 = vunpack.c.l.b16 %v6108
        %v6119 = vunpack.c.l.b16 %v6109
        %v6120 = vunpack.c.l.b16 %v6110
        %v6121 = vunpack.c.l.b16 %v6111
        %v6122 = vpack.c.b16 %v6118, %v6117
        %v6123 = vpack.c.b16 %v6120, %v6119
        %v6124 = vpack.c.b16 %v6121, %v6121
        %v6128 = vsel %vm1962, %v6124, 0
        %6130 = vmatprep.subr.bf16.mxu0 0
        %6131 = vmatpush1.bf16.msra.mxu0 %v6122
        %6132 = vmatprep.subr.bf16.mxu0 0
        %6133 = vmatpush1.bf16.msra.mxu0 %v6123
        %6134 = vmatprep.subr.bf16.mxu0 0
        %6135 = vmatpush1.bf16.msra.mxu0 %v6128
        %6136 = vmatprep.subr.bf16.mxu0 0
        %6137 = vmatpush1.bf16.msra.mxu0 0
        %6138 = vmatprep.subr.bf16.mxu0 0
        %6139 = vmatpush1.bf16.msra.mxu0 0
        %6140 = vmatprep.subr.bf16.mxu0 0
        %6141 = vmatpush1.bf16.msra.mxu0 0
        %6142 = vmatprep.subr.bf16.mxu0 0
        %6143 = vmatpush1.bf16.msra.mxu0 0
        %6144 = vmatprep.subr.bf16.mxu0 0
        %6145 = vmatpush1.bf16.msra.mxu0 0
        %6146 = vmatprep.subr.bf16.mxu0 0
        %6147 = vmatpush1.bf16.msra.mxu0 0
        %6148 = vmatprep.subr.bf16.mxu0 0
        %6149 = vmatpush1.bf16.msra.mxu0 0
        %6150 = vmatprep.subr.bf16.mxu0 0
        %6151 = vmatpush1.bf16.msra.mxu0 0
        %6152 = vmatprep.subr.bf16.mxu0 0
        %6153 = vmatpush1.bf16.msra.mxu0 0
        %6154 = vmatprep.subr.bf16.mxu0 0
        %6155 = vmatpush1.bf16.msra.mxu0 0
        %6156 = vmatprep.subr.bf16.mxu0 0
        %6157 = vmatpush1.bf16.msra.mxu0 0
        %6158 = vmatprep.subr.bf16.mxu0 0
        %6159 = vmatpush1.bf16.msra.mxu0 0
        %6160 = vmatprep.subr.bf16.mxu0 0
        %6161 = vmatpush1.bf16.msra.mxu0 0
        %6162 = vmatprep.mubr.bf16.mxu0 0
        %6163 = vmatmul.mubr.bf16.gmra.mrb[0].mxu0 %v1915
        %v6164 = vpop.f32.mrb[0].mxu0
        %v6165 = vadd.f32 0.0, %v6164
        %v6166 = vpop.f32.mrb[0].mxu0
        %v6167 = vpop.f32.mrb[0].mxu0
        %v6168 = vadd.f32 0.0, %v6167
        %v6169 = vpop.f32.mrb[0].mxu0
        %6170 = vmatprep.mubr.bf16.mxu0 0
        %6171 = vmatmul.mubr.bf16.gmra.mrb[0].mxu0 %v1918
        %v6172 = vpop.f32.mrb[0].mxu0
        %v6173 = vadd.f32 0.0, %v6172
        %v6174 = vpop.f32.mrb[0].mxu0
        %v6175 = vpop.f32.mrb[0].mxu0
        %v6176 = vadd.f32 0.0, %v6175
        %v6177 = vpop.f32.mrb[0].mxu0
        %6178 = vmatprep.mubr.bf16.mxu0 0
        %6179 = vmatmul.mubr.bf16.gmra.mrb[0].mxu0 %v1921
        %v6180 = vpop.f32.mrb[0].mxu0
        %v6181 = vadd.f32 0.0, %v6180
        %v6182 = vpop.f32.mrb[0].mxu0
        %v6183 = vpop.f32.mrb[0].mxu0
        %v6184 = vadd.f32 0.0, %v6183
        %v6185 = vpop.f32.mrb[0].mxu0
        %6186 = vmatprep.mubr.bf16.mxu0 0
        %6187 = vmatmul.mubr.bf16.gmra.mrb[0].mxu0 %v1924
        %v6188 = vpop.f32.mrb[0].mxu0
        %v6189 = vadd.f32 0.0, %v6188
        %v6190 = vpop.f32.mrb[0].mxu0
        %v6191 = vpop.f32.mrb[0].mxu0
        %v6192 = vadd.f32 0.0, %v6191
        %v6193 = vpop.f32.mrb[0].mxu0
        %6194 = vmatprep.mubr.bf16.mxu0 0
        %6195 = vmatmul.mubr.bf16.gmra.mrb[0].mxu0 %v1927
        %v6196 = vpop.f32.mrb[0].mxu0
        %v6197 = vadd.f32 0.0, %v6196
        %v6198 = vpop.f32.mrb[0].mxu0
        %v6199 = vpop.f32.mrb[0].mxu0
        %v6200 = vadd.f32 0.0, %v6199
        %v6201 = vpop.f32.mrb[0].mxu0
        %6202 = vmatprep.mubr.bf16.mxu0 0
        %6203 = vmatmul.mubr.bf16.gmra.mrb[0].mxu0 %v1930
        %v6204 = vpop.f32.mrb[0].mxu0
        %v6205 = vadd.f32 0.0, %v6204
        %v6206 = vpop.f32.mrb[0].mxu0
        %v6207 = vpop.f32.mrb[0].mxu0
        %v6208 = vadd.f32 0.0, %v6207
        %v6209 = vpop.f32.mrb[0].mxu0
        %6210 = vmatprep.mubr.bf16.mxu0 0
        %6211 = vmatmul.mubr.bf16.gmra.mrb[0].mxu0 %v1933
        %v6212 = vpop.f32.mrb[0].mxu0
        %v6213 = vadd.f32 0.0, %v6212
        %v6214 = vpop.f32.mrb[0].mxu0
        %v6215 = vpop.f32.mrb[0].mxu0
        %v6216 = vadd.f32 0.0, %v6215
        %v6217 = vpop.f32.mrb[0].mxu0
        %6218 = vmatprep.mubr.bf16.mxu0 0
        %6219 = vmatmul.mubr.bf16.gmra.mrb[0].mxu0 %v1936
        %v6220 = vpop.f32.mrb[0].mxu0
        %v6221 = vadd.f32 0.0, %v6220
        %v6222 = vpop.f32.mrb[0].mxu0
        %v6223 = vpop.f32.mrb[0].mxu0
        %v6224 = vadd.f32 0.0, %v6223
        %v6225 = vpop.f32.mrb[0].mxu0
        %6226 = vmatprep.mubr.bf16.mxu0 0
        %6227 = vmatmul.mubr.bf16.gmra.mrb[0].mxu0 %v1939
        %v6228 = vpop.f32.mrb[0].mxu0
        %v6229 = vadd.f32 0.0, %v6228
        %v6230 = vpop.f32.mrb[0].mxu0
        %v6231 = vpop.f32.mrb[0].mxu0
        %v6232 = vadd.f32 0.0, %v6231
        %v6233 = vpop.f32.mrb[0].mxu0
        %6234 = vmatprep.mubr.bf16.mxu0 0
        %6235 = vmatmul.mubr.bf16.gmra.mrb[0].mxu0 %v1942
        %v6236 = vpop.f32.mrb[0].mxu0
        %v6237 = vadd.f32 0.0, %v6236
        %v6238 = vpop.f32.mrb[0].mxu0
        %v6239 = vpop.f32.mrb[0].mxu0
        %v6240 = vadd.f32 0.0, %v6239
        %v6241 = vpop.f32.mrb[0].mxu0
        %6242 = vmatprep.mubr.bf16.mxu0 0
        %6243 = vmatmul.mubr.bf16.gmra.mrb[0].mxu0 %v1945
        %v6244 = vpop.f32.mrb[0].mxu0
        %v6245 = vadd.f32 0.0, %v6244
        %v6246 = vpop.f32.mrb[0].mxu0
        %v6247 = vpop.f32.mrb[0].mxu0
        %v6248 = vadd.f32 0.0, %v6247
        %v6249 = vpop.f32.mrb[0].mxu0
        %6250 = vmatprep.mubr.bf16.mxu0 0
        %6251 = vmatmul.mubr.bf16.gmra.mrb[0].mxu0 %v1948
        %v6252 = vpop.f32.mrb[0].mxu0
        %v6253 = vadd.f32 0.0, %v6252
        %v6254 = vpop.f32.mrb[0].mxu0
        %v6255 = vpop.f32.mrb[0].mxu0
        %v6256 = vadd.f32 0.0, %v6255
        %v6257 = vpop.f32.mrb[0].mxu0
        %6258 = vmatprep.mubr.bf16.mxu0 0
        %6259 = vmatmul.mubr.bf16.gmra.mrb[0].mxu0 %v1951
        %v6260 = vpop.f32.mrb[0].mxu0
        %v6261 = vadd.f32 0.0, %v6260
        %v6262 = vpop.f32.mrb[0].mxu0
        %v6263 = vpop.f32.mrb[0].mxu0
        %v6264 = vadd.f32 0.0, %v6263
        %v6265 = vpop.f32.mrb[0].mxu0
        %6266 = vmatprep.mubr.bf16.mxu0 0
        %6267 = vmatmul.mubr.bf16.gmra.mrb[0].mxu0 %v1954
        %v6268 = vpop.f32.mrb[0].mxu0
        %v6269 = vadd.f32 0.0, %v6268
        %v6270 = vpop.f32.mrb[0].mxu0
        %v6271 = vpop.f32.mrb[0].mxu0
        %v6272 = vadd.f32 0.0, %v6271
        %v6273 = vpop.f32.mrb[0].mxu0
        %6274 = vmatprep.mubr.bf16.mxu0 0
        %6275 = vmatmul.mubr.bf16.gmra.mrb[0].mxu0 %v1957
        %v6276 = vpop.f32.mrb[0].mxu0
        %v6277 = vadd.f32 0.0, %v6276
        %v6278 = vpop.f32.mrb[0].mxu0
        %v6279 = vpop.f32.mrb[0].mxu0
        %v6280 = vadd.f32 0.0, %v6279
        %v6281 = vpop.f32.mrb[0].mxu0
        %6282 = vmatprep.mubr.bf16.mxu0 0
        %6283 = vmatmul.mubr.bf16.gmra.mrb[0].mxu0 %v1960
        %v6284 = vpop.f32.mrb[0].mxu0
        %v6285 = vadd.f32 0.0, %v6284
        %v6286 = vpop.f32.mrb[0].mxu0
        %v6287 = vpop.f32.mrb[0].mxu0
        %v6288 = vadd.f32 0.0, %v6287
        %v6289 = vpop.f32.mrb[0].mxu0
        %6290 = vdwg.mxu0
        %v6291 = vld [vmem:[%s11] sm:$0x1]
        %v6293 = vlaneseq
        %v6294 = vshrl.u32 %v6293, 7
        %v6295 = vsub.s32 0, %v6294
        %v6296 = vrot.slane %v6291, %v6295
        %v6298 = vmul.f32 %v6165, %v6296
        %v6299 = vmul.f32 %v6168, %v6296
        %v6300 = vmul.f32 %v6173, %v6296
        %v6301 = vmul.f32 %v6176, %v6296
        %v6302 = vmul.f32 %v6181, %v6296
        %v6303 = vmul.f32 %v6184, %v6296
        %v6304 = vmul.f32 %v6189, %v6296
        %v6305 = vmul.f32 %v6192, %v6296
        %v6306 = vmul.f32 %v6197, %v6296
        %v6307 = vmul.f32 %v6200, %v6296
        %v6308 = vmul.f32 %v6205, %v6296
        %v6309 = vmul.f32 %v6208, %v6296
        %v6310 = vmul.f32 %v6213, %v6296
        %v6311 = vmul.f32 %v6216, %v6296
        %v6312 = vmul.f32 %v6221, %v6296
        %v6313 = vmul.f32 %v6224, %v6296
        %v6314 = vmul.f32 %v6229, %v6296
        %v6315 = vmul.f32 %v6232, %v6296
        %v6316 = vmul.f32 %v6237, %v6296
        %v6317 = vmul.f32 %v6240, %v6296
        %v6318 = vmul.f32 %v6245, %v6296
        %v6319 = vmul.f32 %v6248, %v6296
        %v6320 = vmul.f32 %v6253, %v6296
        %v6321 = vmul.f32 %v6256, %v6296
        %v6322 = vmul.f32 %v6261, %v6296
        %v6323 = vmul.f32 %v6264, %v6296
        %v6324 = vmul.f32 %v6269, %v6296
        %v6325 = vmul.f32 %v6272, %v6296
        %v6326 = vmul.f32 %v6277, %v6296
        %v6327 = vmul.f32 %v6280, %v6296
        %v6328 = vmul.f32 %v6285, %v6296
        %v6329 = vmul.f32 %v6288, %v6296
        %v6330 = vld [vmem:[%s12] sm:$0x1]
        %v6332 = vlaneseq
        %v6333 = vshrl.u32 %v6332, 7
        %v6334 = vsub.s32 0, %v6333
        %v6335 = vrot.slane %v6330, %v6334
        %v6337 = vadd.f32 %v6298, %v6335
        %v6338 = vadd.f32 %v6299, %v6335
        %v6339 = vadd.f32 %v6300, %v6335
        %v6340 = vadd.f32 %v6301, %v6335
        %v6341 = vadd.f32 %v6302, %v6335
        %v6342 = vadd.f32 %v6303, %v6335
        %v6343 = vadd.f32 %v6304, %v6335
        %v6344 = vadd.f32 %v6305, %v6335
        %v6345 = vadd.f32 %v6306, %v6335
        %v6346 = vadd.f32 %v6307, %v6335
        %v6347 = vadd.f32 %v6308, %v6335
        %v6348 = vadd.f32 %v6309, %v6335
        %v6349 = vadd.f32 %v6310, %v6335
        %v6350 = vadd.f32 %v6311, %v6335
        %v6351 = vadd.f32 %v6312, %v6335
        %v6352 = vadd.f32 %v6313, %v6335
        %v6353 = vadd.f32 %v6314, %v6335
        %v6354 = vadd.f32 %v6315, %v6335
        %v6355 = vadd.f32 %v6316, %v6335
        %v6356 = vadd.f32 %v6317, %v6335
        %v6357 = vadd.f32 %v6318, %v6335
        %v6358 = vadd.f32 %v6319, %v6335
        %v6359 = vadd.f32 %v6320, %v6335
        %v6360 = vadd.f32 %v6321, %v6335
        %v6361 = vadd.f32 %v6322, %v6335
        %v6362 = vadd.f32 %v6323, %v6335
        %v6363 = vadd.f32 %v6324, %v6335
        %v6364 = vadd.f32 %v6325, %v6335
        %v6365 = vadd.f32 %v6326, %v6335
        %v6366 = vadd.f32 %v6327, %v6335
        %v6367 = vadd.f32 %v6328, %v6335
        %v6368 = vadd.f32 %v6329, %v6335
        %v6369 = vadd.f32 %v6075, %v6337
        %v6370 = vadd.f32 %v6076, %v6338
        %v6371 = vadd.f32 %v6077, %v6339
        %v6372 = vadd.f32 %v6078, %v6340
        %v6373 = vadd.f32 %v6079, %v6341
        %v6374 = vadd.f32 %v6080, %v6342
        %v6375 = vadd.f32 %v6081, %v6343
        %v6376 = vadd.f32 %v6082, %v6344
        %v6377 = vadd.f32 %v6083, %v6345
        %v6378 = vadd.f32 %v6084, %v6346
        %v6379 = vadd.f32 %v6085, %v6347
        %v6380 = vadd.f32 %v6086, %v6348
        %v6381 = vadd.f32 %v6087, %v6349
        %v6382 = vadd.f32 %v6088, %v6350
        %v6383 = vadd.f32 %v6089, %v6351
        %v6384 = vadd.f32 %v6090, %v6352
        %v6385 = vadd.f32 %v6091, %v6353
        %v6386 = vadd.f32 %v6092, %v6354
        %v6387 = vadd.f32 %v6093, %v6355
        %v6388 = vadd.f32 %v6094, %v6356
        %v6389 = vadd.f32 %v6095, %v6357
        %v6390 = vadd.f32 %v6096, %v6358
        %v6391 = vadd.f32 %v6097, %v6359
        %v6392 = vadd.f32 %v6098, %v6360
        %v6393 = vadd.f32 %v6099, %v6361
        %v6394 = vadd.f32 %v6100, %v6362
        %v6395 = vadd.f32 %v6101, %v6363
        %v6396 = vadd.f32 %v6102, %v6364
        %v6397 = vadd.f32 %v6103, %v6365
        %v6398 = vadd.f32 %v6104, %v6366
        %v6399 = vadd.f32 %v6105, %v6367
        %v6400 = vadd.f32 %v6106, %v6368
        %v6401 = vmax.f32 %v6369, 0.0
        %v6402 = vmax.f32 %v6370, 0.0
        %v6403 = vmax.f32 %v6371, 0.0
        %v6404 = vmax.f32 %v6372, 0.0
        %v6405 = vmax.f32 %v6373, 0.0
        %v6406 = vmax.f32 %v6374, 0.0
        %v6407 = vmax.f32 %v6375, 0.0
        %v6408 = vmax.f32 %v6376, 0.0
        %v6409 = vmax.f32 %v6377, 0.0
        %v6410 = vmax.f32 %v6378, 0.0
        %v6411 = vmax.f32 %v6379, 0.0
        %v6412 = vmax.f32 %v6380, 0.0
        %v6413 = vmax.f32 %v6381, 0.0
        %v6414 = vmax.f32 %v6382, 0.0
        %v6415 = vmax.f32 %v6383, 0.0
        %v6416 = vmax.f32 %v6384, 0.0
        %v6417 = vmax.f32 %v6385, 0.0
        %v6418 = vmax.f32 %v6386, 0.0
        %v6419 = vmax.f32 %v6387, 0.0
        %v6420 = vmax.f32 %v6388, 0.0
        %v6421 = vmax.f32 %v6389, 0.0
        %v6422 = vmax.f32 %v6390, 0.0
        %v6423 = vmax.f32 %v6391, 0.0
        %v6424 = vmax.f32 %v6392, 0.0
        %v6425 = vmax.f32 %v6393, 0.0
        %v6426 = vmax.f32 %v6394, 0.0
        %v6427 = vmax.f32 %v6395, 0.0
        %v6428 = vmax.f32 %v6396, 0.0
        %v6429 = vmax.f32 %v6397, 0.0
        %v6430 = vmax.f32 %v6398, 0.0
        %v6431 = vmax.f32 %v6399, 0.0
        %v6432 = vmax.f32 %v6400, 0.0
        %6433 = vst.msk [vmem:[%s433] sm:$0xff] %vm3324, %v6401
        %6434 = vst.msk [vmem:[%s433 + $0x8] sm:$0xff] %vm3324, %v6402
        %6435 = vst.msk [vmem:[%s433 + $0x10] sm:$0xff] %vm3324, %v6403
        %6436 = vst.msk [vmem:[%s433 + $0x18] sm:$0xff] %vm3324, %v6404
        %6437 = vst.msk [vmem:[%s433 + $0x20] sm:$0xff] %vm3324, %v6405
        %6438 = vst.msk [vmem:[%s433 + $0x28] sm:$0xff] %vm3324, %v6406
        %6439 = vst.msk [vmem:[%s433 + $0x30] sm:$0xff] %vm3324, %v6407
        %6440 = vst.msk [vmem:[%s433 + $0x38] sm:$0xff] %vm3324, %v6408
        %6441 = vst.msk [vmem:[%s433 + $0x40] sm:$0xff] %vm3324, %v6409
        %6442 = vst.msk [vmem:[%s433 + $0x48] sm:$0xff] %vm3324, %v6410
        %6443 = vst.msk [vmem:[%s433 + $0x50] sm:$0xff] %vm3324, %v6411
        %6444 = vst.msk [vmem:[%s433 + $0x58] sm:$0xff] %vm3324, %v6412
        %6445 = vst.msk [vmem:[%s433 + $0x60] sm:$0xff] %vm3324, %v6413
        %6446 = vst.msk [vmem:[%s433 + $0x68] sm:$0xff] %vm3324, %v6414
        %6447 = vst.msk [vmem:[%s433 + $0x70] sm:$0xff] %vm3324, %v6415
        %6448 = vst.msk [vmem:[%s433 + $0x78] sm:$0xff] %vm3324, %v6416
        %6449 = vst.msk [vmem:[%s433 + $0x80] sm:$0xff] %vm3324, %v6417
        %6450 = vst.msk [vmem:[%s433 + $0x88] sm:$0xff] %vm3324, %v6418
        %6451 = vst.msk [vmem:[%s433 + $0x90] sm:$0xff] %vm3324, %v6419
        %6452 = vst.msk [vmem:[%s433 + $0x98] sm:$0xff] %vm3324, %v6420
        %6453 = vst.msk [vmem:[%s433 + $0xa0] sm:$0xff] %vm3324, %v6421
        %6454 = vst.msk [vmem:[%s433 + $0xa8] sm:$0xff] %vm3324, %v6422
        %6455 = vst.msk [vmem:[%s433 + $0xb0] sm:$0xff] %vm3324, %v6423
        %6456 = vst.msk [vmem:[%s433 + $0xb8] sm:$0xff] %vm3324, %v6424
        %6457 = vst.msk [vmem:[%s433 + $0xc0] sm:$0xff] %vm3324, %v6425
        %6458 = vst.msk [vmem:[%s433 + $0xc8] sm:$0xff] %vm3324, %v6426
        %6459 = vst.msk [vmem:[%s433 + $0xd0] sm:$0xff] %vm3324, %v6427
        %6460 = vst.msk [vmem:[%s433 + $0xd8] sm:$0xff] %vm3324, %v6428
        %6461 = vst.msk [vmem:[%s433 + $0xe0] sm:$0xff] %vm3324, %v6429
        %6462 = vst.msk [vmem:[%s433 + $0xe8] sm:$0xff] %vm3324, %v6430
        %6463 = vst.msk [vmem:[%s433 + $0xf0] sm:$0xff] %vm3324, %v6431
        %6464 = vst.msk [vmem:[%s433 + $0xf8] sm:$0xff] %vm3324, %v6432
        %s6465 = sand.u32 %s313, 1
        %s6466 = scalar_lea.sflag [#allocation3], %s6465
        %s6467 = sand.u32 %s313, 1
        %s6468 = smul.addr %s6467, 256
        %s6469 = scalar_lea.vmem [#allocation2], %s6468
        // Predicated region
        $region73: #{tpu_custom_call.1} parent=71 // pred_check
          %p6470 = pneg %p323
        $region74: #{tpu_custom_call.1} parent=71 // pred_check_branch
          %6472 = sbr.rel (%p6470) target = $region76
        $region75: #{tpu_custom_call.1} parent=71 // pred_region
          %s6474 = ssub.s32 4096, 4096
          %6475 = vsyncadd %s6466, %s6474
          %s6476 = smul.addr %s27, 32
          %s6477 = smul.addr %s6476, 128
          %s6478 = scalar_lea.hbm %s13, %s6477
          %s6479 = sshll.u32 %s6469, 4
          %s6480 = int_to_ptr.vmem [resolvable:$true] %s6479
          %6485 = dma.vmem_to_hbm [thread:$0]  %s6480, 4096, %s6478, %s6466, 128, 128, 8
        $region76: #{tpu_custom_call.1} parent=71 // pred_fallthru
          _
      $region72: #{tpu_custom_call.1} parent=5 // pred_fallthru
        _
      %p6486 = scmp.le.s32.totalorder 2, %s22
      // Predicated region
      $region77: #{tpu_custom_call.1} parent=5 // pred_check
        %p6487 = pneg %p6486
      $region78: #{tpu_custom_call.1} parent=5 // pred_check_branch
        %6489 = sbr.rel (%p6487) target = $region80
      $region79: #{tpu_custom_call.1} parent=5 // pred_region
        %s6490 = ssub.s32 %s22, 2
        // Predicated region
        $region81: #{tpu_custom_call.1} parent=79 // pred_check
          %p6491 = pneg %p329
        $region82: #{tpu_custom_call.1} parent=79 // pred_check_branch
          %6493 = sbr.rel (%p6491) target = $region84
        $region83: #{tpu_custom_call.1} parent=79 // pred_region
          %s6494 = sand.u32 %s314, 1
          %s6495 = scalar_lea.sflag [#allocation3], %s6494
          %s6496 = sand.u32 %s314, 1
          %s6497 = smul.addr %s6496, 256
          %s6498 = scalar_lea.vmem [#allocation2], %s6497
          %6499 = dma.done %s6495, 4096
        $region84: #{tpu_custom_call.1} parent=79 // pred_fallthru
          _
      $region80: #{tpu_custom_call.1} parent=5 // pred_fallthru
        _
    $region6: #{tpu_custom_call.1} parent=1 // loop_footer
      %s26 = sadd.s32 1, %s22
    $region7: #{tpu_custom_call.1} parent=1 // loop_footer_branch
      %21 = sbr.rel target = $region3
    $region8: #{tpu_custom_call.1} parent=1 // loop_exit
      _
    %6500 = vsyncpa [#allocation3], 1
    %s6501 = scalar_lea.sflag [#allocation3], 1
    %6502 = vsyncpa %s6501, 1

</llo_original>
